<compile_context>
chip_gen: v7x
topology: tpu7x:2x2x1
jax: 0.10.0
libtpu: 0.0.40
codegen_flags: <defaults>
</compile_context>

<pallas_src>
import jax
import jax.numpy as jnp
from jax import lax
from jax.experimental import pallas as pl
from jax.experimental.pallas import tpu as pltpu


# ----------------------------- Pallas kernel -------------------------------

def fused_fashion_kernel(p_ref, wbd_ref, bc_ref, w1_ref, b1_ref, w2_ref, b2_ref, o_ref):
    # p_ref : (1, 4*36*tb, 128) bf16  im2col patches, rows ordered (q, r, b),
    #                                 lanes = (p%4)*32 + tap (taps padded 25->32)
    # wbd_ref: (128, 128) bf16        block-diagonal conv weights (4 x (32 taps x 32 oc))
    # bc_ref : (1, 128) f32           conv bias tiled 4x along lanes
    # w1_ref : (36, 128, 128) bf16    fc1 weights split into 36 K=128 chunks
    # b1_ref : (1, 128) f32
    # w2_ref : (128, 128) f32         fc2 weights, output padded 10 -> 128
    # b2_ref : (1, 128) f32
    # o_ref  : (tb, 128) f32
    tb = o_ref.shape[0]

    # Conv as one big GEMM on the MXU, f32 accumulation.
    a = jnp.dot(p_ref[0], wbd_ref[...], preferred_element_type=jnp.float32)  # (4*36*tb,128)

    # 2x2 max-pool = max over the 4 leading pool-phase blocks.  Bias is constant per
    # lane and relu is monotone, so pooling before bias+relu is exact.
    pooled = jnp.max(a.reshape(4, 36 * tb, 128), axis=0)                     # (36*tb, 128)
    pooled = jnp.maximum(pooled + bc_ref[...], 0.0).astype(jnp.bfloat16)

    # fc1: contraction over 4608 = 36 chunks of 128 lanes; rows of `pooled` are (r, b).
    h = None
    for r in range(36):
        d = jnp.dot(pooled[r * tb:(r + 1) * tb, :], w1_ref[r],
                    preferred_element_type=jnp.float32)                      # (tb, 128)
        h = d if h is None else h + d
    h = jnp.maximum(h + b1_ref[...], 0.0)

    # fc2 (output lanes padded to 128 for an unmasked store).
    o_ref[...] = jnp.dot(h, w2_ref[...], preferred_element_type=jnp.float32) + b2_ref[...]


# ----------------------------- wrapper (glue) ------------------------------

def _im2col_tiles(x, tb):
    """x: (n_pad, 1, 28, 28) -> patches (T, 4*36*tb, 128) bf16, rows ordered (q, r, b).

    Row index inside a tile = q*(36*tb) + r*tb + b, with q = 2*dy+dx the pool-window
    phase, p = i*12+j the pooled position, r = p//4, and lane = (p%4)*32 + (kh*5+kw).
    Pure data rearrangement (glue); all FLOPs happen inside the kernel.
    """
    n = x.shape[0]
    t = n // tb
    xs = x[:, 0]                                                   # (n, 28, 28)
    cols = [xs[:, kh:kh + 24, kw:kw + 24] for kh in range(5) for kw in range(5)]
    p = jnp.stack(cols, axis=-1)                                   # (n, 24, 24, 25)
    p = jnp.pad(p, ((0, 0), (0, 0), (0, 0), (0, 7)))               # taps 25 -> 32
    # y = 2*i + dy ; x = 2*j + dx ; j = 3*j_hi? no: j = j_hi*4 + k  (r = i*3 + j_hi)
    p = p.reshape(n, 12, 2, 3, 4, 2, 32)                           # (b, i, dy, j_hi, k, dx, tap)
    p = p.transpose(0, 2, 5, 1, 3, 4, 6)                           # (b, dy, dx, i, j_hi, k, tap)
    p = p.reshape(n, 4, 36, 128)                                   # (b, q, r, k*32+tap)
    p = p.reshape(t, tb, 4, 36, 128).transpose(0, 2, 3, 1, 4)      # (T, q, r, b, 128)
    return p.reshape(t, 4 * 36 * tb, 128).astype(jnp.bfloat16)


def fashion_cnn_forward(x, params, tb=64):
    """x: (N, 1, 28, 28) f32 -> logits (N, 10). params use canonical PyTorch shapes."""
    conv_w, conv_b, fc1_w, fc1_b, fc2_w, fc2_b = params
    n = x.shape[0]
    if n < tb:
        tb = ((n + 7) // 8) * 8            # batch tile: multiple of 8 sublanes
    n_pad = -(-n // tb) * tb
    t = n_pad // tb
    xp = jnp.pad(x, ((0, n_pad - n), (0, 0), (0, 0), (0, 0))) if n_pad != n else x

    # ---- parameter packing (glue) ----
    wt = conv_w[:, 0].reshape(32, 25).T                            # (25, 32): [kh*5+kw, oc]
    wt = jnp.pad(wt, ((0, 7), (0, 0)))                             # (32, 32)
    wbd = jnp.kron(jnp.eye(4, dtype=wt.dtype), wt).astype(jnp.bfloat16)   # (128,128) blockdiag
    bc = jnp.tile(conv_b, 4).reshape(1, 128).astype(jnp.float32)   # lane k*32+c -> conv_b[c]
    # fc1: kernel features are lane-packed as (k=p%4)*32 + c with p = i*12+j, chunk r=p//4;
    # PyTorch flattens (C, H, W) -> input index c*144 + p.
    w1r = (fc1_w.reshape(128, 32, 36, 4)                           # [f, c, r, k]
           .transpose(2, 3, 1, 0)                                  # [r, k, c, f]
           .reshape(36, 128, 128).astype(jnp.bfloat16))
    b1 = fc1_b.reshape(1, 128).astype(jnp.float32)
    w2p = jnp.zeros((128, 128), jnp.float32).at[:, :10].set(fc2_w.T)
    b2p = jnp.zeros((1, 128), jnp.float32).at[:, :10].set(fc2_b)

    patches = _im2col_tiles(xp, tb)                                # (T, 4*36*tb, 128) bf16

    out = pl.pallas_call(
        fused_fashion_kernel,
        out_shape=jax.ShapeDtypeStruct((n_pad, 128), jnp.float32),
        grid=(t,),
        in_specs=[
            pl.BlockSpec((1, 4 * 36 * tb, 128), lambda i: (i, 0, 0)),   # streamed patches
            pl.BlockSpec((128, 128), lambda i: (0, 0)),                 # resident conv W
            pl.BlockSpec((1, 128), lambda i: (0, 0)),                   # conv bias
            pl.BlockSpec((36, 128, 128), lambda i: (0, 0, 0)),          # resident fc1 W
            pl.BlockSpec((1, 128), lambda i: (0, 0)),                   # fc1 bias
            pl.BlockSpec((128, 128), lambda i: (0, 0)),                 # resident fc2 W
            pl.BlockSpec((1, 128), lambda i: (0, 0)),                   # fc2 bias
        ],
        out_specs=pl.BlockSpec((tb, 128), lambda i: (i, 0)),
        compiler_params=pltpu.CompilerParams(
            dimension_semantics=("parallel",),
            vmem_limit_bytes=48 * 1024 * 1024),
    )(patches, wbd, bc, w1r, b1, w2p, b2p)

    return out[:n, :10]


# --------------------------- pure-JAX reference ----------------------------

def fashion_cnn_reference(x, params):
    conv_w, conv_b, fc1_w, fc1_b, fc2_w, fc2_b = params
    n = x.shape[0]
    y = lax.conv_general_dilated(x, conv_w, window_strides=(1, 1), padding="VALID",
                                 dimension_numbers=("NCHW", "OIHW", "NCHW"))
    y = y + conv_b[None, :, None, None]
    y = jnp.maximum(y, 0.0)                                  # (N, 32, 24, 24)
    y = y.reshape(n, 32, 12, 2, 12, 2).max(axis=(3, 5))      # maxpool 2x2 -> (N, 32, 12, 12)
    y = y.reshape(n, 32 * 12 * 12)                           # PyTorch .view flatten (C,H,W)
    h = jnp.maximum(y @ fc1_w.T + fc1_b, 0.0)
    return h @ fc2_w.T + fc2_b


# --------------------------------- main ------------------------------------

if __name__ == "__main__":
    N = 2
    key = jax.random.PRNGKey(0)
    ks = jax.random.split(key, 7)

    # Input: spatial size 28x28 is implied by the fc1 dimension (32 * 12 * 12).
    x = jax.random.normal(ks[0], (N, 1, 28, 28), dtype=jnp.float32)

    # Deterministic synthetic parameters (canonical PyTorch shapes).
    params = (
        jax.random.normal(ks[1], (32, 1, 5, 5), dtype=jnp.float32) * 0.1,   # conv1.weight
        jax.random.normal(ks[2], (32,), dtype=jnp.float32) * 0.1,           # conv1.bias
        jax.random.normal(ks[3], (128, 4608), dtype=jnp.float32) * 0.02,    # fc1.weight
        jax.random.normal(ks[4], (128,), dtype=jnp.float32) * 0.02,         # fc1.bias
        jax.random.normal(ks[5], (10, 128), dtype=jnp.float32) * 0.05,      # fc2.weight
        jax.random.normal(ks[6], (10,), dtype=jnp.float32) * 0.05,          # fc2.bias
    )

    out = jax.block_until_ready(fashion_cnn_forward(x, params))
    assert out.shape == (N, 10) and out.dtype == jnp.float32

    ref = jax.block_until_ready(fashion_cnn_reference(x, params))
    assert jnp.allclose(out, ref, atol=2e-2, rtol=2e-2), (
        f"max abs err = {float(jnp.max(jnp.abs(out - ref)))}")

    print("KERNEL_OK")
</pallas_src>

<mosaic_0001>
module attributes {stable_mosaic.version = 11 : i64} {
  func.func @fused_fashion_kernel(%arg0: i32, %arg1: memref<1x1152x128xbf16, #tpu.memory_space<vmem>>, %arg2: memref<128x128xbf16, #tpu.memory_space<vmem>>, %arg3: memref<1x128xf32, #tpu.memory_space<vmem>>, %arg4: memref<36x128x128xbf16, #tpu.memory_space<vmem>>, %arg5: memref<1x128xf32, #tpu.memory_space<vmem>>, %arg6: memref<128x128xf32, #tpu.memory_space<vmem>>, %arg7: memref<1x128xf32, #tpu.memory_space<vmem>>, %arg8: memref<8x128xf32, #tpu.memory_space<vmem>>) attributes {dimension_semantics = [#tpu.dimension_semantics<parallel>], iteration_bounds = array<i64: 1>, scalar_prefetch = 0 : i64, scratch_operands = 0 : i64, tpu.core_type = #tpu.core_type<tc>, window_params = [{transform_indices = @transform_0, window_bounds = array<i64: 1, 1152, 128>}, {pipeline_mode = #tpu.pipeline_mode<synchronous>, transform_indices = @transform_1, window_bounds = array<i64: 128, 128>}, {pipeline_mode = #tpu.pipeline_mode<synchronous>, transform_indices = @transform_2, window_bounds = array<i64: 1, 128>}, {pipeline_mode = #tpu.pipeline_mode<synchronous>, transform_indices = @transform_3, window_bounds = array<i64: 36, 128, 128>}, {pipeline_mode = #tpu.pipeline_mode<synchronous>, transform_indices = @transform_4, window_bounds = array<i64: 1, 128>}, {pipeline_mode = #tpu.pipeline_mode<synchronous>, transform_indices = @transform_5, window_bounds = array<i64: 128, 128>}, {pipeline_mode = #tpu.pipeline_mode<synchronous>, transform_indices = @transform_6, window_bounds = array<i64: 1, 128>}, {transform_indices = @transform_7, window_bounds = array<i64: 8, 128>}]} {
    %c0 = arith.constant 0 : index
    %c0_0 = arith.constant 0 : index
    %c0_1 = arith.constant 0 : index
    %0 = vector.load %arg1[%c0, %c0_0, %c0_1] : memref<1x1152x128xbf16, #tpu.memory_space<vmem>>, vector<1x1152x128xbf16>
    %1 = vector.shape_cast %0 : vector<1x1152x128xbf16> to vector<1152x128xbf16>
    %c0_2 = arith.constant 0 : index
    %c0_3 = arith.constant 0 : index
    %2 = vector.load %arg2[%c0_2, %c0_3] : memref<128x128xbf16, #tpu.memory_space<vmem>>, vector<128x128xbf16>
    %cst = arith.constant dense<0.000000e+00> : vector<1152x128xf32>
    %3 = tpu.matmul %1, %2, %cst {dimension_numbers = #tpu.dot_dimension_numbers<[1], [0], [0], [1], [0, 0, 1, 1], [], []>} : vector<1152x128xbf16>, vector<128x128xbf16>, vector<1152x128xf32> -> vector<1152x128xf32>
    %4 = vector.shape_cast %3 : vector<1152x128xf32> to vector<4x288x128xf32>
    %cst_4 = arith.constant dense<0xFF800000> : vector<288x128xf32>
    %5 = vector.multi_reduction <maximumf>, %4, %cst_4 [0] : vector<4x288x128xf32> to vector<288x128xf32>
    %c0_5 = arith.constant 0 : index
    %c0_6 = arith.constant 0 : index
    %6 = vector.load %arg3[%c0_5, %c0_6] : memref<1x128xf32, #tpu.memory_space<vmem>>, vector<1x128xf32>
    %7 = vector.broadcast %6 : vector<1x128xf32> to vector<288x128xf32>
    %8 = arith.addf %5, %7 : vector<288x128xf32>
    %cst_7 = arith.constant 0.000000e+00 : f32
    %9 = vector.broadcast %cst_7 : f32 to vector<288x128xf32>
    %10 = arith.maximumf %8, %9 : vector<288x128xf32>
    %11 = arith.truncf %10 : vector<288x128xf32> to vector<288x128xbf16>
    %12 = vector.extract_strided_slice %11 {offsets = [0, 0], sizes = [8, 128], strides = [1, 1]} : vector<288x128xbf16> to vector<8x128xbf16>
    %c0_8 = arith.constant 0 : index
    %c0_9 = arith.constant 0 : index
    %c0_10 = arith.constant 0 : index
    %13 = vector.load %arg4[%c0_8, %c0_9, %c0_10] : memref<36x128x128xbf16, #tpu.memory_space<vmem>>, vector<1x128x128xbf16>
    %14 = vector.shape_cast %13 : vector<1x128x128xbf16> to vector<128x128xbf16>
    %cst_11 = arith.constant dense<0.000000e+00> : vector<8x128xf32>
    %15 = tpu.matmul %12, %14, %cst_11 {dimension_numbers = #tpu.dot_dimension_numbers<[1], [0], [0], [1], [0, 0, 1, 1], [], []>} : vector<8x128xbf16>, vector<128x128xbf16>, vector<8x128xf32> -> vector<8x128xf32>
    %16 = vector.extract_strided_slice %11 {offsets = [8, 0], sizes = [8, 128], strides = [1, 1]} : vector<288x128xbf16> to vector<8x128xbf16>
    %c1 = arith.constant 1 : index
    %c0_12 = arith.constant 0 : index
    %c0_13 = arith.constant 0 : index
    %17 = vector.load %arg4[%c1, %c0_12, %c0_13] : memref<36x128x128xbf16, #tpu.memory_space<vmem>>, vector<1x128x128xbf16>
    %18 = vector.shape_cast %17 : vector<1x128x128xbf16> to vector<128x128xbf16>
    %cst_14 = arith.constant dense<0.000000e+00> : vector<8x128xf32>
    %19 = tpu.matmul %16, %18, %cst_14 {dimension_numbers = #tpu.dot_dimension_numbers<[1], [0], [0], [1], [0, 0, 1, 1], [], []>} : vector<8x128xbf16>, vector<128x128xbf16>, vector<8x128xf32> -> vector<8x128xf32>
    %20 = arith.addf %15, %19 : vector<8x128xf32>
    %21 = vector.extract_strided_slice %11 {offsets = [16, 0], sizes = [8, 128], strides = [1, 1]} : vector<288x128xbf16> to vector<8x128xbf16>
    %c2 = arith.constant 2 : index
    %c0_15 = arith.constant 0 : index
    %c0_16 = arith.constant 0 : index
    %22 = vector.load %arg4[%c2, %c0_15, %c0_16] : memref<36x128x128xbf16, #tpu.memory_space<vmem>>, vector<1x128x128xbf16>
    %23 = vector.shape_cast %22 : vector<1x128x128xbf16> to vector<128x128xbf16>
    %cst_17 = arith.constant dense<0.000000e+00> : vector<8x128xf32>
    %24 = tpu.matmul %21, %23, %cst_17 {dimension_numbers = #tpu.dot_dimension_numbers<[1], [0], [0], [1], [0, 0, 1, 1], [], []>} : vector<8x128xbf16>, vector<128x128xbf16>, vector<8x128xf32> -> vector<8x128xf32>
    %25 = arith.addf %20, %24 : vector<8x128xf32>
    %26 = vector.extract_strided_slice %11 {offsets = [24, 0], sizes = [8, 128], strides = [1, 1]} : vector<288x128xbf16> to vector<8x128xbf16>
    %c3 = arith.constant 3 : index
    %c0_18 = arith.constant 0 : index
    %c0_19 = arith.constant 0 : index
    %27 = vector.load %arg4[%c3, %c0_18, %c0_19] : memref<36x128x128xbf16, #tpu.memory_space<vmem>>, vector<1x128x128xbf16>
    %28 = vector.shape_cast %27 : vector<1x128x128xbf16> to vector<128x128xbf16>
    %cst_20 = arith.constant dense<0.000000e+00> : vector<8x128xf32>
    %29 = tpu.matmul %26, %28, %cst_20 {dimension_numbers = #tpu.dot_dimension_numbers<[1], [0], [0], [1], [0, 0, 1, 1], [], []>} : vector<8x128xbf16>, vector<128x128xbf16>, vector<8x128xf32> -> vector<8x128xf32>
    %30 = arith.addf %25, %29 : vector<8x128xf32>
    %31 = vector.extract_strided_slice %11 {offsets = [32, 0], sizes = [8, 128], strides = [1, 1]} : vector<288x128xbf16> to vector<8x128xbf16>
    %c4 = arith.constant 4 : index
    %c0_21 = arith.constant 0 : index
    %c0_22 = arith.constant 0 : index
    %32 = vector.load %arg4[%c4, %c0_21, %c0_22] : memref<36x128x128xbf16, #tpu.memory_space<vmem>>, vector<1x128x128xbf16>
    %33 = vector.shape_cast %32 : vector<1x128x128xbf16> to vector<128x128xbf16>
    %cst_23 = arith.constant dense<0.000000e+00> : vector<8x128xf32>
    %34 = tpu.matmul %31, %33, %cst_23 {dimension_numbers = #tpu.dot_dimension_numbers<[1], [0], [0], [1], [0, 0, 1, 1], [], []>} : vector<8x128xbf16>, vector<128x128xbf16>, vector<8x128xf32> -> vector<8x128xf32>
    %35 = arith.addf %30, %34 : vector<8x128xf32>
    %36 = vector.extract_strided_slice %11 {offsets = [40, 0], sizes = [8, 128], strides = [1, 1]} : vector<288x128xbf16> to vector<8x128xbf16>
    %c5 = arith.constant 5 : index
    %c0_24 = arith.constant 0 : index
    %c0_25 = arith.constant 0 : index
    %37 = vector.load %arg4[%c5, %c0_24, %c0_25] : memref<36x128x128xbf16, #tpu.memory_space<vmem>>, vector<1x128x128xbf16>
    %38 = vector.shape_cast %37 : vector<1x128x128xbf16> to vector<128x128xbf16>
    %cst_26 = arith.constant dense<0.000000e+00> : vector<8x128xf32>
    %39 = tpu.matmul %36, %38, %cst_26 {dimension_numbers = #tpu.dot_dimension_numbers<[1], [0], [0], [1], [0, 0, 1, 1], [], []>} : vector<8x128xbf16>, vector<128x128xbf16>, vector<8x128xf32> -> vector<8x128xf32>
    %40 = arith.addf %35, %39 : vector<8x128xf32>
    %41 = vector.extract_strided_slice %11 {offsets = [48, 0], sizes = [8, 128], strides = [1, 1]} : vector<288x128xbf16> to vector<8x128xbf16>
    %c6 = arith.constant 6 : index
    %c0_27 = arith.constant 0 : index
    %c0_28 = arith.constant 0 : index
    %42 = vector.load %arg4[%c6, %c0_27, %c0_28] : memref<36x128x128xbf16, #tpu.memory_space<vmem>>, vector<1x128x128xbf16>
    %43 = vector.shape_cast %42 : vector<1x128x128xbf16> to vector<128x128xbf16>
    %cst_29 = arith.constant dense<0.000000e+00> : vector<8x128xf32>
    %44 = tpu.matmul %41, %43, %cst_29 {dimension_numbers = #tpu.dot_dimension_numbers<[1], [0], [0], [1], [0, 0, 1, 1], [], []>} : vector<8x128xbf16>, vector<128x128xbf16>, vector<8x128xf32> -> vector<8x128xf32>
    %45 = arith.addf %40, %44 : vector<8x128xf32>
    %46 = vector.extract_strided_slice %11 {offsets = [56, 0], sizes = [8, 128], strides = [1, 1]} : vector<288x128xbf16> to vector<8x128xbf16>
    %c7 = arith.constant 7 : index
    %c0_30 = arith.constant 0 : index
    %c0_31 = arith.constant 0 : index
    %47 = vector.load %arg4[%c7, %c0_30, %c0_31] : memref<36x128x128xbf16, #tpu.memory_space<vmem>>, vector<1x128x128xbf16>
    %48 = vector.shape_cast %47 : vector<1x128x128xbf16> to vector<128x128xbf16>
    %cst_32 = arith.constant dense<0.000000e+00> : vector<8x128xf32>
    %49 = tpu.matmul %46, %48, %cst_32 {dimension_numbers = #tpu.dot_dimension_numbers<[1], [0], [0], [1], [0, 0, 1, 1], [], []>} : vector<8x128xbf16>, vector<128x128xbf16>, vector<8x128xf32> -> vector<8x128xf32>
    %50 = arith.addf %45, %49 : vector<8x128xf32>
    %51 = vector.extract_strided_slice %11 {offsets = [64, 0], sizes = [8, 128], strides = [1, 1]} : vector<288x128xbf16> to vector<8x128xbf16>
    %c8 = arith.constant 8 : index
    %c0_33 = arith.constant 0 : index
    %c0_34 = arith.constant 0 : index
    %52 = vector.load %arg4[%c8, %c0_33, %c0_34] : memref<36x128x128xbf16, #tpu.memory_space<vmem>>, vector<1x128x128xbf16>
    %53 = vector.shape_cast %52 : vector<1x128x128xbf16> to vector<128x128xbf16>
    %cst_35 = arith.constant dense<0.000000e+00> : vector<8x128xf32>
    %54 = tpu.matmul %51, %53, %cst_35 {dimension_numbers = #tpu.dot_dimension_numbers<[1], [0], [0], [1], [0, 0, 1, 1], [], []>} : vector<8x128xbf16>, vector<128x128xbf16>, vector<8x128xf32> -> vector<8x128xf32>
    %55 = arith.addf %50, %54 : vector<8x128xf32>
    %56 = vector.extract_strided_slice %11 {offsets = [72, 0], sizes = [8, 128], strides = [1, 1]} : vector<288x128xbf16> to vector<8x128xbf16>
    %c9 = arith.constant 9 : index
    %c0_36 = arith.constant 0 : index
    %c0_37 = arith.constant 0 : index
    %57 = vector.load %arg4[%c9, %c0_36, %c0_37] : memref<36x128x128xbf16, #tpu.memory_space<vmem>>, vector<1x128x128xbf16>
    %58 = vector.shape_cast %57 : vector<1x128x128xbf16> to vector<128x128xbf16>
    %cst_38 = arith.constant dense<0.000000e+00> : vector<8x128xf32>
    %59 = tpu.matmul %56, %58, %cst_38 {dimension_numbers = #tpu.dot_dimension_numbers<[1], [0], [0], [1], [0, 0, 1, 1], [], []>} : vector<8x128xbf16>, vector<128x128xbf16>, vector<8x128xf32> -> vector<8x128xf32>
    %60 = arith.addf %55, %59 : vector<8x128xf32>
    %61 = vector.extract_strided_slice %11 {offsets = [80, 0], sizes = [8, 128], strides = [1, 1]} : vector<288x128xbf16> to vector<8x128xbf16>
    %c10 = arith.constant 10 : index
    %c0_39 = arith.constant 0 : index
    %c0_40 = arith.constant 0 : index
    %62 = vector.load %arg4[%c10, %c0_39, %c0_40] : memref<36x128x128xbf16, #tpu.memory_space<vmem>>, vector<1x128x128xbf16>
    %63 = vector.shape_cast %62 : vector<1x128x128xbf16> to vector<128x128xbf16>
    %cst_41 = arith.constant dense<0.000000e+00> : vector<8x128xf32>
    %64 = tpu.matmul %61, %63, %cst_41 {dimension_numbers = #tpu.dot_dimension_numbers<[1], [0], [0], [1], [0, 0, 1, 1], [], []>} : vector<8x128xbf16>, vector<128x128xbf16>, vector<8x128xf32> -> vector<8x128xf32>
    %65 = arith.addf %60, %64 : vector<8x128xf32>
    %66 = vector.extract_strided_slice %11 {offsets = [88, 0], sizes = [8, 128], strides = [1, 1]} : vector<288x128xbf16> to vector<8x128xbf16>
    %c11 = arith.constant 11 : index
    %c0_42 = arith.constant 0 : index
    %c0_43 = arith.constant 0 : index
    %67 = vector.load %arg4[%c11, %c0_42, %c0_43] : memref<36x128x128xbf16, #tpu.memory_space<vmem>>, vector<1x128x128xbf16>
    %68 = vector.shape_cast %67 : vector<1x128x128xbf16> to vector<128x128xbf16>
    %cst_44 = arith.constant dense<0.000000e+00> : vector<8x128xf32>
    %69 = tpu.matmul %66, %68, %cst_44 {dimension_numbers = #tpu.dot_dimension_numbers<[1], [0], [0], [1], [0, 0, 1, 1], [], []>} : vector<8x128xbf16>, vector<128x128xbf16>, vector<8x128xf32> -> vector<8x128xf32>
    %70 = arith.addf %65, %69 : vector<8x128xf32>
    %71 = vector.extract_strided_slice %11 {offsets = [96, 0], sizes = [8, 128], strides = [1, 1]} : vector<288x128xbf16> to vector<8x128xbf16>
    %c12 = arith.constant 12 : index
    %c0_45 = arith.constant 0 : index
    %c0_46 = arith.constant 0 : index
    %72 = vector.load %arg4[%c12, %c0_45, %c0_46] : memref<36x128x128xbf16, #tpu.memory_space<vmem>>, vector<1x128x128xbf16>
    %73 = vector.shape_cast %72 : vector<1x128x128xbf16> to vector<128x128xbf16>
    %cst_47 = arith.constant dense<0.000000e+00> : vector<8x128xf32>
    %74 = tpu.matmul %71, %73, %cst_47 {dimension_numbers = #tpu.dot_dimension_numbers<[1], [0], [0], [1], [0, 0, 1, 1], [], []>} : vector<8x128xbf16>, vector<128x128xbf16>, vector<8x128xf32> -> vector<8x128xf32>
    %75 = arith.addf %70, %74 : vector<8x128xf32>
    %76 = vector.extract_strided_slice %11 {offsets = [104, 0], sizes = [8, 128], strides = [1, 1]} : vector<288x128xbf16> to vector<8x128xbf16>
    %c13 = arith.constant 13 : index
    %c0_48 = arith.constant 0 : index
    %c0_49 = arith.constant 0 : index
    %77 = vector.load %arg4[%c13, %c0_48, %c0_49] : memref<36x128x128xbf16, #tpu.memory_space<vmem>>, vector<1x128x128xbf16>
    %78 = vector.shape_cast %77 : vector<1x128x128xbf16> to vector<128x128xbf16>
    %cst_50 = arith.constant dense<0.000000e+00> : vector<8x128xf32>
    %79 = tpu.matmul %76, %78, %cst_50 {dimension_numbers = #tpu.dot_dimension_numbers<[1], [0], [0], [1], [0, 0, 1, 1], [], []>} : vector<8x128xbf16>, vector<128x128xbf16>, vector<8x128xf32> -> vector<8x128xf32>
    %80 = arith.addf %75, %79 : vector<8x128xf32>
    %81 = vector.extract_strided_slice %11 {offsets = [112, 0], sizes = [8, 128], strides = [1, 1]} : vector<288x128xbf16> to vector<8x128xbf16>
    %c14 = arith.constant 14 : index
    %c0_51 = arith.constant 0 : index
    %c0_52 = arith.constant 0 : index
    %82 = vector.load %arg4[%c14, %c0_51, %c0_52] : memref<36x128x128xbf16, #tpu.memory_space<vmem>>, vector<1x128x128xbf16>
    %83 = vector.shape_cast %82 : vector<1x128x128xbf16> to vector<128x128xbf16>
    %cst_53 = arith.constant dense<0.000000e+00> : vector<8x128xf32>
    %84 = tpu.matmul %81, %83, %cst_53 {dimension_numbers = #tpu.dot_dimension_numbers<[1], [0], [0], [1], [0, 0, 1, 1], [], []>} : vector<8x128xbf16>, vector<128x128xbf16>, vector<8x128xf32> -> vector<8x128xf32>
    %85 = arith.addf %80, %84 : vector<8x128xf32>
    %86 = vector.extract_strided_slice %11 {offsets = [120, 0], sizes = [8, 128], strides = [1, 1]} : vector<288x128xbf16> to vector<8x128xbf16>
    %c15 = arith.constant 15 : index
    %c0_54 = arith.constant 0 : index
    %c0_55 = arith.constant 0 : index
    %87 = vector.load %arg4[%c15, %c0_54, %c0_55] : memref<36x128x128xbf16, #tpu.memory_space<vmem>>, vector<1x128x128xbf16>
    %88 = vector.shape_cast %87 : vector<1x128x128xbf16> to vector<128x128xbf16>
    %cst_56 = arith.constant dense<0.000000e+00> : vector<8x128xf32>
    %89 = tpu.matmul %86, %88, %cst_56 {dimension_numbers = #tpu.dot_dimension_numbers<[1], [0], [0], [1], [0, 0, 1, 1], [], []>} : vector<8x128xbf16>, vector<128x128xbf16>, vector<8x128xf32> -> vector<8x128xf32>
    %90 = arith.addf %85, %89 : vector<8x128xf32>
    %91 = vector.extract_strided_slice %11 {offsets = [128, 0], sizes = [8, 128], strides = [1, 1]} : vector<288x128xbf16> to vector<8x128xbf16>
    %c16 = arith.constant 16 : index
    %c0_57 = arith.constant 0 : index
    %c0_58 = arith.constant 0 : index
    %92 = vector.load %arg4[%c16, %c0_57, %c0_58] : memref<36x128x128xbf16, #tpu.memory_space<vmem>>, vector<1x128x128xbf16>
    %93 = vector.shape_cast %92 : vector<1x128x128xbf16> to vector<128x128xbf16>
    %cst_59 = arith.constant dense<0.000000e+00> : vector<8x128xf32>
    %94 = tpu.matmul %91, %93, %cst_59 {dimension_numbers = #tpu.dot_dimension_numbers<[1], [0], [0], [1], [0, 0, 1, 1], [], []>} : vector<8x128xbf16>, vector<128x128xbf16>, vector<8x128xf32> -> vector<8x128xf32>
    %95 = arith.addf %90, %94 : vector<8x128xf32>
    %96 = vector.extract_strided_slice %11 {offsets = [136, 0], sizes = [8, 128], strides = [1, 1]} : vector<288x128xbf16> to vector<8x128xbf16>
    %c17 = arith.constant 17 : index
    %c0_60 = arith.constant 0 : index
    %c0_61 = arith.constant 0 : index
    %97 = vector.load %arg4[%c17, %c0_60, %c0_61] : memref<36x128x128xbf16, #tpu.memory_space<vmem>>, vector<1x128x128xbf16>
    %98 = vector.shape_cast %97 : vector<1x128x128xbf16> to vector<128x128xbf16>
    %cst_62 = arith.constant dense<0.000000e+00> : vector<8x128xf32>
    %99 = tpu.matmul %96, %98, %cst_62 {dimension_numbers = #tpu.dot_dimension_numbers<[1], [0], [0], [1], [0, 0, 1, 1], [], []>} : vector<8x128xbf16>, vector<128x128xbf16>, vector<8x128xf32> -> vector<8x128xf32>
    %100 = arith.addf %95, %99 : vector<8x128xf32>
    %101 = vector.extract_strided_slice %11 {offsets = [144, 0], sizes = [8, 128], strides = [1, 1]} : vector<288x128xbf16> to vector<8x128xbf16>
    %c18 = arith.constant 18 : index
    %c0_63 = arith.constant 0 : index
    %c0_64 = arith.constant 0 : index
    %102 = vector.load %arg4[%c18, %c0_63, %c0_64] : memref<36x128x128xbf16, #tpu.memory_space<vmem>>, vector<1x128x128xbf16>
    %103 = vector.shape_cast %102 : vector<1x128x128xbf16> to vector<128x128xbf16>
    %cst_65 = arith.constant dense<0.000000e+00> : vector<8x128xf32>
    %104 = tpu.matmul %101, %103, %cst_65 {dimension_numbers = #tpu.dot_dimension_numbers<[1], [0], [0], [1], [0, 0, 1, 1], [], []>} : vector<8x128xbf16>, vector<128x128xbf16>, vector<8x128xf32> -> vector<8x128xf32>
    %105 = arith.addf %100, %104 : vector<8x128xf32>
    %106 = vector.extract_strided_slice %11 {offsets = [152, 0], sizes = [8, 128], strides = [1, 1]} : vector<288x128xbf16> to vector<8x128xbf16>
    %c19 = arith.constant 19 : index
    %c0_66 = arith.constant 0 : index
    %c0_67 = arith.constant 0 : index
    %107 = vector.load %arg4[%c19, %c0_66, %c0_67] : memref<36x128x128xbf16, #tpu.memory_space<vmem>>, vector<1x128x128xbf16>
    %108 = vector.shape_cast %107 : vector<1x128x128xbf16> to vector<128x128xbf16>
    %cst_68 = arith.constant dense<0.000000e+00> : vector<8x128xf32>
    %109 = tpu.matmul %106, %108, %cst_68 {dimension_numbers = #tpu.dot_dimension_numbers<[1], [0], [0], [1], [0, 0, 1, 1], [], []>} : vector<8x128xbf16>, vector<128x128xbf16>, vector<8x128xf32> -> vector<8x128xf32>
    %110 = arith.addf %105, %109 : vector<8x128xf32>
    %111 = vector.extract_strided_slice %11 {offsets = [160, 0], sizes = [8, 128], strides = [1, 1]} : vector<288x128xbf16> to vector<8x128xbf16>
    %c20 = arith.constant 20 : index
    %c0_69 = arith.constant 0 : index
    %c0_70 = arith.constant 0 : index
    %112 = vector.load %arg4[%c20, %c0_69, %c0_70] : memref<36x128x128xbf16, #tpu.memory_space<vmem>>, vector<1x128x128xbf16>
    %113 = vector.shape_cast %112 : vector<1x128x128xbf16> to vector<128x128xbf16>
    %cst_71 = arith.constant dense<0.000000e+00> : vector<8x128xf32>
    %114 = tpu.matmul %111, %113, %cst_71 {dimension_numbers = #tpu.dot_dimension_numbers<[1], [0], [0], [1], [0, 0, 1, 1], [], []>} : vector<8x128xbf16>, vector<128x128xbf16>, vector<8x128xf32> -> vector<8x128xf32>
    %115 = arith.addf %110, %114 : vector<8x128xf32>
    %116 = vector.extract_strided_slice %11 {offsets = [168, 0], sizes = [8, 128], strides = [1, 1]} : vector<288x128xbf16> to vector<8x128xbf16>
    %c21 = arith.constant 21 : index
    %c0_72 = arith.constant 0 : index
    %c0_73 = arith.constant 0 : index
    %117 = vector.load %arg4[%c21, %c0_72, %c0_73] : memref<36x128x128xbf16, #tpu.memory_space<vmem>>, vector<1x128x128xbf16>
    %118 = vector.shape_cast %117 : vector<1x128x128xbf16> to vector<128x128xbf16>
    %cst_74 = arith.constant dense<0.000000e+00> : vector<8x128xf32>
    %119 = tpu.matmul %116, %118, %cst_74 {dimension_numbers = #tpu.dot_dimension_numbers<[1], [0], [0], [1], [0, 0, 1, 1], [], []>} : vector<8x128xbf16>, vector<128x128xbf16>, vector<8x128xf32> -> vector<8x128xf32>
    %120 = arith.addf %115, %119 : vector<8x128xf32>
    %121 = vector.extract_strided_slice %11 {offsets = [176, 0], sizes = [8, 128], strides = [1, 1]} : vector<288x128xbf16> to vector<8x128xbf16>
    %c22 = arith.constant 22 : index
    %c0_75 = arith.constant 0 : index
    %c0_76 = arith.constant 0 : index
    %122 = vector.load %arg4[%c22, %c0_75, %c0_76] : memref<36x128x128xbf16, #tpu.memory_space<vmem>>, vector<1x128x128xbf16>
    %123 = vector.shape_cast %122 : vector<1x128x128xbf16> to vector<128x128xbf16>
    %cst_77 = arith.constant dense<0.000000e+00> : vector<8x128xf32>
    %124 = tpu.matmul %121, %123, %cst_77 {dimension_numbers = #tpu.dot_dimension_numbers<[1], [0], [0], [1], [0, 0, 1, 1], [], []>} : vector<8x128xbf16>, vector<128x128xbf16>, vector<8x128xf32> -> vector<8x128xf32>
    %125 = arith.addf %120, %124 : vector<8x128xf32>
    %126 = vector.extract_strided_slice %11 {offsets = [184, 0], sizes = [8, 128], strides = [1, 1]} : vector<288x128xbf16> to vector<8x128xbf16>
    %c23 = arith.constant 23 : index
    %c0_78 = arith.constant 0 : index
    %c0_79 = arith.constant 0 : index
    %127 = vector.load %arg4[%c23, %c0_78, %c0_79] : memref<36x128x128xbf16, #tpu.memory_space<vmem>>, vector<1x128x128xbf16>
    %128 = vector.shape_cast %127 : vector<1x128x128xbf16> to vector<128x128xbf16>
    %cst_80 = arith.constant dense<0.000000e+00> : vector<8x128xf32>
    %129 = tpu.matmul %126, %128, %cst_80 {dimension_numbers = #tpu.dot_dimension_numbers<[1], [0], [0], [1], [0, 0, 1, 1], [], []>} : vector<8x128xbf16>, vector<128x128xbf16>, vector<8x128xf32> -> vector<8x128xf32>
    %130 = arith.addf %125, %129 : vector<8x128xf32>
    %131 = vector.extract_strided_slice %11 {offsets = [192, 0], sizes = [8, 128], strides = [1, 1]} : vector<288x128xbf16> to vector<8x128xbf16>
    %c24 = arith.constant 24 : index
    %c0_81 = arith.constant 0 : index
    %c0_82 = arith.constant 0 : index
    %132 = vector.load %arg4[%c24, %c0_81, %c0_82] : memref<36x128x128xbf16, #tpu.memory_space<vmem>>, vector<1x128x128xbf16>
    %133 = vector.shape_cast %132 : vector<1x128x128xbf16> to vector<128x128xbf16>
    %cst_83 = arith.constant dense<0.000000e+00> : vector<8x128xf32>
    %134 = tpu.matmul %131, %133, %cst_83 {dimension_numbers = #tpu.dot_dimension_numbers<[1], [0], [0], [1], [0, 0, 1, 1], [], []>} : vector<8x128xbf16>, vector<128x128xbf16>, vector<8x128xf32> -> vector<8x128xf32>
    %135 = arith.addf %130, %134 : vector<8x128xf32>
    %136 = vector.extract_strided_slice %11 {offsets = [200, 0], sizes = [8, 128], strides = [1, 1]} : vector<288x128xbf16> to vector<8x128xbf16>
    %c25 = arith.constant 25 : index
    %c0_84 = arith.constant 0 : index
    %c0_85 = arith.constant 0 : index
    %137 = vector.load %arg4[%c25, %c0_84, %c0_85] : memref<36x128x128xbf16, #tpu.memory_space<vmem>>, vector<1x128x128xbf16>
    %138 = vector.shape_cast %137 : vector<1x128x128xbf16> to vector<128x128xbf16>
    %cst_86 = arith.constant dense<0.000000e+00> : vector<8x128xf32>
    %139 = tpu.matmul %136, %138, %cst_86 {dimension_numbers = #tpu.dot_dimension_numbers<[1], [0], [0], [1], [0, 0, 1, 1], [], []>} : vector<8x128xbf16>, vector<128x128xbf16>, vector<8x128xf32> -> vector<8x128xf32>
    %140 = arith.addf %135, %139 : vector<8x128xf32>
    %141 = vector.extract_strided_slice %11 {offsets = [208, 0], sizes = [8, 128], strides = [1, 1]} : vector<288x128xbf16> to vector<8x128xbf16>
    %c26 = arith.constant 26 : index
    %c0_87 = arith.constant 0 : index
    %c0_88 = arith.constant 0 : index
    %142 = vector.load %arg4[%c26, %c0_87, %c0_88] : memref<36x128x128xbf16, #tpu.memory_space<vmem>>, vector<1x128x128xbf16>
    %143 = vector.shape_cast %142 : vector<1x128x128xbf16> to vector<128x128xbf16>
    %cst_89 = arith.constant dense<0.000000e+00> : vector<8x128xf32>
    %144 = tpu.matmul %141, %143, %cst_89 {dimension_numbers = #tpu.dot_dimension_numbers<[1], [0], [0], [1], [0, 0, 1, 1], [], []>} : vector<8x128xbf16>, vector<128x128xbf16>, vector<8x128xf32> -> vector<8x128xf32>
    %145 = arith.addf %140, %144 : vector<8x128xf32>
    %146 = vector.extract_strided_slice %11 {offsets = [216, 0], sizes = [8, 128], strides = [1, 1]} : vector<288x128xbf16> to vector<8x128xbf16>
    %c27 = arith.constant 27 : index
    %c0_90 = arith.constant 0 : index
    %c0_91 = arith.constant 0 : index
    %147 = vector.load %arg4[%c27, %c0_90, %c0_91] : memref<36x128x128xbf16, #tpu.memory_space<vmem>>, vector<1x128x128xbf16>
    %148 = vector.shape_cast %147 : vector<1x128x128xbf16> to vector<128x128xbf16>
    %cst_92 = arith.constant dense<0.000000e+00> : vector<8x128xf32>
    %149 = tpu.matmul %146, %148, %cst_92 {dimension_numbers = #tpu.dot_dimension_numbers<[1], [0], [0], [1], [0, 0, 1, 1], [], []>} : vector<8x128xbf16>, vector<128x128xbf16>, vector<8x128xf32> -> vector<8x128xf32>
    %150 = arith.addf %145, %149 : vector<8x128xf32>
    %151 = vector.extract_strided_slice %11 {offsets = [224, 0], sizes = [8, 128], strides = [1, 1]} : vector<288x128xbf16> to vector<8x128xbf16>
    %c28 = arith.constant 28 : index
    %c0_93 = arith.constant 0 : index
    %c0_94 = arith.constant 0 : index
    %152 = vector.load %arg4[%c28, %c0_93, %c0_94] : memref<36x128x128xbf16, #tpu.memory_space<vmem>>, vector<1x128x128xbf16>
    %153 = vector.shape_cast %152 : vector<1x128x128xbf16> to vector<128x128xbf16>
    %cst_95 = arith.constant dense<0.000000e+00> : vector<8x128xf32>
    %154 = tpu.matmul %151, %153, %cst_95 {dimension_numbers = #tpu.dot_dimension_numbers<[1], [0], [0], [1], [0, 0, 1, 1], [], []>} : vector<8x128xbf16>, vector<128x128xbf16>, vector<8x128xf32> -> vector<8x128xf32>
    %155 = arith.addf %150, %154 : vector<8x128xf32>
    %156 = vector.extract_strided_slice %11 {offsets = [232, 0], sizes = [8, 128], strides = [1, 1]} : vector<288x128xbf16> to vector<8x128xbf16>
    %c29 = arith.constant 29 : index
    %c0_96 = arith.constant 0 : index
    %c0_97 = arith.constant 0 : index
    %157 = vector.load %arg4[%c29, %c0_96, %c0_97] : memref<36x128x128xbf16, #tpu.memory_space<vmem>>, vector<1x128x128xbf16>
    %158 = vector.shape_cast %157 : vector<1x128x128xbf16> to vector<128x128xbf16>
    %cst_98 = arith.constant dense<0.000000e+00> : vector<8x128xf32>
    %159 = tpu.matmul %156, %158, %cst_98 {dimension_numbers = #tpu.dot_dimension_numbers<[1], [0], [0], [1], [0, 0, 1, 1], [], []>} : vector<8x128xbf16>, vector<128x128xbf16>, vector<8x128xf32> -> vector<8x128xf32>
    %160 = arith.addf %155, %159 : vector<8x128xf32>
    %161 = vector.extract_strided_slice %11 {offsets = [240, 0], sizes = [8, 128], strides = [1, 1]} : vector<288x128xbf16> to vector<8x128xbf16>
    %c30 = arith.constant 30 : index
    %c0_99 = arith.constant 0 : index
    %c0_100 = arith.constant 0 : index
    %162 = vector.load %arg4[%c30, %c0_99, %c0_100] : memref<36x128x128xbf16, #tpu.memory_space<vmem>>, vector<1x128x128xbf16>
    %163 = vector.shape_cast %162 : vector<1x128x128xbf16> to vector<128x128xbf16>
    %cst_101 = arith.constant dense<0.000000e+00> : vector<8x128xf32>
    %164 = tpu.matmul %161, %163, %cst_101 {dimension_numbers = #tpu.dot_dimension_numbers<[1], [0], [0], [1], [0, 0, 1, 1], [], []>} : vector<8x128xbf16>, vector<128x128xbf16>, vector<8x128xf32> -> vector<8x128xf32>
    %165 = arith.addf %160, %164 : vector<8x128xf32>
    %166 = vector.extract_strided_slice %11 {offsets = [248, 0], sizes = [8, 128], strides = [1, 1]} : vector<288x128xbf16> to vector<8x128xbf16>
    %c31 = arith.constant 31 : index
    %c0_102 = arith.constant 0 : index
    %c0_103 = arith.constant 0 : index
    %167 = vector.load %arg4[%c31, %c0_102, %c0_103] : memref<36x128x128xbf16, #tpu.memory_space<vmem>>, vector<1x128x128xbf16>
    %168 = vector.shape_cast %167 : vector<1x128x128xbf16> to vector<128x128xbf16>
    %cst_104 = arith.constant dense<0.000000e+00> : vector<8x128xf32>
    %169 = tpu.matmul %166, %168, %cst_104 {dimension_numbers = #tpu.dot_dimension_numbers<[1], [0], [0], [1], [0, 0, 1, 1], [], []>} : vector<8x128xbf16>, vector<128x128xbf16>, vector<8x128xf32> -> vector<8x128xf32>
    %170 = arith.addf %165, %169 : vector<8x128xf32>
    %171 = vector.extract_strided_slice %11 {offsets = [256, 0], sizes = [8, 128], strides = [1, 1]} : vector<288x128xbf16> to vector<8x128xbf16>
    %c32 = arith.constant 32 : index
    %c0_105 = arith.constant 0 : index
    %c0_106 = arith.constant 0 : index
    %172 = vector.load %arg4[%c32, %c0_105, %c0_106] : memref<36x128x128xbf16, #tpu.memory_space<vmem>>, vector<1x128x128xbf16>
    %173 = vector.shape_cast %172 : vector<1x128x128xbf16> to vector<128x128xbf16>
    %cst_107 = arith.constant dense<0.000000e+00> : vector<8x128xf32>
    %174 = tpu.matmul %171, %173, %cst_107 {dimension_numbers = #tpu.dot_dimension_numbers<[1], [0], [0], [1], [0, 0, 1, 1], [], []>} : vector<8x128xbf16>, vector<128x128xbf16>, vector<8x128xf32> -> vector<8x128xf32>
    %175 = arith.addf %170, %174 : vector<8x128xf32>
    %176 = vector.extract_strided_slice %11 {offsets = [264, 0], sizes = [8, 128], strides = [1, 1]} : vector<288x128xbf16> to vector<8x128xbf16>
    %c33 = arith.constant 33 : index
    %c0_108 = arith.constant 0 : index
    %c0_109 = arith.constant 0 : index
    %177 = vector.load %arg4[%c33, %c0_108, %c0_109] : memref<36x128x128xbf16, #tpu.memory_space<vmem>>, vector<1x128x128xbf16>
    %178 = vector.shape_cast %177 : vector<1x128x128xbf16> to vector<128x128xbf16>
    %cst_110 = arith.constant dense<0.000000e+00> : vector<8x128xf32>
    %179 = tpu.matmul %176, %178, %cst_110 {dimension_numbers = #tpu.dot_dimension_numbers<[1], [0], [0], [1], [0, 0, 1, 1], [], []>} : vector<8x128xbf16>, vector<128x128xbf16>, vector<8x128xf32> -> vector<8x128xf32>
    %180 = arith.addf %175, %179 : vector<8x128xf32>
    %181 = vector.extract_strided_slice %11 {offsets = [272, 0], sizes = [8, 128], strides = [1, 1]} : vector<288x128xbf16> to vector<8x128xbf16>
    %c34 = arith.constant 34 : index
    %c0_111 = arith.constant 0 : index
    %c0_112 = arith.constant 0 : index
    %182 = vector.load %arg4[%c34, %c0_111, %c0_112] : memref<36x128x128xbf16, #tpu.memory_space<vmem>>, vector<1x128x128xbf16>
    %183 = vector.shape_cast %182 : vector<1x128x128xbf16> to vector<128x128xbf16>
    %cst_113 = arith.constant dense<0.000000e+00> : vector<8x128xf32>
    %184 = tpu.matmul %181, %183, %cst_113 {dimension_numbers = #tpu.dot_dimension_numbers<[1], [0], [0], [1], [0, 0, 1, 1], [], []>} : vector<8x128xbf16>, vector<128x128xbf16>, vector<8x128xf32> -> vector<8x128xf32>
    %185 = arith.addf %180, %184 : vector<8x128xf32>
    %186 = vector.extract_strided_slice %11 {offsets = [280, 0], sizes = [8, 128], strides = [1, 1]} : vector<288x128xbf16> to vector<8x128xbf16>
    %c35 = arith.constant 35 : index
    %c0_114 = arith.constant 0 : index
    %c0_115 = arith.constant 0 : index
    %187 = vector.load %arg4[%c35, %c0_114, %c0_115] : memref<36x128x128xbf16, #tpu.memory_space<vmem>>, vector<1x128x128xbf16>
    %188 = vector.shape_cast %187 : vector<1x128x128xbf16> to vector<128x128xbf16>
    %cst_116 = arith.constant dense<0.000000e+00> : vector<8x128xf32>
    %189 = tpu.matmul %186, %188, %cst_116 {dimension_numbers = #tpu.dot_dimension_numbers<[1], [0], [0], [1], [0, 0, 1, 1], [], []>} : vector<8x128xbf16>, vector<128x128xbf16>, vector<8x128xf32> -> vector<8x128xf32>
    %190 = arith.addf %185, %189 : vector<8x128xf32>
    %c0_117 = arith.constant 0 : index
    %c0_118 = arith.constant 0 : index
    %191 = vector.load %arg5[%c0_117, %c0_118] : memref<1x128xf32, #tpu.memory_space<vmem>>, vector<1x128xf32>
    %192 = vector.broadcast %191 : vector<1x128xf32> to vector<8x128xf32>
    %193 = arith.addf %190, %192 : vector<8x128xf32>
    %cst_119 = arith.constant 0.000000e+00 : f32
    %194 = vector.broadcast %cst_119 : f32 to vector<8x128xf32>
    %195 = arith.maximumf %193, %194 : vector<8x128xf32>
    %c0_120 = arith.constant 0 : index
    %c0_121 = arith.constant 0 : index
    %196 = vector.load %arg6[%c0_120, %c0_121] : memref<128x128xf32, #tpu.memory_space<vmem>>, vector<128x128xf32>
    %cst_122 = arith.constant dense<0.000000e+00> : vector<8x128xf32>
    %197 = tpu.matmul %195, %196, %cst_122 {dimension_numbers = #tpu.dot_dimension_numbers<[1], [0], [0], [1], [0, 0, 1, 1], [], []>} : vector<8x128xf32>, vector<128x128xf32>, vector<8x128xf32> -> vector<8x128xf32>
    %c0_123 = arith.constant 0 : index
    %c0_124 = arith.constant 0 : index
    %198 = vector.load %arg7[%c0_123, %c0_124] : memref<1x128xf32, #tpu.memory_space<vmem>>, vector<1x128xf32>
    %199 = vector.broadcast %198 : vector<1x128xf32> to vector<8x128xf32>
    %200 = arith.addf %197, %199 : vector<8x128xf32>
    %c0_125 = arith.constant 0 : index
    %c0_126 = arith.constant 0 : index
    %201 = vector.load %arg8[%c0_125, %c0_126] : memref<8x128xf32, #tpu.memory_space<vmem>>, vector<8x128xf32>
    tpu.vector_store %arg8[%c0_125, %c0_126], %200 {strides = array<i32>} : memref<8x128xf32, #tpu.memory_space<vmem>>, vector<8x128xf32>,
    return
  }
  func.func @transform_0(%arg0: i32) -> (i32, i32, i32) {
    %c0_i32 = arith.constant 0 : i32
    %c0_i32_0 = arith.constant 0 : i32
    %c0_i32_1 = arith.constant 0 : i32
    return %arg0, %c0_i32, %c0_i32_0 : i32, i32, i32
  }
  func.func @transform_1(%arg0: i32) -> (i32, i32) {
    %c0_i32 = arith.constant 0 : i32
    %c0_i32_0 = arith.constant 0 : i32
    %c0_i32_1 = arith.constant 0 : i32
    return %c0_i32, %c0_i32_0 : i32, i32
  }
  func.func @transform_2(%arg0: i32) -> (i32, i32) {
    %c0_i32 = arith.constant 0 : i32
    %c0_i32_0 = arith.constant 0 : i32
    %c0_i32_1 = arith.constant 0 : i32
    return %c0_i32, %c0_i32_0 : i32, i32
  }
  func.func @transform_3(%arg0: i32) -> (i32, i32, i32) {
    %c0_i32 = arith.constant 0 : i32
    %c0_i32_0 = arith.constant 0 : i32
    %c0_i32_1 = arith.constant 0 : i32
    %c0_i32_2 = arith.constant 0 : i32
    return %c0_i32, %c0_i32_0, %c0_i32_1 : i32, i32, i32
  }
  func.func @transform_4(%arg0: i32) -> (i32, i32) {
    %c0_i32 = arith.constant 0 : i32
    %c0_i32_0 = arith.constant 0 : i32
    %c0_i32_1 = arith.constant 0 : i32
    return %c0_i32, %c0_i32_0 : i32, i32
  }
  func.func @transform_5(%arg0: i32) -> (i32, i32) {
    %c0_i32 = arith.constant 0 : i32
    %c0_i32_0 = arith.constant 0 : i32
    %c0_i32_1 = arith.constant 0 : i32
    return %c0_i32, %c0_i32_0 : i32, i32
  }
  func.func @transform_6(%arg0: i32) -> (i32, i32) {
    %c0_i32 = arith.constant 0 : i32
    %c0_i32_0 = arith.constant 0 : i32
    %c0_i32_1 = arith.constant 0 : i32
    return %c0_i32, %c0_i32_0 : i32, i32
  }
  func.func @transform_7(%arg0: i32) -> (i32, i32) {
    %c0_i32 = arith.constant 0 : i32
    %c0_i32_0 = arith.constant 0 : i32
    return %arg0, %c0_i32 : i32, i32
  }
}

</mosaic_0001>

<llo_original>
// kernel: tpu_custom_call.1
$region0: #{tpu_custom_call.1}
  #allocation0 [shape = 'u32[]', space=smem, size = 0x4, offset = 0x4, fixed_abs, tag = 'smem constant byte address 0x4 - core index']
  #allocation1 [shape = 'u32[144,128]{1,0:T(1,128)}', space=vmem, size = 0x12000, scoped, tag = 'internal scratch']
  %s0 = inlined_call_operand.hbm [shape: bf16[1,1152,128], index: 0, kind: input, shape index: {}]
  %s1 = inlined_call_operand.hbm [shape: bf16[128,128], index: 1, kind: input, shape index: {}]
  %s2 = inlined_call_operand.hbm [shape: f32[1,128], index: 2, kind: input, shape index: {}]
  %s3 = inlined_call_operand.hbm [shape: bf16[36,128,128], index: 3, kind: input, shape index: {}]
  %s4 = inlined_call_operand.hbm [shape: f32[1,128], index: 4, kind: input, shape index: {}]
  %s5 = inlined_call_operand.hbm [shape: f32[128,128], index: 5, kind: input, shape index: {}]
  %s6 = inlined_call_operand.hbm [shape: f32[1,128], index: 6, kind: input, shape index: {}]
  %s7 = inlined_call_operand.hbm [shape: f32[8,128], index: 7, kind: output, shape index: {}]
  %s8 = sld [smem:[#allocation0]]
  $region66: #{tpu_custom_call.1} parent=0
    _
  %s10 = ssub.s32 1, %s8
  %s11 = scalar_select 0, %s10, %s8
  $region1: #{tpu_custom_call.1} parent=0
    #allocation2 [shape = 'u8[294912]{0}', space=vmem, size = 0x48000, scoped, tag = 'input window, operand 0, single buffered']
    #allocation3 [shape = 's32[1]{0}', space=sflag, size = 0x4, scoped, tag = 'scoped memory for tpu_custom_call.1']
    #allocation4 [shape = 's32[1]{0}', space=sflag, size = 0x4, scoped, tag = 'scoped memory for tpu_custom_call.1']
    #allocation5 [shape = 'u8[32768]{0}', space=vmem, size = 0x8000, scoped, tag = 'input window, operand 1, single buffered']
    #allocation6 [shape = 's32[1]{0}', space=sflag, size = 0x4, scoped, tag = 'scoped memory for tpu_custom_call.1']
    #allocation7 [shape = 'u8[512]{0}', space=vmem, size = 0x400, scoped, tag = 'input window, operand 2, single buffered']
    #allocation8 [shape = 'u8[1179648]{0}', space=vmem, size = 0x120000, scoped, tag = 'input window, operand 3, single buffered']
    #allocation9 [shape = 's32[1]{0}', space=sflag, size = 0x4, scoped, tag = 'scoped memory for tpu_custom_call.1']
    #allocation10 [shape = 'u8[512]{0}', space=vmem, size = 0x400, scoped, tag = 'input window, operand 4, single buffered']
    #allocation11 [shape = 'u8[65536]{0}', space=vmem, size = 0x10000, scoped, tag = 'input window, operand 5, single buffered']
    #allocation12 [shape = 's32[1]{0}', space=sflag, size = 0x4, scoped, tag = 'scoped memory for tpu_custom_call.1']
    #allocation13 [shape = 'u8[512]{0}', space=vmem, size = 0x400, scoped, tag = 'input window, operand 6, single buffered']
    #allocation14 [shape = 'u8[4096]{0}', space=vmem, size = 0x1000, scoped, tag = 'output window, operand 0, single buffered']
    %12 = vsyncpa [#allocation3], 0
    %13 = vsyncpa [#allocation6], 0
    %14 = vsyncpa [#allocation9], 0
    %15 = vsyncpa [#allocation12], 0
    %16 = vsyncpa [#allocation4], 0
    // Predicated region
    $region2: #{tpu_custom_call.1} parent=1 // pred_check
      _
    $region3: #{tpu_custom_call.1} parent=1 // pred_check_branch
      %18 = sbr.rel (0) target = $region5
    $region4: #{tpu_custom_call.1} parent=1 // pred_region
      %s20 = ssub.s32 9216, 9216
      %21 = vsyncadd [#allocation3], %s20
      %s22 = sshll.u32 [#allocation2], 4
      %s23 = int_to_ptr.vmem [resolvable:$true] %s22
      %28 = dma.hbm_to_vmem [thread:$0]  %s0, 9216, %s23, [#allocation3], 64, 64, 4
    $region5: #{tpu_custom_call.1} parent=1 // pred_fallthru
      _
    // Predicated region
    $region6: #{tpu_custom_call.1} parent=1 // pred_check
      _
    $region7: #{tpu_custom_call.1} parent=1 // pred_check_branch
      %30 = sbr.rel (0) target = $region9
    $region8: #{tpu_custom_call.1} parent=1 // pred_region
      %s32 = ssub.s32 1024, 1024
      %33 = vsyncadd [#allocation6], %s32
      %s34 = sshll.u32 [#allocation5], 4
      %s35 = int_to_ptr.vmem [resolvable:$true] %s34
      %40 = dma.hbm_to_vmem [thread:$0]  %s1, 1024, %s35, [#allocation6], 64, 64, 4
    $region9: #{tpu_custom_call.1} parent=1 // pred_fallthru
      _
    // Predicated region
    $region10: #{tpu_custom_call.1} parent=1 // pred_check
      _
    $region11: #{tpu_custom_call.1} parent=1 // pred_check_branch
      %42 = sbr.rel (0) target = $region13
    $region12: #{tpu_custom_call.1} parent=1 // pred_region
      %s44 = ssub.s32 16, 16
      %45 = vsyncadd [#allocation6], %s44
      %s47 = sshll.u32 [#allocation7], 4
      %s48 = int_to_ptr.vmem [resolvable:$true] %s47
      %50 = dma.hbm_to_vmem [thread:$0]  %s2, 16, %s48, [#allocation6]
    $region13: #{tpu_custom_call.1} parent=1 // pred_fallthru
      _
    // Predicated region
    $region14: #{tpu_custom_call.1} parent=1 // pred_check
      _
    $region15: #{tpu_custom_call.1} parent=1 // pred_check_branch
      %52 = sbr.rel (0) target = $region17
    $region16: #{tpu_custom_call.1} parent=1 // pred_region
      %s54 = ssub.s32 36864, 36864
      %55 = vsyncadd [#allocation9], %s54
      %s56 = sshll.u32 [#allocation8], 4
      %s57 = int_to_ptr.vmem [resolvable:$true] %s56
      %62 = dma.hbm_to_vmem [thread:$0]  %s3, 36864, %s57, [#allocation9], 64, 64, 4
    $region17: #{tpu_custom_call.1} parent=1 // pred_fallthru
      _
    // Predicated region
    $region18: #{tpu_custom_call.1} parent=1 // pred_check
      _
    $region19: #{tpu_custom_call.1} parent=1 // pred_check_branch
      %64 = sbr.rel (0) target = $region21
    $region20: #{tpu_custom_call.1} parent=1 // pred_region
      %s66 = ssub.s32 16, 16
      %67 = vsyncadd [#allocation9], %s66
      %s69 = sshll.u32 [#allocation10], 4
      %s70 = int_to_ptr.vmem [resolvable:$true] %s69
      %72 = dma.hbm_to_vmem [thread:$0]  %s4, 16, %s70, [#allocation9]
    $region21: #{tpu_custom_call.1} parent=1 // pred_fallthru
      _
    // Predicated region
    $region22: #{tpu_custom_call.1} parent=1 // pred_check
      _
    $region23: #{tpu_custom_call.1} parent=1 // pred_check_branch
      %74 = sbr.rel (0) target = $region25
    $region24: #{tpu_custom_call.1} parent=1 // pred_region
      %s76 = ssub.s32 2048, 2048
      %77 = vsyncadd [#allocation12], %s76
      %s78 = sshll.u32 [#allocation11], 4
      %s79 = int_to_ptr.vmem [resolvable:$true] %s78
      %84 = dma.hbm_to_vmem [thread:$0]  %s5, 2048, %s79, [#allocation12], 128, 128, 8
    $region25: #{tpu_custom_call.1} parent=1 // pred_fallthru
      _
    // Predicated region
    $region26: #{tpu_custom_call.1} parent=1 // pred_check
      _
    $region27: #{tpu_custom_call.1} parent=1 // pred_check_branch
      %86 = sbr.rel (0) target = $region29
    $region28: #{tpu_custom_call.1} parent=1 // pred_region
      %s88 = ssub.s32 16, 16
      %89 = vsyncadd [#allocation12], %s88
      %s91 = sshll.u32 [#allocation13], 4
      %s92 = int_to_ptr.vmem [resolvable:$true] %s91
      %94 = dma.hbm_to_vmem [thread:$0]  %s6, 16, %s92, [#allocation12]
    $region29: #{tpu_custom_call.1} parent=1 // pred_fallthru
      _
    // Predicated region
    $region30: #{tpu_custom_call.1} parent=1 // pred_check
      _
    $region31: #{tpu_custom_call.1} parent=1 // pred_check_branch
      %96 = sbr.rel (0) target = $region33
    $region32: #{tpu_custom_call.1} parent=1 // pred_region
      %97 = dma.done [#allocation3], 9216
    $region33: #{tpu_custom_call.1} parent=1 // pred_fallthru
      _
    // Predicated region
    $region34: #{tpu_custom_call.1} parent=1 // pred_check
      _
    $region35: #{tpu_custom_call.1} parent=1 // pred_check_branch
      %99 = sbr.rel (0) target = $region37
    $region36: #{tpu_custom_call.1} parent=1 // pred_region
      %100 = dma.done [#allocation6], 1024
    $region37: #{tpu_custom_call.1} parent=1 // pred_fallthru
      _
    // Predicated region
    $region38: #{tpu_custom_call.1} parent=1 // pred_check
      _
    $region39: #{tpu_custom_call.1} parent=1 // pred_check_branch
      %102 = sbr.rel (0) target = $region41
    $region40: #{tpu_custom_call.1} parent=1 // pred_region
      %103 = dma.done [#allocation6], 16
    $region41: #{tpu_custom_call.1} parent=1 // pred_fallthru
      _
    // Predicated region
    $region42: #{tpu_custom_call.1} parent=1 // pred_check
      _
    $region43: #{tpu_custom_call.1} parent=1 // pred_check_branch
      %105 = sbr.rel (0) target = $region45
    $region44: #{tpu_custom_call.1} parent=1 // pred_region
      %106 = dma.done [#allocation9], 36864
    $region45: #{tpu_custom_call.1} parent=1 // pred_fallthru
      _
    // Predicated region
    $region46: #{tpu_custom_call.1} parent=1 // pred_check
      _
    $region47: #{tpu_custom_call.1} parent=1 // pred_check_branch
      %108 = sbr.rel (0) target = $region49
    $region48: #{tpu_custom_call.1} parent=1 // pred_region
      %109 = dma.done [#allocation9], 16
    $region49: #{tpu_custom_call.1} parent=1 // pred_fallthru
      _
    // Predicated region
    $region50: #{tpu_custom_call.1} parent=1 // pred_check
      _
    $region51: #{tpu_custom_call.1} parent=1 // pred_check_branch
      %111 = sbr.rel (0) target = $region53
    $region52: #{tpu_custom_call.1} parent=1 // pred_region
      %112 = dma.done [#allocation12], 2048
    $region53: #{tpu_custom_call.1} parent=1 // pred_fallthru
      _
    // Predicated region
    $region54: #{tpu_custom_call.1} parent=1 // pred_check
      _
    $region55: #{tpu_custom_call.1} parent=1 // pred_check_branch
      %114 = sbr.rel (0) target = $region57
    $region56: #{tpu_custom_call.1} parent=1 // pred_region
      %115 = dma.done [#allocation12], 16
    $region57: #{tpu_custom_call.1} parent=1 // pred_fallthru
      _
    %v117 = vld [vmem:[#allocation2] sm:$0xf]
    %v118 = vld [vmem:[#allocation2 + $0x4] sm:$0xf]
    %v119 = vld [vmem:[#allocation2 + $0x8] sm:$0xf]
    %v120 = vld [vmem:[#allocation2 + $0xc] sm:$0xf]
    %v121 = vld [vmem:[#allocation2 + $0x10] sm:$0xf]
    %v122 = vld [vmem:[#allocation2 + $0x14] sm:$0xf]
    %v123 = vld [vmem:[#allocation2 + $0x18] sm:$0xf]
    %v124 = vld [vmem:[#allocation2 + $0x1c] sm:$0xf]
    %v125 = vld [vmem:[#allocation2 + $0x20] sm:$0xf]
    %v126 = vld [vmem:[#allocation2 + $0x24] sm:$0xf]
    %v127 = vld [vmem:[#allocation2 + $0x28] sm:$0xf]
    %v128 = vld [vmem:[#allocation2 + $0x2c] sm:$0xf]
    %v129 = vld [vmem:[#allocation2 + $0x30] sm:$0xf]
    %v130 = vld [vmem:[#allocation2 + $0x34] sm:$0xf]
    %v131 = vld [vmem:[#allocation2 + $0x38] sm:$0xf]
    %v132 = vld [vmem:[#allocation2 + $0x3c] sm:$0xf]
    %v133 = vld [vmem:[#allocation2 + $0x40] sm:$0xf]
    %v134 = vld [vmem:[#allocation2 + $0x44] sm:$0xf]
    %v135 = vld [vmem:[#allocation2 + $0x48] sm:$0xf]
    %v136 = vld [vmem:[#allocation2 + $0x4c] sm:$0xf]
    %v137 = vld [vmem:[#allocation2 + $0x50] sm:$0xf]
    %v138 = vld [vmem:[#allocation2 + $0x54] sm:$0xf]
    %v139 = vld [vmem:[#allocation2 + $0x58] sm:$0xf]
    %v140 = vld [vmem:[#allocation2 + $0x5c] sm:$0xf]
    %v141 = vld [vmem:[#allocation2 + $0x60] sm:$0xf]
    %v142 = vld [vmem:[#allocation2 + $0x64] sm:$0xf]
    %v143 = vld [vmem:[#allocation2 + $0x68] sm:$0xf]
    %v144 = vld [vmem:[#allocation2 + $0x6c] sm:$0xf]
    %v145 = vld [vmem:[#allocation2 + $0x70] sm:$0xf]
    %v146 = vld [vmem:[#allocation2 + $0x74] sm:$0xf]
    %v147 = vld [vmem:[#allocation2 + $0x78] sm:$0xf]
    %v148 = vld [vmem:[#allocation2 + $0x7c] sm:$0xf]
    %v149 = vld [vmem:[#allocation2 + $0x80] sm:$0xf]
    %v150 = vld [vmem:[#allocation2 + $0x84] sm:$0xf]
    %v151 = vld [vmem:[#allocation2 + $0x88] sm:$0xf]
    %v152 = vld [vmem:[#allocation2 + $0x8c] sm:$0xf]
    %v153 = vld [vmem:[#allocation2 + $0x90] sm:$0xf]
    %v154 = vld [vmem:[#allocation2 + $0x94] sm:$0xf]
    %v155 = vld [vmem:[#allocation2 + $0x98] sm:$0xf]
    %v156 = vld [vmem:[#allocation2 + $0x9c] sm:$0xf]
    %v157 = vld [vmem:[#allocation2 + $0xa0] sm:$0xf]
    %v158 = vld [vmem:[#allocation2 + $0xa4] sm:$0xf]
    %v159 = vld [vmem:[#allocation2 + $0xa8] sm:$0xf]
    %v160 = vld [vmem:[#allocation2 + $0xac] sm:$0xf]
    %v161 = vld [vmem:[#allocation2 + $0xb0] sm:$0xf]
    %v162 = vld [vmem:[#allocation2 + $0xb4] sm:$0xf]
    %v163 = vld [vmem:[#allocation2 + $0xb8] sm:$0xf]
    %v164 = vld [vmem:[#allocation2 + $0xbc] sm:$0xf]
    %v165 = vld [vmem:[#allocation2 + $0xc0] sm:$0xf]
    %v166 = vld [vmem:[#allocation2 + $0xc4] sm:$0xf]
    %v167 = vld [vmem:[#allocation2 + $0xc8] sm:$0xf]
    %v168 = vld [vmem:[#allocation2 + $0xcc] sm:$0xf]
    %v169 = vld [vmem:[#allocation2 + $0xd0] sm:$0xf]
    %v170 = vld [vmem:[#allocation2 + $0xd4] sm:$0xf]
    %v171 = vld [vmem:[#allocation2 + $0xd8] sm:$0xf]
    %v172 = vld [vmem:[#allocation2 + $0xdc] sm:$0xf]
    %v173 = vld [vmem:[#allocation2 + $0xe0] sm:$0xf]
    %v174 = vld [vmem:[#allocation2 + $0xe4] sm:$0xf]
    %v175 = vld [vmem:[#allocation2 + $0xe8] sm:$0xf]
    %v176 = vld [vmem:[#allocation2 + $0xec] sm:$0xf]
    %v177 = vld [vmem:[#allocation2 + $0xf0] sm:$0xf]
    %v178 = vld [vmem:[#allocation2 + $0xf4] sm:$0xf]
    %v179 = vld [vmem:[#allocation2 + $0xf8] sm:$0xf]
    %v180 = vld [vmem:[#allocation2 + $0xfc] sm:$0xf]
    %v181 = vld [vmem:[#allocation2 + $0x100] sm:$0xf]
    %v182 = vld [vmem:[#allocation2 + $0x104] sm:$0xf]
    %v183 = vld [vmem:[#allocation2 + $0x108] sm:$0xf]
    %v184 = vld [vmem:[#allocation2 + $0x10c] sm:$0xf]
    %v185 = vld [vmem:[#allocation2 + $0x110] sm:$0xf]
    %v186 = vld [vmem:[#allocation2 + $0x114] sm:$0xf]
    %v187 = vld [vmem:[#allocation2 + $0x118] sm:$0xf]
    %v188 = vld [vmem:[#allocation2 + $0x11c] sm:$0xf]
    %v189 = vld [vmem:[#allocation2 + $0x120] sm:$0xf]
    %v190 = vld [vmem:[#allocation2 + $0x124] sm:$0xf]
    %v191 = vld [vmem:[#allocation2 + $0x128] sm:$0xf]
    %v192 = vld [vmem:[#allocation2 + $0x12c] sm:$0xf]
    %v193 = vld [vmem:[#allocation2 + $0x130] sm:$0xf]
    %v194 = vld [vmem:[#allocation2 + $0x134] sm:$0xf]
    %v195 = vld [vmem:[#allocation2 + $0x138] sm:$0xf]
    %v196 = vld [vmem:[#allocation2 + $0x13c] sm:$0xf]
    %v197 = vld [vmem:[#allocation2 + $0x140] sm:$0xf]
    %v198 = vld [vmem:[#allocation2 + $0x144] sm:$0xf]
    %v199 = vld [vmem:[#allocation2 + $0x148] sm:$0xf]
    %v200 = vld [vmem:[#allocation2 + $0x14c] sm:$0xf]
    %v201 = vld [vmem:[#allocation2 + $0x150] sm:$0xf]
    %v202 = vld [vmem:[#allocation2 + $0x154] sm:$0xf]
    %v203 = vld [vmem:[#allocation2 + $0x158] sm:$0xf]
    %v204 = vld [vmem:[#allocation2 + $0x15c] sm:$0xf]
    %v205 = vld [vmem:[#allocation2 + $0x160] sm:$0xf]
    %v206 = vld [vmem:[#allocation2 + $0x164] sm:$0xf]
    %v207 = vld [vmem:[#allocation2 + $0x168] sm:$0xf]
    %v208 = vld [vmem:[#allocation2 + $0x16c] sm:$0xf]
    %v209 = vld [vmem:[#allocation2 + $0x170] sm:$0xf]
    %v210 = vld [vmem:[#allocation2 + $0x174] sm:$0xf]
    %v211 = vld [vmem:[#allocation2 + $0x178] sm:$0xf]
    %v212 = vld [vmem:[#allocation2 + $0x17c] sm:$0xf]
    %v213 = vld [vmem:[#allocation2 + $0x180] sm:$0xf]
    %v214 = vld [vmem:[#allocation2 + $0x184] sm:$0xf]
    %v215 = vld [vmem:[#allocation2 + $0x188] sm:$0xf]
    %v216 = vld [vmem:[#allocation2 + $0x18c] sm:$0xf]
    %v217 = vld [vmem:[#allocation2 + $0x190] sm:$0xf]
    %v218 = vld [vmem:[#allocation2 + $0x194] sm:$0xf]
    %v219 = vld [vmem:[#allocation2 + $0x198] sm:$0xf]
    %v220 = vld [vmem:[#allocation2 + $0x19c] sm:$0xf]
    %v221 = vld [vmem:[#allocation2 + $0x1a0] sm:$0xf]
    %v222 = vld [vmem:[#allocation2 + $0x1a4] sm:$0xf]
    %v223 = vld [vmem:[#allocation2 + $0x1a8] sm:$0xf]
    %v224 = vld [vmem:[#allocation2 + $0x1ac] sm:$0xf]
    %v225 = vld [vmem:[#allocation2 + $0x1b0] sm:$0xf]
    %v226 = vld [vmem:[#allocation2 + $0x1b4] sm:$0xf]
    %v227 = vld [vmem:[#allocation2 + $0x1b8] sm:$0xf]
    %v228 = vld [vmem:[#allocation2 + $0x1bc] sm:$0xf]
    %v229 = vld [vmem:[#allocation2 + $0x1c0] sm:$0xf]
    %v230 = vld [vmem:[#allocation2 + $0x1c4] sm:$0xf]
    %v231 = vld [vmem:[#allocation2 + $0x1c8] sm:$0xf]
    %v232 = vld [vmem:[#allocation2 + $0x1cc] sm:$0xf]
    %v233 = vld [vmem:[#allocation2 + $0x1d0] sm:$0xf]
    %v234 = vld [vmem:[#allocation2 + $0x1d4] sm:$0xf]
    %v235 = vld [vmem:[#allocation2 + $0x1d8] sm:$0xf]
    %v236 = vld [vmem:[#allocation2 + $0x1dc] sm:$0xf]
    %v237 = vld [vmem:[#allocation2 + $0x1e0] sm:$0xf]
    %v238 = vld [vmem:[#allocation2 + $0x1e4] sm:$0xf]
    %v239 = vld [vmem:[#allocation2 + $0x1e8] sm:$0xf]
    %v240 = vld [vmem:[#allocation2 + $0x1ec] sm:$0xf]
    %v241 = vld [vmem:[#allocation2 + $0x1f0] sm:$0xf]
    %v242 = vld [vmem:[#allocation2 + $0x1f4] sm:$0xf]
    %v243 = vld [vmem:[#allocation2 + $0x1f8] sm:$0xf]
    %v244 = vld [vmem:[#allocation2 + $0x1fc] sm:$0xf]
    %v245 = vld [vmem:[#allocation2 + $0x200] sm:$0xf]
    %v246 = vld [vmem:[#allocation2 + $0x204] sm:$0xf]
    %v247 = vld [vmem:[#allocation2 + $0x208] sm:$0xf]
    %v248 = vld [vmem:[#allocation2 + $0x20c] sm:$0xf]
    %v249 = vld [vmem:[#allocation2 + $0x210] sm:$0xf]
    %v250 = vld [vmem:[#allocation2 + $0x214] sm:$0xf]
    %v251 = vld [vmem:[#allocation2 + $0x218] sm:$0xf]
    %v252 = vld [vmem:[#allocation2 + $0x21c] sm:$0xf]
    %v253 = vld [vmem:[#allocation2 + $0x220] sm:$0xf]
    %v254 = vld [vmem:[#allocation2 + $0x224] sm:$0xf]
    %v255 = vld [vmem:[#allocation2 + $0x228] sm:$0xf]
    %v256 = vld [vmem:[#allocation2 + $0x22c] sm:$0xf]
    %v257 = vld [vmem:[#allocation2 + $0x230] sm:$0xf]
    %v258 = vld [vmem:[#allocation2 + $0x234] sm:$0xf]
    %v259 = vld [vmem:[#allocation2 + $0x238] sm:$0xf]
    %v260 = vld [vmem:[#allocation2 + $0x23c] sm:$0xf]
    %v261 = vld [vmem:[#allocation5] sm:$0xf]
    %v262 = vld [vmem:[#allocation5 + $0x4] sm:$0xf]
    %v263 = vld [vmem:[#allocation5 + $0x8] sm:$0xf]
    %v264 = vld [vmem:[#allocation5 + $0xc] sm:$0xf]
    %v265 = vld [vmem:[#allocation5 + $0x10] sm:$0xf]
    %v266 = vld [vmem:[#allocation5 + $0x14] sm:$0xf]
    %v267 = vld [vmem:[#allocation5 + $0x18] sm:$0xf]
    %v268 = vld [vmem:[#allocation5 + $0x1c] sm:$0xf]
    %v269 = vld [vmem:[#allocation5 + $0x20] sm:$0xf]
    %v270 = vld [vmem:[#allocation5 + $0x24] sm:$0xf]
    %v271 = vld [vmem:[#allocation5 + $0x28] sm:$0xf]
    %v272 = vld [vmem:[#allocation5 + $0x2c] sm:$0xf]
    %v273 = vld [vmem:[#allocation5 + $0x30] sm:$0xf]
    %v274 = vld [vmem:[#allocation5 + $0x34] sm:$0xf]
    %v275 = vld [vmem:[#allocation5 + $0x38] sm:$0xf]
    %v276 = vld [vmem:[#allocation5 + $0x3c] sm:$0xf]
    %v421 = vunpack.c.l.b16 %v117
    %v422 = vunpack.c.l.b16 %v118
    %v423 = vunpack.c.l.b16 %v119
    %v424 = vunpack.c.l.b16 %v120
    %v425 = vunpack.c.l.b16 %v121
    %v426 = vunpack.c.l.b16 %v122
    %v427 = vunpack.c.l.b16 %v123
    %v428 = vunpack.c.l.b16 %v124
    %v429 = vunpack.c.l.b16 %v125
    %v430 = vunpack.c.l.b16 %v126
    %v431 = vunpack.c.l.b16 %v127
    %v432 = vunpack.c.l.b16 %v128
    %v433 = vunpack.c.l.b16 %v129
    %v434 = vunpack.c.l.b16 %v130
    %v435 = vunpack.c.l.b16 %v131
    %v436 = vunpack.c.l.b16 %v132
    %v437 = vunpack.c.l.b16 %v133
    %v438 = vunpack.c.l.b16 %v134
    %v439 = vunpack.c.l.b16 %v135
    %v440 = vunpack.c.l.b16 %v136
    %v441 = vunpack.c.l.b16 %v137
    %v442 = vunpack.c.l.b16 %v138
    %v443 = vunpack.c.l.b16 %v139
    %v444 = vunpack.c.l.b16 %v140
    %v445 = vunpack.c.l.b16 %v141
    %v446 = vunpack.c.l.b16 %v142
    %v447 = vunpack.c.l.b16 %v143
    %v448 = vunpack.c.l.b16 %v144
    %v449 = vunpack.c.l.b16 %v145
    %v450 = vunpack.c.l.b16 %v146
    %v451 = vunpack.c.l.b16 %v147
    %v452 = vunpack.c.l.b16 %v148
    %v453 = vunpack.c.l.b16 %v149
    %v454 = vunpack.c.l.b16 %v150
    %v455 = vunpack.c.l.b16 %v151
    %v456 = vunpack.c.l.b16 %v152
    %v457 = vunpack.c.l.b16 %v153
    %v458 = vunpack.c.l.b16 %v154
    %v459 = vunpack.c.l.b16 %v155
    %v460 = vunpack.c.l.b16 %v156
    %v461 = vunpack.c.l.b16 %v157
    %v462 = vunpack.c.l.b16 %v158
    %v463 = vunpack.c.l.b16 %v159
    %v464 = vunpack.c.l.b16 %v160
    %v465 = vunpack.c.l.b16 %v161
    %v466 = vunpack.c.l.b16 %v162
    %v467 = vunpack.c.l.b16 %v163
    %v468 = vunpack.c.l.b16 %v164
    %v469 = vunpack.c.l.b16 %v165
    %v470 = vunpack.c.l.b16 %v166
    %v471 = vunpack.c.l.b16 %v167
    %v472 = vunpack.c.l.b16 %v168
    %v473 = vunpack.c.l.b16 %v169
    %v474 = vunpack.c.l.b16 %v170
    %v475 = vunpack.c.l.b16 %v171
    %v476 = vunpack.c.l.b16 %v172
    %v477 = vunpack.c.l.b16 %v173
    %v478 = vunpack.c.l.b16 %v174
    %v479 = vunpack.c.l.b16 %v175
    %v480 = vunpack.c.l.b16 %v176
    %v481 = vunpack.c.l.b16 %v177
    %v482 = vunpack.c.l.b16 %v178
    %v483 = vunpack.c.l.b16 %v179
    %v484 = vunpack.c.l.b16 %v180
    %v485 = vunpack.c.l.b16 %v181
    %v486 = vunpack.c.l.b16 %v182
    %v487 = vunpack.c.l.b16 %v183
    %v488 = vunpack.c.l.b16 %v184
    %v489 = vunpack.c.l.b16 %v185
    %v490 = vunpack.c.l.b16 %v186
    %v491 = vunpack.c.l.b16 %v187
    %v492 = vunpack.c.l.b16 %v188
    %v493 = vunpack.c.l.b16 %v189
    %v494 = vunpack.c.l.b16 %v190
    %v495 = vunpack.c.l.b16 %v191
    %v496 = vunpack.c.l.b16 %v192
    %v497 = vunpack.c.l.b16 %v193
    %v498 = vunpack.c.l.b16 %v194
    %v499 = vunpack.c.l.b16 %v195
    %v500 = vunpack.c.l.b16 %v196
    %v501 = vunpack.c.l.b16 %v197
    %v502 = vunpack.c.l.b16 %v198
    %v503 = vunpack.c.l.b16 %v199
    %v504 = vunpack.c.l.b16 %v200
    %v505 = vunpack.c.l.b16 %v201
    %v506 = vunpack.c.l.b16 %v202
    %v507 = vunpack.c.l.b16 %v203
    %v508 = vunpack.c.l.b16 %v204
    %v509 = vunpack.c.l.b16 %v205
    %v510 = vunpack.c.l.b16 %v206
    %v511 = vunpack.c.l.b16 %v207
    %v512 = vunpack.c.l.b16 %v208
    %v513 = vunpack.c.l.b16 %v209
    %v514 = vunpack.c.l.b16 %v210
    %v515 = vunpack.c.l.b16 %v211
    %v516 = vunpack.c.l.b16 %v212
    %v517 = vunpack.c.l.b16 %v213
    %v518 = vunpack.c.l.b16 %v214
    %v519 = vunpack.c.l.b16 %v215
    %v520 = vunpack.c.l.b16 %v216
    %v521 = vunpack.c.l.b16 %v217
    %v522 = vunpack.c.l.b16 %v218
    %v523 = vunpack.c.l.b16 %v219
    %v524 = vunpack.c.l.b16 %v220
    %v525 = vunpack.c.l.b16 %v221
    %v526 = vunpack.c.l.b16 %v222
    %v527 = vunpack.c.l.b16 %v223
    %v528 = vunpack.c.l.b16 %v224
    %v529 = vunpack.c.l.b16 %v225
    %v530 = vunpack.c.l.b16 %v226
    %v531 = vunpack.c.l.b16 %v227
    %v532 = vunpack.c.l.b16 %v228
    %v533 = vunpack.c.l.b16 %v229
    %v534 = vunpack.c.l.b16 %v230
    %v535 = vunpack.c.l.b16 %v231
    %v536 = vunpack.c.l.b16 %v232
    %v537 = vunpack.c.l.b16 %v233
    %v538 = vunpack.c.l.b16 %v234
    %v539 = vunpack.c.l.b16 %v235
    %v540 = vunpack.c.l.b16 %v236
    %v541 = vunpack.c.l.b16 %v237
    %v542 = vunpack.c.l.b16 %v238
    %v543 = vunpack.c.l.b16 %v239
    %v544 = vunpack.c.l.b16 %v240
    %v545 = vunpack.c.l.b16 %v241
    %v546 = vunpack.c.l.b16 %v242
    %v547 = vunpack.c.l.b16 %v243
    %v548 = vunpack.c.l.b16 %v244
    %v549 = vunpack.c.l.b16 %v245
    %v550 = vunpack.c.l.b16 %v246
    %v551 = vunpack.c.l.b16 %v247
    %v552 = vunpack.c.l.b16 %v248
    %v553 = vunpack.c.l.b16 %v249
    %v554 = vunpack.c.l.b16 %v250
    %v555 = vunpack.c.l.b16 %v251
    %v556 = vunpack.c.l.b16 %v252
    %v557 = vunpack.c.l.b16 %v253
    %v558 = vunpack.c.l.b16 %v254
    %v559 = vunpack.c.l.b16 %v255
    %v560 = vunpack.c.l.b16 %v256
    %v561 = vunpack.c.l.b16 %v257
    %v562 = vunpack.c.l.b16 %v258
    %v563 = vunpack.c.l.b16 %v259
    %v564 = vunpack.c.l.b16 %v260
    %v565 = vpack.c.b16 %v422, %v421
    %v566 = vpack.c.b16 %v424, %v423
    %v567 = vpack.c.b16 %v426, %v425
    %v568 = vpack.c.b16 %v428, %v427
    %v569 = vpack.c.b16 %v430, %v429
    %v570 = vpack.c.b16 %v432, %v431
    %v571 = vpack.c.b16 %v434, %v433
    %v572 = vpack.c.b16 %v436, %v435
    %v573 = vpack.c.b16 %v438, %v437
    %v574 = vpack.c.b16 %v440, %v439
    %v575 = vpack.c.b16 %v442, %v441
    %v576 = vpack.c.b16 %v444, %v443
    %v577 = vpack.c.b16 %v446, %v445
    %v578 = vpack.c.b16 %v448, %v447
    %v579 = vpack.c.b16 %v450, %v449
    %v580 = vpack.c.b16 %v452, %v451
    %v581 = vpack.c.b16 %v454, %v453
    %v582 = vpack.c.b16 %v456, %v455
    %v583 = vpack.c.b16 %v458, %v457
    %v584 = vpack.c.b16 %v460, %v459
    %v585 = vpack.c.b16 %v462, %v461
    %v586 = vpack.c.b16 %v464, %v463
    %v587 = vpack.c.b16 %v466, %v465
    %v588 = vpack.c.b16 %v468, %v467
    %v589 = vpack.c.b16 %v470, %v469
    %v590 = vpack.c.b16 %v472, %v471
    %v591 = vpack.c.b16 %v474, %v473
    %v592 = vpack.c.b16 %v476, %v475
    %v593 = vpack.c.b16 %v478, %v477
    %v594 = vpack.c.b16 %v480, %v479
    %v595 = vpack.c.b16 %v482, %v481
    %v596 = vpack.c.b16 %v484, %v483
    %v597 = vpack.c.b16 %v486, %v485
    %v598 = vpack.c.b16 %v488, %v487
    %v599 = vpack.c.b16 %v490, %v489
    %v600 = vpack.c.b16 %v492, %v491
    %v601 = vpack.c.b16 %v494, %v493
    %v602 = vpack.c.b16 %v496, %v495
    %v603 = vpack.c.b16 %v498, %v497
    %v604 = vpack.c.b16 %v500, %v499
    %v605 = vpack.c.b16 %v502, %v501
    %v606 = vpack.c.b16 %v504, %v503
    %v607 = vpack.c.b16 %v506, %v505
    %v608 = vpack.c.b16 %v508, %v507
    %v609 = vpack.c.b16 %v510, %v509
    %v610 = vpack.c.b16 %v512, %v511
    %v611 = vpack.c.b16 %v514, %v513
    %v612 = vpack.c.b16 %v516, %v515
    %v613 = vpack.c.b16 %v518, %v517
    %v614 = vpack.c.b16 %v520, %v519
    %v615 = vpack.c.b16 %v522, %v521
    %v616 = vpack.c.b16 %v524, %v523
    %v617 = vpack.c.b16 %v526, %v525
    %v618 = vpack.c.b16 %v528, %v527
    %v619 = vpack.c.b16 %v530, %v529
    %v620 = vpack.c.b16 %v532, %v531
    %v621 = vpack.c.b16 %v534, %v533
    %v622 = vpack.c.b16 %v536, %v535
    %v623 = vpack.c.b16 %v538, %v537
    %v624 = vpack.c.b16 %v540, %v539
    %v625 = vpack.c.b16 %v542, %v541
    %v626 = vpack.c.b16 %v544, %v543
    %v627 = vpack.c.b16 %v546, %v545
    %v628 = vpack.c.b16 %v548, %v547
    %v629 = vpack.c.b16 %v550, %v549
    %v630 = vpack.c.b16 %v552, %v551
    %v631 = vpack.c.b16 %v554, %v553
    %v632 = vpack.c.b16 %v556, %v555
    %v633 = vpack.c.b16 %v558, %v557
    %v634 = vpack.c.b16 %v560, %v559
    %v635 = vpack.c.b16 %v562, %v561
    %v636 = vpack.c.b16 %v564, %v563
    %v725 = vunpack.c.l.b16 %v261
    %v726 = vunpack.c.l.b16 %v262
    %v727 = vunpack.c.l.b16 %v263
    %v728 = vunpack.c.l.b16 %v264
    %v729 = vunpack.c.l.b16 %v265
    %v730 = vunpack.c.l.b16 %v266
    %v731 = vunpack.c.l.b16 %v267
    %v732 = vunpack.c.l.b16 %v268
    %v733 = vunpack.c.l.b16 %v269
    %v734 = vunpack.c.l.b16 %v270
    %v735 = vunpack.c.l.b16 %v271
    %v736 = vunpack.c.l.b16 %v272
    %v737 = vunpack.c.l.b16 %v273
    %v738 = vunpack.c.l.b16 %v274
    %v739 = vunpack.c.l.b16 %v275
    %v740 = vunpack.c.l.b16 %v276
    %v741 = vpack.c.b16 %v726, %v725
    %v742 = vpack.c.b16 %v728, %v727
    %v743 = vpack.c.b16 %v730, %v729
    %v744 = vpack.c.b16 %v732, %v731
    %v745 = vpack.c.b16 %v734, %v733
    %v746 = vpack.c.b16 %v736, %v735
    %v747 = vpack.c.b16 %v738, %v737
    %v748 = vpack.c.b16 %v740, %v739
    %757 = vmatprep.subr.bf16.mxu0 0
    %758 = vmatpush1.bf16.msra.mxu0 %v741
    %759 = vmatprep.subr.bf16.mxu0 0
    %760 = vmatpush1.bf16.msra.mxu0 %v742
    %761 = vmatprep.subr.bf16.mxu0 0
    %762 = vmatpush1.bf16.msra.mxu0 %v743
    %763 = vmatprep.subr.bf16.mxu0 0
    %764 = vmatpush1.bf16.msra.mxu0 %v744
    %765 = vmatprep.subr.bf16.mxu0 0
    %766 = vmatpush1.bf16.msra.mxu0 %v745
    %767 = vmatprep.subr.bf16.mxu0 0
    %768 = vmatpush1.bf16.msra.mxu0 %v746
    %769 = vmatprep.subr.bf16.mxu0 0
    %770 = vmatpush1.bf16.msra.mxu0 %v747
    %771 = vmatprep.subr.bf16.mxu0 0
    %772 = vmatpush1.bf16.msra.mxu0 %v748
    %773 = vmatprep.subr.bf16.mxu0 0
    %774 = vmatpush1.bf16.msra.mxu0 0
    %775 = vmatprep.subr.bf16.mxu0 0
    %776 = vmatpush1.bf16.msra.mxu0 0
    %777 = vmatprep.subr.bf16.mxu0 0
    %778 = vmatpush1.bf16.msra.mxu0 0
    %779 = vmatprep.subr.bf16.mxu0 0
    %780 = vmatpush1.bf16.msra.mxu0 0
    %781 = vmatprep.subr.bf16.mxu0 0
    %782 = vmatpush1.bf16.msra.mxu0 0
    %783 = vmatprep.subr.bf16.mxu0 0
    %784 = vmatpush1.bf16.msra.mxu0 0
    %785 = vmatprep.subr.bf16.mxu0 0
    %786 = vmatpush1.bf16.msra.mxu0 0
    %787 = vmatprep.subr.bf16.mxu0 0
    %788 = vmatpush1.bf16.msra.mxu0 0
    %789 = vmatprep.mubr.bf16.mxu0 0
    %790 = vmatmul.mubr.bf16.gmra.mrb[0].mxu0 %v565
    %v791 = vpop.f32.mrb[0].mxu0
    %v792 = vadd.f32 0.0, %v791
    %v793 = vpop.f32.mrb[0].mxu0
    %v794 = vpop.f32.mrb[0].mxu0
    %v795 = vadd.f32 0.0, %v794
    %v796 = vpop.f32.mrb[0].mxu0
    %797 = vmatprep.mubr.bf16.mxu0 0
    %798 = vmatmul.mubr.bf16.gmra.mrb[0].mxu0 %v566
    %v799 = vpop.f32.mrb[0].mxu0
    %v800 = vadd.f32 0.0, %v799
    %v801 = vpop.f32.mrb[0].mxu0
    %v802 = vpop.f32.mrb[0].mxu0
    %v803 = vadd.f32 0.0, %v802
    %v804 = vpop.f32.mrb[0].mxu0
    %805 = vmatprep.mubr.bf16.mxu0 0
    %806 = vmatmul.mubr.bf16.gmra.mrb[0].mxu0 %v567
    %v807 = vpop.f32.mrb[0].mxu0
    %v808 = vadd.f32 0.0, %v807
    %v809 = vpop.f32.mrb[0].mxu0
    %v810 = vpop.f32.mrb[0].mxu0
    %v811 = vadd.f32 0.0, %v810
    %v812 = vpop.f32.mrb[0].mxu0
    %813 = vmatprep.mubr.bf16.mxu0 0
    %814 = vmatmul.mubr.bf16.gmra.mrb[0].mxu0 %v568
    %v815 = vpop.f32.mrb[0].mxu0
    %v816 = vadd.f32 0.0, %v815
    %v817 = vpop.f32.mrb[0].mxu0
    %v818 = vpop.f32.mrb[0].mxu0
    %v819 = vadd.f32 0.0, %v818
    %v820 = vpop.f32.mrb[0].mxu0
    %821 = vmatprep.mubr.bf16.mxu0 0
    %822 = vmatmul.mubr.bf16.gmra.mrb[0].mxu0 %v569
    %v823 = vpop.f32.mrb[0].mxu0
    %v824 = vadd.f32 0.0, %v823
    %v825 = vpop.f32.mrb[0].mxu0
    %v826 = vpop.f32.mrb[0].mxu0
    %v827 = vadd.f32 0.0, %v826
    %v828 = vpop.f32.mrb[0].mxu0
    %829 = vmatprep.mubr.bf16.mxu0 0
    %830 = vmatmul.mubr.bf16.gmra.mrb[0].mxu0 %v570
    %v831 = vpop.f32.mrb[0].mxu0
    %v832 = vadd.f32 0.0, %v831
    %v833 = vpop.f32.mrb[0].mxu0
    %v834 = vpop.f32.mrb[0].mxu0
    %v835 = vadd.f32 0.0, %v834
    %v836 = vpop.f32.mrb[0].mxu0
    %837 = vmatprep.mubr.bf16.mxu0 0
    %838 = vmatmul.mubr.bf16.gmra.mrb[0].mxu0 %v571
    %v839 = vpop.f32.mrb[0].mxu0
    %v840 = vadd.f32 0.0, %v839
    %v841 = vpop.f32.mrb[0].mxu0
    %v842 = vpop.f32.mrb[0].mxu0
    %v843 = vadd.f32 0.0, %v842
    %v844 = vpop.f32.mrb[0].mxu0
    %845 = vmatprep.mubr.bf16.mxu0 0
    %846 = vmatmul.mubr.bf16.gmra.mrb[0].mxu0 %v572
    %v847 = vpop.f32.mrb[0].mxu0
    %v848 = vadd.f32 0.0, %v847
    %v849 = vpop.f32.mrb[0].mxu0
    %v850 = vpop.f32.mrb[0].mxu0
    %v851 = vadd.f32 0.0, %v850
    %v852 = vpop.f32.mrb[0].mxu0
    %853 = vmatprep.mubr.bf16.mxu0 0
    %854 = vmatmul.mubr.bf16.gmra.mrb[0].mxu0 %v573
    %v855 = vpop.f32.mrb[0].mxu0
    %v856 = vadd.f32 0.0, %v855
    %v857 = vpop.f32.mrb[0].mxu0
    %v858 = vpop.f32.mrb[0].mxu0
    %v859 = vadd.f32 0.0, %v858
    %v860 = vpop.f32.mrb[0].mxu0
    %861 = vmatprep.mubr.bf16.mxu0 0
    %862 = vmatmul.mubr.bf16.gmra.mrb[0].mxu0 %v574
    %v863 = vpop.f32.mrb[0].mxu0
    %v864 = vadd.f32 0.0, %v863
    %v865 = vpop.f32.mrb[0].mxu0
    %v866 = vpop.f32.mrb[0].mxu0
    %v867 = vadd.f32 0.0, %v866
    %v868 = vpop.f32.mrb[0].mxu0
    %869 = vmatprep.mubr.bf16.mxu0 0
    %870 = vmatmul.mubr.bf16.gmra.mrb[0].mxu0 %v575
    %v871 = vpop.f32.mrb[0].mxu0
    %v872 = vadd.f32 0.0, %v871
    %v873 = vpop.f32.mrb[0].mxu0
    %v874 = vpop.f32.mrb[0].mxu0
    %v875 = vadd.f32 0.0, %v874
    %v876 = vpop.f32.mrb[0].mxu0
    %877 = vmatprep.mubr.bf16.mxu0 0
    %878 = vmatmul.mubr.bf16.gmra.mrb[0].mxu0 %v576
    %v879 = vpop.f32.mrb[0].mxu0
    %v880 = vadd.f32 0.0, %v879
    %v881 = vpop.f32.mrb[0].mxu0
    %v882 = vpop.f32.mrb[0].mxu0
    %v883 = vadd.f32 0.0, %v882
    %v884 = vpop.f32.mrb[0].mxu0
    %885 = vmatprep.mubr.bf16.mxu0 0
    %886 = vmatmul.mubr.bf16.gmra.mrb[0].mxu0 %v577
    %v887 = vpop.f32.mrb[0].mxu0
    %v888 = vadd.f32 0.0, %v887
    %v889 = vpop.f32.mrb[0].mxu0
    %v890 = vpop.f32.mrb[0].mxu0
    %v891 = vadd.f32 0.0, %v890
    %v892 = vpop.f32.mrb[0].mxu0
    %893 = vmatprep.mubr.bf16.mxu0 0
    %894 = vmatmul.mubr.bf16.gmra.mrb[0].mxu0 %v578
    %v895 = vpop.f32.mrb[0].mxu0
    %v896 = vadd.f32 0.0, %v895
    %v897 = vpop.f32.mrb[0].mxu0
    %v898 = vpop.f32.mrb[0].mxu0
    %v899 = vadd.f32 0.0, %v898
    %v900 = vpop.f32.mrb[0].mxu0
    %901 = vmatprep.mubr.bf16.mxu0 0
    %902 = vmatmul.mubr.bf16.gmra.mrb[0].mxu0 %v579
    %v903 = vpop.f32.mrb[0].mxu0
    %v904 = vadd.f32 0.0, %v903
    %v905 = vpop.f32.mrb[0].mxu0
    %v906 = vpop.f32.mrb[0].mxu0
    %v907 = vadd.f32 0.0, %v906
    %v908 = vpop.f32.mrb[0].mxu0
    %909 = vmatprep.mubr.bf16.mxu0 0
    %910 = vmatmul.mubr.bf16.gmra.mrb[0].mxu0 %v580
    %v911 = vpop.f32.mrb[0].mxu0
    %v912 = vadd.f32 0.0, %v911
    %v913 = vpop.f32.mrb[0].mxu0
    %v914 = vpop.f32.mrb[0].mxu0
    %v915 = vadd.f32 0.0, %v914
    %v916 = vpop.f32.mrb[0].mxu0
    %917 = vmatprep.mubr.bf16.mxu0 0
    %918 = vmatmul.mubr.bf16.gmra.mrb[0].mxu0 %v581
    %v919 = vpop.f32.mrb[0].mxu0
    %v920 = vadd.f32 0.0, %v919
    %v921 = vpop.f32.mrb[0].mxu0
    %v922 = vpop.f32.mrb[0].mxu0
    %v923 = vadd.f32 0.0, %v922
    %v924 = vpop.f32.mrb[0].mxu0
    %925 = vmatprep.mubr.bf16.mxu0 0
    %926 = vmatmul.mubr.bf16.gmra.mrb[0].mxu0 %v582
    %v927 = vpop.f32.mrb[0].mxu0
    %v928 = vadd.f32 0.0, %v927
    %v929 = vpop.f32.mrb[0].mxu0
    %v930 = vpop.f32.mrb[0].mxu0
    %v931 = vadd.f32 0.0, %v930
    %v932 = vpop.f32.mrb[0].mxu0
    %933 = vmatprep.mubr.bf16.mxu0 0
    %934 = vmatmul.mubr.bf16.gmra.mrb[0].mxu0 %v583
    %v935 = vpop.f32.mrb[0].mxu0
    %v936 = vadd.f32 0.0, %v935
    %v937 = vpop.f32.mrb[0].mxu0
    %v938 = vpop.f32.mrb[0].mxu0
    %v939 = vadd.f32 0.0, %v938
    %v940 = vpop.f32.mrb[0].mxu0
    %941 = vmatprep.mubr.bf16.mxu0 0
    %942 = vmatmul.mubr.bf16.gmra.mrb[0].mxu0 %v584
    %v943 = vpop.f32.mrb[0].mxu0
    %v944 = vadd.f32 0.0, %v943
    %v945 = vpop.f32.mrb[0].mxu0
    %v946 = vpop.f32.mrb[0].mxu0
    %v947 = vadd.f32 0.0, %v946
    %v948 = vpop.f32.mrb[0].mxu0
    %949 = vmatprep.mubr.bf16.mxu0 0
    %950 = vmatmul.mubr.bf16.gmra.mrb[0].mxu0 %v585
    %v951 = vpop.f32.mrb[0].mxu0
    %v952 = vadd.f32 0.0, %v951
    %v953 = vpop.f32.mrb[0].mxu0
    %v954 = vpop.f32.mrb[0].mxu0
    %v955 = vadd.f32 0.0, %v954
    %v956 = vpop.f32.mrb[0].mxu0
    %957 = vmatprep.mubr.bf16.mxu0 0
    %958 = vmatmul.mubr.bf16.gmra.mrb[0].mxu0 %v586
    %v959 = vpop.f32.mrb[0].mxu0
    %v960 = vadd.f32 0.0, %v959
    %v961 = vpop.f32.mrb[0].mxu0
    %v962 = vpop.f32.mrb[0].mxu0
    %v963 = vadd.f32 0.0, %v962
    %v964 = vpop.f32.mrb[0].mxu0
    %965 = vmatprep.mubr.bf16.mxu0 0
    %966 = vmatmul.mubr.bf16.gmra.mrb[0].mxu0 %v587
    %v967 = vpop.f32.mrb[0].mxu0
    %v968 = vadd.f32 0.0, %v967
    %v969 = vpop.f32.mrb[0].mxu0
    %v970 = vpop.f32.mrb[0].mxu0
    %v971 = vadd.f32 0.0, %v970
    %v972 = vpop.f32.mrb[0].mxu0
    %973 = vmatprep.mubr.bf16.mxu0 0
    %974 = vmatmul.mubr.bf16.gmra.mrb[0].mxu0 %v588
    %v975 = vpop.f32.mrb[0].mxu0
    %v976 = vadd.f32 0.0, %v975
    %v977 = vpop.f32.mrb[0].mxu0
    %v978 = vpop.f32.mrb[0].mxu0
    %v979 = vadd.f32 0.0, %v978
    %v980 = vpop.f32.mrb[0].mxu0
    %981 = vmatprep.mubr.bf16.mxu0 0
    %982 = vmatmul.mubr.bf16.gmra.mrb[0].mxu0 %v589
    %v983 = vpop.f32.mrb[0].mxu0
    %v984 = vadd.f32 0.0, %v983
    %v985 = vpop.f32.mrb[0].mxu0
    %v986 = vpop.f32.mrb[0].mxu0
    %v987 = vadd.f32 0.0, %v986
    %v988 = vpop.f32.mrb[0].mxu0
    %989 = vmatprep.mubr.bf16.mxu0 0
    %990 = vmatmul.mubr.bf16.gmra.mrb[0].mxu0 %v590
    %v991 = vpop.f32.mrb[0].mxu0
    %v992 = vadd.f32 0.0, %v991
    %v993 = vpop.f32.mrb[0].mxu0
    %v994 = vpop.f32.mrb[0].mxu0
    %v995 = vadd.f32 0.0, %v994
    %v996 = vpop.f32.mrb[0].mxu0
    %997 = vmatprep.mubr.bf16.mxu0 0
    %998 = vmatmul.mubr.bf16.gmra.mrb[0].mxu0 %v591
    %v999 = vpop.f32.mrb[0].mxu0
    %v1000 = vadd.f32 0.0, %v999
    %v1001 = vpop.f32.mrb[0].mxu0
    %v1002 = vpop.f32.mrb[0].mxu0
    %v1003 = vadd.f32 0.0, %v1002
    %v1004 = vpop.f32.mrb[0].mxu0
    %1005 = vmatprep.mubr.bf16.mxu0 0
    %1006 = vmatmul.mubr.bf16.gmra.mrb[0].mxu0 %v592
    %v1007 = vpop.f32.mrb[0].mxu0
    %v1008 = vadd.f32 0.0, %v1007
    %v1009 = vpop.f32.mrb[0].mxu0
    %v1010 = vpop.f32.mrb[0].mxu0
    %v1011 = vadd.f32 0.0, %v1010
    %v1012 = vpop.f32.mrb[0].mxu0
    %1013 = vmatprep.mubr.bf16.mxu0 0
    %1014 = vmatmul.mubr.bf16.gmra.mrb[0].mxu0 %v593
    %v1015 = vpop.f32.mrb[0].mxu0
    %v1016 = vadd.f32 0.0, %v1015
    %v1017 = vpop.f32.mrb[0].mxu0
    %v1018 = vpop.f32.mrb[0].mxu0
    %v1019 = vadd.f32 0.0, %v1018
    %v1020 = vpop.f32.mrb[0].mxu0
    %1021 = vmatprep.mubr.bf16.mxu0 0
    %1022 = vmatmul.mubr.bf16.gmra.mrb[0].mxu0 %v594
    %v1023 = vpop.f32.mrb[0].mxu0
    %v1024 = vadd.f32 0.0, %v1023
    %v1025 = vpop.f32.mrb[0].mxu0
    %v1026 = vpop.f32.mrb[0].mxu0
    %v1027 = vadd.f32 0.0, %v1026
    %v1028 = vpop.f32.mrb[0].mxu0
    %1029 = vmatprep.mubr.bf16.mxu0 0
    %1030 = vmatmul.mubr.bf16.gmra.mrb[0].mxu0 %v595
    %v1031 = vpop.f32.mrb[0].mxu0
    %v1032 = vadd.f32 0.0, %v1031
    %v1033 = vpop.f32.mrb[0].mxu0
    %v1034 = vpop.f32.mrb[0].mxu0
    %v1035 = vadd.f32 0.0, %v1034
    %v1036 = vpop.f32.mrb[0].mxu0
    %1037 = vmatprep.mubr.bf16.mxu0 0
    %1038 = vmatmul.mubr.bf16.gmra.mrb[0].mxu0 %v596
    %v1039 = vpop.f32.mrb[0].mxu0
    %v1040 = vadd.f32 0.0, %v1039
    %v1041 = vpop.f32.mrb[0].mxu0
    %v1042 = vpop.f32.mrb[0].mxu0
    %v1043 = vadd.f32 0.0, %v1042
    %v1044 = vpop.f32.mrb[0].mxu0
    %1045 = vmatprep.mubr.bf16.mxu0 0
    %1046 = vmatmul.mubr.bf16.gmra.mrb[0].mxu0 %v597
    %v1047 = vpop.f32.mrb[0].mxu0
    %v1048 = vadd.f32 0.0, %v1047
    %v1049 = vpop.f32.mrb[0].mxu0
    %v1050 = vpop.f32.mrb[0].mxu0
    %v1051 = vadd.f32 0.0, %v1050
    %v1052 = vpop.f32.mrb[0].mxu0
    %1053 = vmatprep.mubr.bf16.mxu0 0
    %1054 = vmatmul.mubr.bf16.gmra.mrb[0].mxu0 %v598
    %v1055 = vpop.f32.mrb[0].mxu0
    %v1056 = vadd.f32 0.0, %v1055
    %v1057 = vpop.f32.mrb[0].mxu0
    %v1058 = vpop.f32.mrb[0].mxu0
    %v1059 = vadd.f32 0.0, %v1058
    %v1060 = vpop.f32.mrb[0].mxu0
    %1061 = vmatprep.mubr.bf16.mxu0 0
    %1062 = vmatmul.mubr.bf16.gmra.mrb[0].mxu0 %v599
    %v1063 = vpop.f32.mrb[0].mxu0
    %v1064 = vadd.f32 0.0, %v1063
    %v1065 = vpop.f32.mrb[0].mxu0
    %v1066 = vpop.f32.mrb[0].mxu0
    %v1067 = vadd.f32 0.0, %v1066
    %v1068 = vpop.f32.mrb[0].mxu0
    %1069 = vmatprep.mubr.bf16.mxu0 0
    %1070 = vmatmul.mubr.bf16.gmra.mrb[0].mxu0 %v600
    %v1071 = vpop.f32.mrb[0].mxu0
    %v1072 = vadd.f32 0.0, %v1071
    %v1073 = vpop.f32.mrb[0].mxu0
    %v1074 = vpop.f32.mrb[0].mxu0
    %v1075 = vadd.f32 0.0, %v1074
    %v1076 = vpop.f32.mrb[0].mxu0
    %1077 = vmatprep.mubr.bf16.mxu0 0
    %1078 = vmatmul.mubr.bf16.gmra.mrb[0].mxu0 %v601
    %v1079 = vpop.f32.mrb[0].mxu0
    %v1080 = vadd.f32 0.0, %v1079
    %v1081 = vpop.f32.mrb[0].mxu0
    %v1082 = vpop.f32.mrb[0].mxu0
    %v1083 = vadd.f32 0.0, %v1082
    %v1084 = vpop.f32.mrb[0].mxu0
    %1085 = vmatprep.mubr.bf16.mxu0 0
    %1086 = vmatmul.mubr.bf16.gmra.mrb[0].mxu0 %v602
    %v1087 = vpop.f32.mrb[0].mxu0
    %v1088 = vadd.f32 0.0, %v1087
    %v1089 = vpop.f32.mrb[0].mxu0
    %v1090 = vpop.f32.mrb[0].mxu0
    %v1091 = vadd.f32 0.0, %v1090
    %v1092 = vpop.f32.mrb[0].mxu0
    %1093 = vmatprep.mubr.bf16.mxu0 0
    %1094 = vmatmul.mubr.bf16.gmra.mrb[0].mxu0 %v603
    %v1095 = vpop.f32.mrb[0].mxu0
    %v1096 = vadd.f32 0.0, %v1095
    %v1097 = vpop.f32.mrb[0].mxu0
    %v1098 = vpop.f32.mrb[0].mxu0
    %v1099 = vadd.f32 0.0, %v1098
    %v1100 = vpop.f32.mrb[0].mxu0
    %1101 = vmatprep.mubr.bf16.mxu0 0
    %1102 = vmatmul.mubr.bf16.gmra.mrb[0].mxu0 %v604
    %v1103 = vpop.f32.mrb[0].mxu0
    %v1104 = vadd.f32 0.0, %v1103
    %v1105 = vpop.f32.mrb[0].mxu0
    %v1106 = vpop.f32.mrb[0].mxu0
    %v1107 = vadd.f32 0.0, %v1106
    %v1108 = vpop.f32.mrb[0].mxu0
    %1109 = vmatprep.mubr.bf16.mxu0 0
    %1110 = vmatmul.mubr.bf16.gmra.mrb[0].mxu0 %v605
    %v1111 = vpop.f32.mrb[0].mxu0
    %v1112 = vadd.f32 0.0, %v1111
    %v1113 = vpop.f32.mrb[0].mxu0
    %v1114 = vpop.f32.mrb[0].mxu0
    %v1115 = vadd.f32 0.0, %v1114
    %v1116 = vpop.f32.mrb[0].mxu0
    %1117 = vmatprep.mubr.bf16.mxu0 0
    %1118 = vmatmul.mubr.bf16.gmra.mrb[0].mxu0 %v606
    %v1119 = vpop.f32.mrb[0].mxu0
    %v1120 = vadd.f32 0.0, %v1119
    %v1121 = vpop.f32.mrb[0].mxu0
    %v1122 = vpop.f32.mrb[0].mxu0
    %v1123 = vadd.f32 0.0, %v1122
    %v1124 = vpop.f32.mrb[0].mxu0
    %1125 = vmatprep.mubr.bf16.mxu0 0
    %1126 = vmatmul.mubr.bf16.gmra.mrb[0].mxu0 %v607
    %v1127 = vpop.f32.mrb[0].mxu0
    %v1128 = vadd.f32 0.0, %v1127
    %v1129 = vpop.f32.mrb[0].mxu0
    %v1130 = vpop.f32.mrb[0].mxu0
    %v1131 = vadd.f32 0.0, %v1130
    %v1132 = vpop.f32.mrb[0].mxu0
    %1133 = vmatprep.mubr.bf16.mxu0 0
    %1134 = vmatmul.mubr.bf16.gmra.mrb[0].mxu0 %v608
    %v1135 = vpop.f32.mrb[0].mxu0
    %v1136 = vadd.f32 0.0, %v1135
    %v1137 = vpop.f32.mrb[0].mxu0
    %v1138 = vpop.f32.mrb[0].mxu0
    %v1139 = vadd.f32 0.0, %v1138
    %v1140 = vpop.f32.mrb[0].mxu0
    %1141 = vmatprep.mubr.bf16.mxu0 0
    %1142 = vmatmul.mubr.bf16.gmra.mrb[0].mxu0 %v609
    %v1143 = vpop.f32.mrb[0].mxu0
    %v1144 = vadd.f32 0.0, %v1143
    %v1145 = vpop.f32.mrb[0].mxu0
    %v1146 = vpop.f32.mrb[0].mxu0
    %v1147 = vadd.f32 0.0, %v1146
    %v1148 = vpop.f32.mrb[0].mxu0
    %1149 = vmatprep.mubr.bf16.mxu0 0
    %1150 = vmatmul.mubr.bf16.gmra.mrb[0].mxu0 %v610
    %v1151 = vpop.f32.mrb[0].mxu0
    %v1152 = vadd.f32 0.0, %v1151
    %v1153 = vpop.f32.mrb[0].mxu0
    %v1154 = vpop.f32.mrb[0].mxu0
    %v1155 = vadd.f32 0.0, %v1154
    %v1156 = vpop.f32.mrb[0].mxu0
    %1157 = vmatprep.mubr.bf16.mxu0 0
    %1158 = vmatmul.mubr.bf16.gmra.mrb[0].mxu0 %v611
    %v1159 = vpop.f32.mrb[0].mxu0
    %v1160 = vadd.f32 0.0, %v1159
    %v1161 = vpop.f32.mrb[0].mxu0
    %v1162 = vpop.f32.mrb[0].mxu0
    %v1163 = vadd.f32 0.0, %v1162
    %v1164 = vpop.f32.mrb[0].mxu0
    %1165 = vmatprep.mubr.bf16.mxu0 0
    %1166 = vmatmul.mubr.bf16.gmra.mrb[0].mxu0 %v612
    %v1167 = vpop.f32.mrb[0].mxu0
    %v1168 = vadd.f32 0.0, %v1167
    %v1169 = vpop.f32.mrb[0].mxu0
    %v1170 = vpop.f32.mrb[0].mxu0
    %v1171 = vadd.f32 0.0, %v1170
    %v1172 = vpop.f32.mrb[0].mxu0
    %1173 = vmatprep.mubr.bf16.mxu0 0
    %1174 = vmatmul.mubr.bf16.gmra.mrb[0].mxu0 %v613
    %v1175 = vpop.f32.mrb[0].mxu0
    %v1176 = vadd.f32 0.0, %v1175
    %v1177 = vpop.f32.mrb[0].mxu0
    %v1178 = vpop.f32.mrb[0].mxu0
    %v1179 = vadd.f32 0.0, %v1178
    %v1180 = vpop.f32.mrb[0].mxu0
    %1181 = vmatprep.mubr.bf16.mxu0 0
    %1182 = vmatmul.mubr.bf16.gmra.mrb[0].mxu0 %v614
    %v1183 = vpop.f32.mrb[0].mxu0
    %v1184 = vadd.f32 0.0, %v1183
    %v1185 = vpop.f32.mrb[0].mxu0
    %v1186 = vpop.f32.mrb[0].mxu0
    %v1187 = vadd.f32 0.0, %v1186
    %v1188 = vpop.f32.mrb[0].mxu0
    %1189 = vmatprep.mubr.bf16.mxu0 0
    %1190 = vmatmul.mubr.bf16.gmra.mrb[0].mxu0 %v615
    %v1191 = vpop.f32.mrb[0].mxu0
    %v1192 = vadd.f32 0.0, %v1191
    %v1193 = vpop.f32.mrb[0].mxu0
    %v1194 = vpop.f32.mrb[0].mxu0
    %v1195 = vadd.f32 0.0, %v1194
    %v1196 = vpop.f32.mrb[0].mxu0
    %1197 = vmatprep.mubr.bf16.mxu0 0
    %1198 = vmatmul.mubr.bf16.gmra.mrb[0].mxu0 %v616
    %v1199 = vpop.f32.mrb[0].mxu0
    %v1200 = vadd.f32 0.0, %v1199
    %v1201 = vpop.f32.mrb[0].mxu0
    %v1202 = vpop.f32.mrb[0].mxu0
    %v1203 = vadd.f32 0.0, %v1202
    %v1204 = vpop.f32.mrb[0].mxu0
    %1205 = vmatprep.mubr.bf16.mxu0 0
    %1206 = vmatmul.mubr.bf16.gmra.mrb[0].mxu0 %v617
    %v1207 = vpop.f32.mrb[0].mxu0
    %v1208 = vadd.f32 0.0, %v1207
    %v1209 = vpop.f32.mrb[0].mxu0
    %v1210 = vpop.f32.mrb[0].mxu0
    %v1211 = vadd.f32 0.0, %v1210
    %v1212 = vpop.f32.mrb[0].mxu0
    %1213 = vmatprep.mubr.bf16.mxu0 0
    %1214 = vmatmul.mubr.bf16.gmra.mrb[0].mxu0 %v618
    %v1215 = vpop.f32.mrb[0].mxu0
    %v1216 = vadd.f32 0.0, %v1215
    %v1217 = vpop.f32.mrb[0].mxu0
    %v1218 = vpop.f32.mrb[0].mxu0
    %v1219 = vadd.f32 0.0, %v1218
    %v1220 = vpop.f32.mrb[0].mxu0
    %1221 = vmatprep.mubr.bf16.mxu0 0
    %1222 = vmatmul.mubr.bf16.gmra.mrb[0].mxu0 %v619
    %v1223 = vpop.f32.mrb[0].mxu0
    %v1224 = vadd.f32 0.0, %v1223
    %v1225 = vpop.f32.mrb[0].mxu0
    %v1226 = vpop.f32.mrb[0].mxu0
    %v1227 = vadd.f32 0.0, %v1226
    %v1228 = vpop.f32.mrb[0].mxu0
    %1229 = vmatprep.mubr.bf16.mxu0 0
    %1230 = vmatmul.mubr.bf16.gmra.mrb[0].mxu0 %v620
    %v1231 = vpop.f32.mrb[0].mxu0
    %v1232 = vadd.f32 0.0, %v1231
    %v1233 = vpop.f32.mrb[0].mxu0
    %v1234 = vpop.f32.mrb[0].mxu0
    %v1235 = vadd.f32 0.0, %v1234
    %v1236 = vpop.f32.mrb[0].mxu0
    %1237 = vmatprep.mubr.bf16.mxu0 0
    %1238 = vmatmul.mubr.bf16.gmra.mrb[0].mxu0 %v621
    %v1239 = vpop.f32.mrb[0].mxu0
    %v1240 = vadd.f32 0.0, %v1239
    %v1241 = vpop.f32.mrb[0].mxu0
    %v1242 = vpop.f32.mrb[0].mxu0
    %v1243 = vadd.f32 0.0, %v1242
    %v1244 = vpop.f32.mrb[0].mxu0
    %1245 = vmatprep.mubr.bf16.mxu0 0
    %1246 = vmatmul.mubr.bf16.gmra.mrb[0].mxu0 %v622
    %v1247 = vpop.f32.mrb[0].mxu0
    %v1248 = vadd.f32 0.0, %v1247
    %v1249 = vpop.f32.mrb[0].mxu0
    %v1250 = vpop.f32.mrb[0].mxu0
    %v1251 = vadd.f32 0.0, %v1250
    %v1252 = vpop.f32.mrb[0].mxu0
    %1253 = vmatprep.mubr.bf16.mxu0 0
    %1254 = vmatmul.mubr.bf16.gmra.mrb[0].mxu0 %v623
    %v1255 = vpop.f32.mrb[0].mxu0
    %v1256 = vadd.f32 0.0, %v1255
    %v1257 = vpop.f32.mrb[0].mxu0
    %v1258 = vpop.f32.mrb[0].mxu0
    %v1259 = vadd.f32 0.0, %v1258
    %v1260 = vpop.f32.mrb[0].mxu0
    %1261 = vmatprep.mubr.bf16.mxu0 0
    %1262 = vmatmul.mubr.bf16.gmra.mrb[0].mxu0 %v624
    %v1263 = vpop.f32.mrb[0].mxu0
    %v1264 = vadd.f32 0.0, %v1263
    %v1265 = vpop.f32.mrb[0].mxu0
    %v1266 = vpop.f32.mrb[0].mxu0
    %v1267 = vadd.f32 0.0, %v1266
    %v1268 = vpop.f32.mrb[0].mxu0
    %1269 = vmatprep.mubr.bf16.mxu0 0
    %1270 = vmatmul.mubr.bf16.gmra.mrb[0].mxu0 %v625
    %v1271 = vpop.f32.mrb[0].mxu0
    %v1272 = vadd.f32 0.0, %v1271
    %v1273 = vpop.f32.mrb[0].mxu0
    %v1274 = vpop.f32.mrb[0].mxu0
    %v1275 = vadd.f32 0.0, %v1274
    %v1276 = vpop.f32.mrb[0].mxu0
    %1277 = vmatprep.mubr.bf16.mxu0 0
    %1278 = vmatmul.mubr.bf16.gmra.mrb[0].mxu0 %v626
    %v1279 = vpop.f32.mrb[0].mxu0
    %v1280 = vadd.f32 0.0, %v1279
    %v1281 = vpop.f32.mrb[0].mxu0
    %v1282 = vpop.f32.mrb[0].mxu0
    %v1283 = vadd.f32 0.0, %v1282
    %v1284 = vpop.f32.mrb[0].mxu0
    %1285 = vmatprep.mubr.bf16.mxu0 0
    %1286 = vmatmul.mubr.bf16.gmra.mrb[0].mxu0 %v627
    %v1287 = vpop.f32.mrb[0].mxu0
    %v1288 = vadd.f32 0.0, %v1287
    %v1289 = vpop.f32.mrb[0].mxu0
    %v1290 = vpop.f32.mrb[0].mxu0
    %v1291 = vadd.f32 0.0, %v1290
    %v1292 = vpop.f32.mrb[0].mxu0
    %1293 = vmatprep.mubr.bf16.mxu0 0
    %1294 = vmatmul.mubr.bf16.gmra.mrb[0].mxu0 %v628
    %v1295 = vpop.f32.mrb[0].mxu0
    %v1296 = vadd.f32 0.0, %v1295
    %v1297 = vpop.f32.mrb[0].mxu0
    %v1298 = vpop.f32.mrb[0].mxu0
    %v1299 = vadd.f32 0.0, %v1298
    %v1300 = vpop.f32.mrb[0].mxu0
    %1301 = vmatprep.mubr.bf16.mxu0 0
    %1302 = vmatmul.mubr.bf16.gmra.mrb[0].mxu0 %v629
    %v1303 = vpop.f32.mrb[0].mxu0
    %v1304 = vadd.f32 0.0, %v1303
    %v1305 = vpop.f32.mrb[0].mxu0
    %v1306 = vpop.f32.mrb[0].mxu0
    %v1307 = vadd.f32 0.0, %v1306
    %v1308 = vpop.f32.mrb[0].mxu0
    %1309 = vmatprep.mubr.bf16.mxu0 0
    %1310 = vmatmul.mubr.bf16.gmra.mrb[0].mxu0 %v630
    %v1311 = vpop.f32.mrb[0].mxu0
    %v1312 = vadd.f32 0.0, %v1311
    %v1313 = vpop.f32.mrb[0].mxu0
    %v1314 = vpop.f32.mrb[0].mxu0
    %v1315 = vadd.f32 0.0, %v1314
    %v1316 = vpop.f32.mrb[0].mxu0
    %1317 = vmatprep.mubr.bf16.mxu0 0
    %1318 = vmatmul.mubr.bf16.gmra.mrb[0].mxu0 %v631
    %v1319 = vpop.f32.mrb[0].mxu0
    %v1320 = vadd.f32 0.0, %v1319
    %v1321 = vpop.f32.mrb[0].mxu0
    %v1322 = vpop.f32.mrb[0].mxu0
    %v1323 = vadd.f32 0.0, %v1322
    %v1324 = vpop.f32.mrb[0].mxu0
    %1325 = vmatprep.mubr.bf16.mxu0 0
    %1326 = vmatmul.mubr.bf16.gmra.mrb[0].mxu0 %v632
    %v1327 = vpop.f32.mrb[0].mxu0
    %v1328 = vadd.f32 0.0, %v1327
    %v1329 = vpop.f32.mrb[0].mxu0
    %v1330 = vpop.f32.mrb[0].mxu0
    %v1331 = vadd.f32 0.0, %v1330
    %v1332 = vpop.f32.mrb[0].mxu0
    %1333 = vmatprep.mubr.bf16.mxu0 0
    %1334 = vmatmul.mubr.bf16.gmra.mrb[0].mxu0 %v633
    %v1335 = vpop.f32.mrb[0].mxu0
    %v1336 = vadd.f32 0.0, %v1335
    %v1337 = vpop.f32.mrb[0].mxu0
    %v1338 = vpop.f32.mrb[0].mxu0
    %v1339 = vadd.f32 0.0, %v1338
    %v1340 = vpop.f32.mrb[0].mxu0
    %1341 = vmatprep.mubr.bf16.mxu0 0
    %1342 = vmatmul.mubr.bf16.gmra.mrb[0].mxu0 %v634
    %v1343 = vpop.f32.mrb[0].mxu0
    %v1344 = vadd.f32 0.0, %v1343
    %v1345 = vpop.f32.mrb[0].mxu0
    %v1346 = vpop.f32.mrb[0].mxu0
    %v1347 = vadd.f32 0.0, %v1346
    %v1348 = vpop.f32.mrb[0].mxu0
    %1349 = vmatprep.mubr.bf16.mxu0 0
    %1350 = vmatmul.mubr.bf16.gmra.mrb[0].mxu0 %v635
    %v1351 = vpop.f32.mrb[0].mxu0
    %v1352 = vadd.f32 0.0, %v1351
    %v1353 = vpop.f32.mrb[0].mxu0
    %v1354 = vpop.f32.mrb[0].mxu0
    %v1355 = vadd.f32 0.0, %v1354
    %v1356 = vpop.f32.mrb[0].mxu0
    %1357 = vmatprep.mubr.bf16.mxu0 0
    %1358 = vmatmul.mubr.bf16.gmra.mrb[0].mxu0 %v636
    %v1359 = vpop.f32.mrb[0].mxu0
    %v1360 = vadd.f32 0.0, %v1359
    %v1361 = vpop.f32.mrb[0].mxu0
    %v1362 = vpop.f32.mrb[0].mxu0
    %v1363 = vadd.f32 0.0, %v1362
    %v1364 = vpop.f32.mrb[0].mxu0
    %1365 = vdwg.mxu0
    %v1366 = vmax.f32 %v792, %v936
    %v1367 = vmax.f32 %v1366, %v1080
    %v1368 = vmax.f32 %v1367, %v1224
    %v1369 = vmax.f32 %v795, %v939
    %v1370 = vmax.f32 %v1369, %v1083
    %v1371 = vmax.f32 %v1370, %v1227
    %v1372 = vmax.f32 %v800, %v944
    %v1373 = vmax.f32 %v1372, %v1088
    %v1374 = vmax.f32 %v1373, %v1232
    %v1375 = vmax.f32 %v803, %v947
    %v1376 = vmax.f32 %v1375, %v1091
    %v1377 = vmax.f32 %v1376, %v1235
    %v1378 = vmax.f32 %v808, %v952
    %v1379 = vmax.f32 %v1378, %v1096
    %v1380 = vmax.f32 %v1379, %v1240
    %v1381 = vmax.f32 %v811, %v955
    %v1382 = vmax.f32 %v1381, %v1099
    %v1383 = vmax.f32 %v1382, %v1243
    %v1384 = vmax.f32 %v816, %v960
    %v1385 = vmax.f32 %v1384, %v1104
    %v1386 = vmax.f32 %v1385, %v1248
    %v1387 = vmax.f32 %v819, %v963
    %v1388 = vmax.f32 %v1387, %v1107
    %v1389 = vmax.f32 %v1388, %v1251
    %v1390 = vmax.f32 %v824, %v968
    %v1391 = vmax.f32 %v1390, %v1112
    %v1392 = vmax.f32 %v1391, %v1256
    %v1393 = vmax.f32 %v827, %v971
    %v1394 = vmax.f32 %v1393, %v1115
    %v1395 = vmax.f32 %v1394, %v1259
    %v1396 = vmax.f32 %v832, %v976
    %v1397 = vmax.f32 %v1396, %v1120
    %v1398 = vmax.f32 %v1397, %v1264
    %v1399 = vmax.f32 %v835, %v979
    %v1400 = vmax.f32 %v1399, %v1123
    %v1401 = vmax.f32 %v1400, %v1267
    %v1402 = vmax.f32 %v840, %v984
    %v1403 = vmax.f32 %v1402, %v1128
    %v1404 = vmax.f32 %v1403, %v1272
    %v1405 = vmax.f32 %v843, %v987
    %v1406 = vmax.f32 %v1405, %v1131
    %v1407 = vmax.f32 %v1406, %v1275
    %v1408 = vmax.f32 %v848, %v992
    %v1409 = vmax.f32 %v1408, %v1136
    %v1410 = vmax.f32 %v1409, %v1280
    %v1411 = vmax.f32 %v851, %v995
    %v1412 = vmax.f32 %v1411, %v1139
    %v1413 = vmax.f32 %v1412, %v1283
    %v1414 = vmax.f32 %v856, %v1000
    %v1415 = vmax.f32 %v1414, %v1144
    %v1416 = vmax.f32 %v1415, %v1288
    %v1417 = vmax.f32 %v859, %v1003
    %v1418 = vmax.f32 %v1417, %v1147
    %v1419 = vmax.f32 %v1418, %v1291
    %v1420 = vmax.f32 %v864, %v1008
    %v1421 = vmax.f32 %v1420, %v1152
    %v1422 = vmax.f32 %v1421, %v1296
    %v1423 = vmax.f32 %v867, %v1011
    %v1424 = vmax.f32 %v1423, %v1155
    %v1425 = vmax.f32 %v1424, %v1299
    %v1426 = vmax.f32 %v872, %v1016
    %v1427 = vmax.f32 %v1426, %v1160
    %v1428 = vmax.f32 %v1427, %v1304
    %v1429 = vmax.f32 %v875, %v1019
    %v1430 = vmax.f32 %v1429, %v1163
    %v1431 = vmax.f32 %v1430, %v1307
    %v1432 = vmax.f32 %v880, %v1024
    %v1433 = vmax.f32 %v1432, %v1168
    %v1434 = vmax.f32 %v1433, %v1312
    %v1435 = vmax.f32 %v883, %v1027
    %v1436 = vmax.f32 %v1435, %v1171
    %v1437 = vmax.f32 %v1436, %v1315
    %v1438 = vmax.f32 %v888, %v1032
    %v1439 = vmax.f32 %v1438, %v1176
    %v1440 = vmax.f32 %v1439, %v1320
    %v1441 = vmax.f32 %v891, %v1035
    %v1442 = vmax.f32 %v1441, %v1179
    %v1443 = vmax.f32 %v1442, %v1323
    %v1444 = vmax.f32 %v896, %v1040
    %v1445 = vmax.f32 %v1444, %v1184
    %v1446 = vmax.f32 %v1445, %v1328
    %v1447 = vmax.f32 %v899, %v1043
    %v1448 = vmax.f32 %v1447, %v1187
    %v1449 = vmax.f32 %v1448, %v1331
    %v1450 = vmax.f32 %v904, %v1048
    %v1451 = vmax.f32 %v1450, %v1192
    %v1452 = vmax.f32 %v1451, %v1336
    %v1453 = vmax.f32 %v907, %v1051
    %v1454 = vmax.f32 %v1453, %v1195
    %v1455 = vmax.f32 %v1454, %v1339
    %v1456 = vmax.f32 %v912, %v1056
    %v1457 = vmax.f32 %v1456, %v1200
    %v1458 = vmax.f32 %v1457, %v1344
    %v1459 = vmax.f32 %v915, %v1059
    %v1460 = vmax.f32 %v1459, %v1203
    %v1461 = vmax.f32 %v1460, %v1347
    %v1462 = vmax.f32 %v920, %v1064
    %v1463 = vmax.f32 %v1462, %v1208
    %v1464 = vmax.f32 %v1463, %v1352
    %v1465 = vmax.f32 %v923, %v1067
    %v1466 = vmax.f32 %v1465, %v1211
    %v1467 = vmax.f32 %v1466, %v1355
    %v1468 = vmax.f32 %v928, %v1072
    %v1469 = vmax.f32 %v1468, %v1216
    %v1470 = vmax.f32 %v1469, %v1360
    %v1471 = vmax.f32 %v931, %v1075
    %v1472 = vmax.f32 %v1471, %v1219
    %v1473 = vmax.f32 %v1472, %v1363
    %v1474 = vld [vmem:[#allocation7] sm:$0x1]
    %v1476 = vlaneseq
    %v1477 = vshrl.u32 %v1476, 7
    %v1478 = vsub.s32 0, %v1477
    %v1479 = vrot.slane %v1474, %v1478
    %v1481 = vadd.f32 %v1368, %v1479
    %v1482 = vadd.f32 %v1371, %v1479
    %v1483 = vadd.f32 %v1374, %v1479
    %v1484 = vadd.f32 %v1377, %v1479
    %v1485 = vadd.f32 %v1380, %v1479
    %v1486 = vadd.f32 %v1383, %v1479
    %v1487 = vadd.f32 %v1386, %v1479
    %v1488 = vadd.f32 %v1389, %v1479
    %v1489 = vadd.f32 %v1392, %v1479
    %v1490 = vadd.f32 %v1395, %v1479
    %v1491 = vadd.f32 %v1398, %v1479
    %v1492 = vadd.f32 %v1401, %v1479
    %v1493 = vadd.f32 %v1404, %v1479
    %v1494 = vadd.f32 %v1407, %v1479
    %v1495 = vadd.f32 %v1410, %v1479
    %v1496 = vadd.f32 %v1413, %v1479
    %v1497 = vadd.f32 %v1416, %v1479
    %v1498 = vadd.f32 %v1419, %v1479
    %v1499 = vadd.f32 %v1422, %v1479
    %v1500 = vadd.f32 %v1425, %v1479
    %v1501 = vadd.f32 %v1428, %v1479
    %v1502 = vadd.f32 %v1431, %v1479
    %v1503 = vadd.f32 %v1434, %v1479
    %v1504 = vadd.f32 %v1437, %v1479
    %v1505 = vadd.f32 %v1440, %v1479
    %v1506 = vadd.f32 %v1443, %v1479
    %v1507 = vadd.f32 %v1446, %v1479
    %v1508 = vadd.f32 %v1449, %v1479
    %v1509 = vadd.f32 %v1452, %v1479
    %v1510 = vadd.f32 %v1455, %v1479
    %v1511 = vadd.f32 %v1458, %v1479
    %v1512 = vadd.f32 %v1461, %v1479
    %v1513 = vadd.f32 %v1464, %v1479
    %v1514 = vadd.f32 %v1467, %v1479
    %v1515 = vadd.f32 %v1470, %v1479
    %v1516 = vadd.f32 %v1473, %v1479
    %v1517 = vmax.f32 %v1481, 0.0
    %v1518 = vmax.f32 %v1482, 0.0
    %v1519 = vmax.f32 %v1483, 0.0
    %v1520 = vmax.f32 %v1484, 0.0
    %v1521 = vmax.f32 %v1485, 0.0
    %v1522 = vmax.f32 %v1486, 0.0
    %v1523 = vmax.f32 %v1487, 0.0
    %v1524 = vmax.f32 %v1488, 0.0
    %v1525 = vmax.f32 %v1489, 0.0
    %v1526 = vmax.f32 %v1490, 0.0
    %v1527 = vmax.f32 %v1491, 0.0
    %v1528 = vmax.f32 %v1492, 0.0
    %v1529 = vmax.f32 %v1493, 0.0
    %v1530 = vmax.f32 %v1494, 0.0
    %v1531 = vmax.f32 %v1495, 0.0
    %v1532 = vmax.f32 %v1496, 0.0
    %v1533 = vmax.f32 %v1497, 0.0
    %v1534 = vmax.f32 %v1498, 0.0
    %v1535 = vmax.f32 %v1499, 0.0
    %v1536 = vmax.f32 %v1500, 0.0
    %v1537 = vmax.f32 %v1501, 0.0
    %v1538 = vmax.f32 %v1502, 0.0
    %v1539 = vmax.f32 %v1503, 0.0
    %v1540 = vmax.f32 %v1504, 0.0
    %v1541 = vmax.f32 %v1505, 0.0
    %v1542 = vmax.f32 %v1506, 0.0
    %v1543 = vmax.f32 %v1507, 0.0
    %v1544 = vmax.f32 %v1508, 0.0
    %v1545 = vmax.f32 %v1509, 0.0
    %v1546 = vmax.f32 %v1510, 0.0
    %v1547 = vmax.f32 %v1511, 0.0
    %v1548 = vmax.f32 %v1512, 0.0
    %v1549 = vmax.f32 %v1513, 0.0
    %v1550 = vmax.f32 %v1514, 0.0
    %v1551 = vmax.f32 %v1515, 0.0
    %v1552 = vmax.f32 %v1516, 0.0
    %v1553 = vpack.c.bf16 %v1518, %v1517
    %v1554 = vpack.c.bf16 %v1520, %v1519
    %v1555 = vpack.c.bf16 %v1522, %v1521
    %v1556 = vpack.c.bf16 %v1524, %v1523
    %v1557 = vpack.c.bf16 %v1526, %v1525
    %v1558 = vpack.c.bf16 %v1528, %v1527
    %v1559 = vpack.c.bf16 %v1530, %v1529
    %v1560 = vpack.c.bf16 %v1532, %v1531
    %v1561 = vpack.c.bf16 %v1534, %v1533
    %v1562 = vpack.c.bf16 %v1536, %v1535
    %v1563 = vpack.c.bf16 %v1538, %v1537
    %v1564 = vpack.c.bf16 %v1540, %v1539
    %v1565 = vpack.c.bf16 %v1542, %v1541
    %v1566 = vpack.c.bf16 %v1544, %v1543
    %v1567 = vpack.c.bf16 %v1546, %v1545
    %v1568 = vpack.c.bf16 %v1548, %v1547
    %v1569 = vpack.c.bf16 %v1550, %v1549
    %v1570 = vpack.c.bf16 %v1552, %v1551
    %v1571 = vld [vmem:[#allocation8] sm:$0xf]
    %v1572 = vld [vmem:[#allocation8 + $0x4] sm:$0xf]
    %v1573 = vld [vmem:[#allocation8 + $0x8] sm:$0xf]
    %v1574 = vld [vmem:[#allocation8 + $0xc] sm:$0xf]
    %v1575 = vld [vmem:[#allocation8 + $0x10] sm:$0xf]
    %v1576 = vld [vmem:[#allocation8 + $0x14] sm:$0xf]
    %v1577 = vld [vmem:[#allocation8 + $0x18] sm:$0xf]
    %v1578 = vld [vmem:[#allocation8 + $0x1c] sm:$0xf]
    %v1579 = vld [vmem:[#allocation8 + $0x20] sm:$0xf]
    %v1580 = vld [vmem:[#allocation8 + $0x24] sm:$0xf]
    %v1581 = vld [vmem:[#allocation8 + $0x28] sm:$0xf]
    %v1582 = vld [vmem:[#allocation8 + $0x2c] sm:$0xf]
    %v1583 = vld [vmem:[#allocation8 + $0x30] sm:$0xf]
    %v1584 = vld [vmem:[#allocation8 + $0x34] sm:$0xf]
    %v1585 = vld [vmem:[#allocation8 + $0x38] sm:$0xf]
    %v1586 = vld [vmem:[#allocation8 + $0x3c] sm:$0xf]
    %s1587 = scalar_lea.vmem [#allocation8], 64
    %v1588 = vld [vmem:[%s1587] sm:$0xf]
    %v1589 = vld [vmem:[%s1587 + $0x4] sm:$0xf]
    %v1590 = vld [vmem:[%s1587 + $0x8] sm:$0xf]
    %v1591 = vld [vmem:[%s1587 + $0xc] sm:$0xf]
    %v1592 = vld [vmem:[%s1587 + $0x10] sm:$0xf]
    %v1593 = vld [vmem:[%s1587 + $0x14] sm:$0xf]
    %v1594 = vld [vmem:[%s1587 + $0x18] sm:$0xf]
    %v1595 = vld [vmem:[%s1587 + $0x1c] sm:$0xf]
    %v1596 = vld [vmem:[%s1587 + $0x20] sm:$0xf]
    %v1597 = vld [vmem:[%s1587 + $0x24] sm:$0xf]
    %v1598 = vld [vmem:[%s1587 + $0x28] sm:$0xf]
    %v1599 = vld [vmem:[%s1587 + $0x2c] sm:$0xf]
    %v1600 = vld [vmem:[%s1587 + $0x30] sm:$0xf]
    %v1601 = vld [vmem:[%s1587 + $0x34] sm:$0xf]
    %v1602 = vld [vmem:[%s1587 + $0x38] sm:$0xf]
    %v1603 = vld [vmem:[%s1587 + $0x3c] sm:$0xf]
    %v1605 = vrot.slane %v1553, 4
    %v1623 = vunpack.c.l.b16 %v1588
    %v1624 = vunpack.c.l.b16 %v1589
    %v1625 = vunpack.c.l.b16 %v1590
    %v1626 = vunpack.c.l.b16 %v1591
    %v1627 = vunpack.c.l.b16 %v1592
    %v1628 = vunpack.c.l.b16 %v1593
    %v1629 = vunpack.c.l.b16 %v1594
    %v1630 = vunpack.c.l.b16 %v1595
    %v1631 = vunpack.c.l.b16 %v1596
    %v1632 = vunpack.c.l.b16 %v1597
    %v1633 = vunpack.c.l.b16 %v1598
    %v1634 = vunpack.c.l.b16 %v1599
    %v1635 = vunpack.c.l.b16 %v1600
    %v1636 = vunpack.c.l.b16 %v1601
    %v1637 = vunpack.c.l.b16 %v1602
    %v1638 = vunpack.c.l.b16 %v1603
    %v1639 = vpack.c.b16 %v1624, %v1623
    %v1640 = vpack.c.b16 %v1626, %v1625
    %v1641 = vpack.c.b16 %v1628, %v1627
    %v1642 = vpack.c.b16 %v1630, %v1629
    %v1643 = vpack.c.b16 %v1632, %v1631
    %v1644 = vpack.c.b16 %v1634, %v1633
    %v1645 = vpack.c.b16 %v1636, %v1635
    %v1646 = vpack.c.b16 %v1638, %v1637
    %1655 = vmatprep.subr.bf16.mxu0 0
    %1656 = vmatpush1.bf16.msra.mxu0 %v1639
    %1657 = vmatprep.subr.bf16.mxu0 0
    %1658 = vmatpush1.bf16.msra.mxu0 %v1640
    %1659 = vmatprep.subr.bf16.mxu0 0
    %1660 = vmatpush1.bf16.msra.mxu0 %v1641
    %1661 = vmatprep.subr.bf16.mxu0 0
    %1662 = vmatpush1.bf16.msra.mxu0 %v1642
    %1663 = vmatprep.subr.bf16.mxu0 0
    %1664 = vmatpush1.bf16.msra.mxu0 %v1643
    %1665 = vmatprep.subr.bf16.mxu0 0
    %1666 = vmatpush1.bf16.msra.mxu0 %v1644
    %1667 = vmatprep.subr.bf16.mxu0 0
    %1668 = vmatpush1.bf16.msra.mxu0 %v1645
    %1669 = vmatprep.subr.bf16.mxu0 0
    %1670 = vmatpush1.bf16.msra.mxu0 %v1646
    %1671 = vmatprep.subr.bf16.mxu0 0
    %1672 = vmatpush1.bf16.msra.mxu0 0
    %1673 = vmatprep.subr.bf16.mxu0 0
    %1674 = vmatpush1.bf16.msra.mxu0 0
    %1675 = vmatprep.subr.bf16.mxu0 0
    %1676 = vmatpush1.bf16.msra.mxu0 0
    %1677 = vmatprep.subr.bf16.mxu0 0
    %1678 = vmatpush1.bf16.msra.mxu0 0
    %1679 = vmatprep.subr.bf16.mxu0 0
    %1680 = vmatpush1.bf16.msra.mxu0 0
    %1681 = vmatprep.subr.bf16.mxu0 0
    %1682 = vmatpush1.bf16.msra.mxu0 0
    %1683 = vmatprep.subr.bf16.mxu0 0
    %1684 = vmatpush1.bf16.msra.mxu0 0
    %1685 = vmatprep.subr.bf16.mxu0 0
    %1686 = vmatpush1.bf16.msra.mxu0 0
    %1687 = vmatprep.mubr.bf16.mxu0 0
    %1688 = vmatmul.mubr.bf16.gmra.mrb[0].mxu0 %v1605
    %v1689 = vpop.f32.mrb[0].mxu0
    %v1690 = vadd.f32 0.0, %v1689
    %v1691 = vpop.f32.mrb[0].mxu0
    %v1692 = vpop.f32.mrb[0].mxu0
    %v1693 = vpop.f32.mrb[0].mxu0
    %1694 = vdwg.mxu0
    %v1711 = vunpack.c.l.b16 %v1571
    %v1712 = vunpack.c.l.b16 %v1572
    %v1713 = vunpack.c.l.b16 %v1573
    %v1714 = vunpack.c.l.b16 %v1574
    %v1715 = vunpack.c.l.b16 %v1575
    %v1716 = vunpack.c.l.b16 %v1576
    %v1717 = vunpack.c.l.b16 %v1577
    %v1718 = vunpack.c.l.b16 %v1578
    %v1719 = vunpack.c.l.b16 %v1579
    %v1720 = vunpack.c.l.b16 %v1580
    %v1721 = vunpack.c.l.b16 %v1581
    %v1722 = vunpack.c.l.b16 %v1582
    %v1723 = vunpack.c.l.b16 %v1583
    %v1724 = vunpack.c.l.b16 %v1584
    %v1725 = vunpack.c.l.b16 %v1585
    %v1726 = vunpack.c.l.b16 %v1586
    %v1727 = vpack.c.b16 %v1712, %v1711
    %v1728 = vpack.c.b16 %v1714, %v1713
    %v1729 = vpack.c.b16 %v1716, %v1715
    %v1730 = vpack.c.b16 %v1718, %v1717
    %v1731 = vpack.c.b16 %v1720, %v1719
    %v1732 = vpack.c.b16 %v1722, %v1721
    %v1733 = vpack.c.b16 %v1724, %v1723
    %v1734 = vpack.c.b16 %v1726, %v1725
    %1743 = vmatprep.subr.bf16.mxu0 0
    %1744 = vmatpush1.bf16.msra.mxu0 %v1727
    %1745 = vmatprep.subr.bf16.mxu0 0
    %1746 = vmatpush1.bf16.msra.mxu0 %v1728
    %1747 = vmatprep.subr.bf16.mxu0 0
    %1748 = vmatpush1.bf16.msra.mxu0 %v1729
    %1749 = vmatprep.subr.bf16.mxu0 0
    %1750 = vmatpush1.bf16.msra.mxu0 %v1730
    %1751 = vmatprep.subr.bf16.mxu0 0
    %1752 = vmatpush1.bf16.msra.mxu0 %v1731
    %1753 = vmatprep.subr.bf16.mxu0 0
    %1754 = vmatpush1.bf16.msra.mxu0 %v1732
    %1755 = vmatprep.subr.bf16.mxu0 0
    %1756 = vmatpush1.bf16.msra.mxu0 %v1733
    %1757 = vmatprep.subr.bf16.mxu0 0
    %1758 = vmatpush1.bf16.msra.mxu0 %v1734
    %1759 = vmatprep.subr.bf16.mxu0 0
    %1760 = vmatpush1.bf16.msra.mxu0 0
    %1761 = vmatprep.subr.bf16.mxu0 0
    %1762 = vmatpush1.bf16.msra.mxu0 0
    %1763 = vmatprep.subr.bf16.mxu0 0
    %1764 = vmatpush1.bf16.msra.mxu0 0
    %1765 = vmatprep.subr.bf16.mxu0 0
    %1766 = vmatpush1.bf16.msra.mxu0 0
    %1767 = vmatprep.subr.bf16.mxu0 0
    %1768 = vmatpush1.bf16.msra.mxu0 0
    %1769 = vmatprep.subr.bf16.mxu0 0
    %1770 = vmatpush1.bf16.msra.mxu0 0
    %1771 = vmatprep.subr.bf16.mxu0 0
    %1772 = vmatpush1.bf16.msra.mxu0 0
    %1773 = vmatprep.subr.bf16.mxu0 0
    %1774 = vmatpush1.bf16.msra.mxu0 0
    %1775 = vmatprep.mubr.bf16.mxu0 0
    %1776 = vmatmul.mubr.bf16.gmra.mrb[0].mxu0 %v1553
    %v1777 = vpop.f32.mrb[0].mxu0
    %v1778 = vadd.f32 %v1690, %v1777
    %v1779 = vpop.f32.mrb[0].mxu0
    %v1780 = vpop.f32.mrb[0].mxu0
    %v1781 = vpop.f32.mrb[0].mxu0
    %1782 = vdwg.mxu0
    %s1783 = scalar_lea.vmem [#allocation8], 128
    %v1784 = vld [vmem:[%s1783] sm:$0xf]
    %v1785 = vld [vmem:[%s1783 + $0x4] sm:$0xf]
    %v1786 = vld [vmem:[%s1783 + $0x8] sm:$0xf]
    %v1787 = vld [vmem:[%s1783 + $0xc] sm:$0xf]
    %v1788 = vld [vmem:[%s1783 + $0x10] sm:$0xf]
    %v1789 = vld [vmem:[%s1783 + $0x14] sm:$0xf]
    %v1790 = vld [vmem:[%s1783 + $0x18] sm:$0xf]
    %v1791 = vld [vmem:[%s1783 + $0x1c] sm:$0xf]
    %v1792 = vld [vmem:[%s1783 + $0x20] sm:$0xf]
    %v1793 = vld [vmem:[%s1783 + $0x24] sm:$0xf]
    %v1794 = vld [vmem:[%s1783 + $0x28] sm:$0xf]
    %v1795 = vld [vmem:[%s1783 + $0x2c] sm:$0xf]
    %v1796 = vld [vmem:[%s1783 + $0x30] sm:$0xf]
    %v1797 = vld [vmem:[%s1783 + $0x34] sm:$0xf]
    %v1798 = vld [vmem:[%s1783 + $0x38] sm:$0xf]
    %v1799 = vld [vmem:[%s1783 + $0x3c] sm:$0xf]
    %v1816 = vunpack.c.l.b16 %v1784
    %v1817 = vunpack.c.l.b16 %v1785
    %v1818 = vunpack.c.l.b16 %v1786
    %v1819 = vunpack.c.l.b16 %v1787
    %v1820 = vunpack.c.l.b16 %v1788
    %v1821 = vunpack.c.l.b16 %v1789
    %v1822 = vunpack.c.l.b16 %v1790
    %v1823 = vunpack.c.l.b16 %v1791
    %v1824 = vunpack.c.l.b16 %v1792
    %v1825 = vunpack.c.l.b16 %v1793
    %v1826 = vunpack.c.l.b16 %v1794
    %v1827 = vunpack.c.l.b16 %v1795
    %v1828 = vunpack.c.l.b16 %v1796
    %v1829 = vunpack.c.l.b16 %v1797
    %v1830 = vunpack.c.l.b16 %v1798
    %v1831 = vunpack.c.l.b16 %v1799
    %v1832 = vpack.c.b16 %v1817, %v1816
    %v1833 = vpack.c.b16 %v1819, %v1818
    %v1834 = vpack.c.b16 %v1821, %v1820
    %v1835 = vpack.c.b16 %v1823, %v1822
    %v1836 = vpack.c.b16 %v1825, %v1824
    %v1837 = vpack.c.b16 %v1827, %v1826
    %v1838 = vpack.c.b16 %v1829, %v1828
    %v1839 = vpack.c.b16 %v1831, %v1830
    %1848 = vmatprep.subr.bf16.mxu0 0
    %1849 = vmatpush1.bf16.msra.mxu0 %v1832
    %1850 = vmatprep.subr.bf16.mxu0 0
    %1851 = vmatpush1.bf16.msra.mxu0 %v1833
    %1852 = vmatprep.subr.bf16.mxu0 0
    %1853 = vmatpush1.bf16.msra.mxu0 %v1834
    %1854 = vmatprep.subr.bf16.mxu0 0
    %1855 = vmatpush1.bf16.msra.mxu0 %v1835
    %1856 = vmatprep.subr.bf16.mxu0 0
    %1857 = vmatpush1.bf16.msra.mxu0 %v1836
    %1858 = vmatprep.subr.bf16.mxu0 0
    %1859 = vmatpush1.bf16.msra.mxu0 %v1837
    %1860 = vmatprep.subr.bf16.mxu0 0
    %1861 = vmatpush1.bf16.msra.mxu0 %v1838
    %1862 = vmatprep.subr.bf16.mxu0 0
    %1863 = vmatpush1.bf16.msra.mxu0 %v1839
    %1864 = vmatprep.subr.bf16.mxu0 0
    %1865 = vmatpush1.bf16.msra.mxu0 0
    %1866 = vmatprep.subr.bf16.mxu0 0
    %1867 = vmatpush1.bf16.msra.mxu0 0
    %1868 = vmatprep.subr.bf16.mxu0 0
    %1869 = vmatpush1.bf16.msra.mxu0 0
    %1870 = vmatprep.subr.bf16.mxu0 0
    %1871 = vmatpush1.bf16.msra.mxu0 0
    %1872 = vmatprep.subr.bf16.mxu0 0
    %1873 = vmatpush1.bf16.msra.mxu0 0
    %1874 = vmatprep.subr.bf16.mxu0 0
    %1875 = vmatpush1.bf16.msra.mxu0 0
    %1876 = vmatprep.subr.bf16.mxu0 0
    %1877 = vmatpush1.bf16.msra.mxu0 0
    %1878 = vmatprep.subr.bf16.mxu0 0
    %1879 = vmatpush1.bf16.msra.mxu0 0
    %1880 = vmatprep.mubr.bf16.mxu0 0
    %1881 = vmatmul.mubr.bf16.gmra.mrb[0].mxu0 %v1554
    %v1882 = vpop.f32.mrb[0].mxu0
    %v1883 = vadd.f32 0.0, %v1882
    %v1884 = vpop.f32.mrb[0].mxu0
    %v1885 = vpop.f32.mrb[0].mxu0
    %v1886 = vpop.f32.mrb[0].mxu0
    %1887 = vdwg.mxu0
    %v1888 = vadd.f32 %v1778, %v1883
    %s1889 = scalar_lea.vmem [#allocation8], 192
    %v1890 = vld [vmem:[%s1889] sm:$0xf]
    %v1891 = vld [vmem:[%s1889 + $0x4] sm:$0xf]
    %v1892 = vld [vmem:[%s1889 + $0x8] sm:$0xf]
    %v1893 = vld [vmem:[%s1889 + $0xc] sm:$0xf]
    %v1894 = vld [vmem:[%s1889 + $0x10] sm:$0xf]
    %v1895 = vld [vmem:[%s1889 + $0x14] sm:$0xf]
    %v1896 = vld [vmem:[%s1889 + $0x18] sm:$0xf]
    %v1897 = vld [vmem:[%s1889 + $0x1c] sm:$0xf]
    %v1898 = vld [vmem:[%s1889 + $0x20] sm:$0xf]
    %v1899 = vld [vmem:[%s1889 + $0x24] sm:$0xf]
    %v1900 = vld [vmem:[%s1889 + $0x28] sm:$0xf]
    %v1901 = vld [vmem:[%s1889 + $0x2c] sm:$0xf]
    %v1902 = vld [vmem:[%s1889 + $0x30] sm:$0xf]
    %v1903 = vld [vmem:[%s1889 + $0x34] sm:$0xf]
    %v1904 = vld [vmem:[%s1889 + $0x38] sm:$0xf]
    %v1905 = vld [vmem:[%s1889 + $0x3c] sm:$0xf]
    %v1907 = vrot.slane %v1554, 4
    %v1925 = vunpack.c.l.b16 %v1890
    %v1926 = vunpack.c.l.b16 %v1891
    %v1927 = vunpack.c.l.b16 %v1892
    %v1928 = vunpack.c.l.b16 %v1893
    %v1929 = vunpack.c.l.b16 %v1894
    %v1930 = vunpack.c.l.b16 %v1895
    %v1931 = vunpack.c.l.b16 %v1896
    %v1932 = vunpack.c.l.b16 %v1897
    %v1933 = vunpack.c.l.b16 %v1898
    %v1934 = vunpack.c.l.b16 %v1899
    %v1935 = vunpack.c.l.b16 %v1900
    %v1936 = vunpack.c.l.b16 %v1901
    %v1937 = vunpack.c.l.b16 %v1902
    %v1938 = vunpack.c.l.b16 %v1903
    %v1939 = vunpack.c.l.b16 %v1904
    %v1940 = vunpack.c.l.b16 %v1905
    %v1941 = vpack.c.b16 %v1926, %v1925
    %v1942 = vpack.c.b16 %v1928, %v1927
    %v1943 = vpack.c.b16 %v1930, %v1929
    %v1944 = vpack.c.b16 %v1932, %v1931
    %v1945 = vpack.c.b16 %v1934, %v1933
    %v1946 = vpack.c.b16 %v1936, %v1935
    %v1947 = vpack.c.b16 %v1938, %v1937
    %v1948 = vpack.c.b16 %v1940, %v1939
    %1957 = vmatprep.subr.bf16.mxu0 0
    %1958 = vmatpush1.bf16.msra.mxu0 %v1941
    %1959 = vmatprep.subr.bf16.mxu0 0
    %1960 = vmatpush1.bf16.msra.mxu0 %v1942
    %1961 = vmatprep.subr.bf16.mxu0 0
    %1962 = vmatpush1.bf16.msra.mxu0 %v1943
    %1963 = vmatprep.subr.bf16.mxu0 0
    %1964 = vmatpush1.bf16.msra.mxu0 %v1944
    %1965 = vmatprep.subr.bf16.mxu0 0
    %1966 = vmatpush1.bf16.msra.mxu0 %v1945
    %1967 = vmatprep.subr.bf16.mxu0 0
    %1968 = vmatpush1.bf16.msra.mxu0 %v1946
    %1969 = vmatprep.subr.bf16.mxu0 0
    %1970 = vmatpush1.bf16.msra.mxu0 %v1947
    %1971 = vmatprep.subr.bf16.mxu0 0
    %1972 = vmatpush1.bf16.msra.mxu0 %v1948
    %1973 = vmatprep.subr.bf16.mxu0 0
    %1974 = vmatpush1.bf16.msra.mxu0 0
    %1975 = vmatprep.subr.bf16.mxu0 0
    %1976 = vmatpush1.bf16.msra.mxu0 0
    %1977 = vmatprep.subr.bf16.mxu0 0
    %1978 = vmatpush1.bf16.msra.mxu0 0
    %1979 = vmatprep.subr.bf16.mxu0 0
    %1980 = vmatpush1.bf16.msra.mxu0 0
    %1981 = vmatprep.subr.bf16.mxu0 0
    %1982 = vmatpush1.bf16.msra.mxu0 0
    %1983 = vmatprep.subr.bf16.mxu0 0
    %1984 = vmatpush1.bf16.msra.mxu0 0
    %1985 = vmatprep.subr.bf16.mxu0 0
    %1986 = vmatpush1.bf16.msra.mxu0 0
    %1987 = vmatprep.subr.bf16.mxu0 0
    %1988 = vmatpush1.bf16.msra.mxu0 0
    %1989 = vmatprep.mubr.bf16.mxu0 0
    %1990 = vmatmul.mubr.bf16.gmra.mrb[0].mxu0 %v1907
    %v1991 = vpop.f32.mrb[0].mxu0
    %v1992 = vadd.f32 0.0, %v1991
    %v1993 = vpop.f32.mrb[0].mxu0
    %v1994 = vpop.f32.mrb[0].mxu0
    %v1995 = vpop.f32.mrb[0].mxu0
    %1996 = vdwg.mxu0
    %v1997 = vadd.f32 %v1888, %v1992
    %s1998 = scalar_lea.vmem [#allocation8], 256
    %v1999 = vld [vmem:[%s1998] sm:$0xf]
    %v2000 = vld [vmem:[%s1998 + $0x4] sm:$0xf]
    %v2001 = vld [vmem:[%s1998 + $0x8] sm:$0xf]
    %v2002 = vld [vmem:[%s1998 + $0xc] sm:$0xf]
    %v2003 = vld [vmem:[%s1998 + $0x10] sm:$0xf]
    %v2004 = vld [vmem:[%s1998 + $0x14] sm:$0xf]
    %v2005 = vld [vmem:[%s1998 + $0x18] sm:$0xf]
    %v2006 = vld [vmem:[%s1998 + $0x1c] sm:$0xf]
    %v2007 = vld [vmem:[%s1998 + $0x20] sm:$0xf]
    %v2008 = vld [vmem:[%s1998 + $0x24] sm:$0xf]
    %v2009 = vld [vmem:[%s1998 + $0x28] sm:$0xf]
    %v2010 = vld [vmem:[%s1998 + $0x2c] sm:$0xf]
    %v2011 = vld [vmem:[%s1998 + $0x30] sm:$0xf]
    %v2012 = vld [vmem:[%s1998 + $0x34] sm:$0xf]
    %v2013 = vld [vmem:[%s1998 + $0x38] sm:$0xf]
    %v2014 = vld [vmem:[%s1998 + $0x3c] sm:$0xf]
    %v2031 = vunpack.c.l.b16 %v1999
    %v2032 = vunpack.c.l.b16 %v2000
    %v2033 = vunpack.c.l.b16 %v2001
    %v2034 = vunpack.c.l.b16 %v2002
    %v2035 = vunpack.c.l.b16 %v2003
    %v2036 = vunpack.c.l.b16 %v2004
    %v2037 = vunpack.c.l.b16 %v2005
    %v2038 = vunpack.c.l.b16 %v2006
    %v2039 = vunpack.c.l.b16 %v2007
    %v2040 = vunpack.c.l.b16 %v2008
    %v2041 = vunpack.c.l.b16 %v2009
    %v2042 = vunpack.c.l.b16 %v2010
    %v2043 = vunpack.c.l.b16 %v2011
    %v2044 = vunpack.c.l.b16 %v2012
    %v2045 = vunpack.c.l.b16 %v2013
    %v2046 = vunpack.c.l.b16 %v2014
    %v2047 = vpack.c.b16 %v2032, %v2031
    %v2048 = vpack.c.b16 %v2034, %v2033
    %v2049 = vpack.c.b16 %v2036, %v2035
    %v2050 = vpack.c.b16 %v2038, %v2037
    %v2051 = vpack.c.b16 %v2040, %v2039
    %v2052 = vpack.c.b16 %v2042, %v2041
    %v2053 = vpack.c.b16 %v2044, %v2043
    %v2054 = vpack.c.b16 %v2046, %v2045
    %2063 = vmatprep.subr.bf16.mxu0 0
    %2064 = vmatpush1.bf16.msra.mxu0 %v2047
    %2065 = vmatprep.subr.bf16.mxu0 0
    %2066 = vmatpush1.bf16.msra.mxu0 %v2048
    %2067 = vmatprep.subr.bf16.mxu0 0
    %2068 = vmatpush1.bf16.msra.mxu0 %v2049
    %2069 = vmatprep.subr.bf16.mxu0 0
    %2070 = vmatpush1.bf16.msra.mxu0 %v2050
    %2071 = vmatprep.subr.bf16.mxu0 0
    %2072 = vmatpush1.bf16.msra.mxu0 %v2051
    %2073 = vmatprep.subr.bf16.mxu0 0
    %2074 = vmatpush1.bf16.msra.mxu0 %v2052
    %2075 = vmatprep.subr.bf16.mxu0 0
    %2076 = vmatpush1.bf16.msra.mxu0 %v2053
    %2077 = vmatprep.subr.bf16.mxu0 0
    %2078 = vmatpush1.bf16.msra.mxu0 %v2054
    %2079 = vmatprep.subr.bf16.mxu0 0
    %2080 = vmatpush1.bf16.msra.mxu0 0
    %2081 = vmatprep.subr.bf16.mxu0 0
    %2082 = vmatpush1.bf16.msra.mxu0 0
    %2083 = vmatprep.subr.bf16.mxu0 0
    %2084 = vmatpush1.bf16.msra.mxu0 0
    %2085 = vmatprep.subr.bf16.mxu0 0
    %2086 = vmatpush1.bf16.msra.mxu0 0
    %2087 = vmatprep.subr.bf16.mxu0 0
    %2088 = vmatpush1.bf16.msra.mxu0 0
    %2089 = vmatprep.subr.bf16.mxu0 0
    %2090 = vmatpush1.bf16.msra.mxu0 0
    %2091 = vmatprep.subr.bf16.mxu0 0
    %2092 = vmatpush1.bf16.msra.mxu0 0
    %2093 = vmatprep.subr.bf16.mxu0 0
    %2094 = vmatpush1.bf16.msra.mxu0 0
    %2095 = vmatprep.mubr.bf16.mxu0 0
    %2096 = vmatmul.mubr.bf16.gmra.mrb[0].mxu0 %v1555
    %v2097 = vpop.f32.mrb[0].mxu0
    %v2098 = vadd.f32 0.0, %v2097
    %v2099 = vpop.f32.mrb[0].mxu0
    %v2100 = vpop.f32.mrb[0].mxu0
    %v2101 = vpop.f32.mrb[0].mxu0
    %2102 = vdwg.mxu0
    %v2103 = vadd.f32 %v1997, %v2098
    %s2104 = scalar_lea.vmem [#allocation8], 320
    %v2105 = vld [vmem:[%s2104] sm:$0xf]
    %v2106 = vld [vmem:[%s2104 + $0x4] sm:$0xf]
    %v2107 = vld [vmem:[%s2104 + $0x8] sm:$0xf]
    %v2108 = vld [vmem:[%s2104 + $0xc] sm:$0xf]
    %v2109 = vld [vmem:[%s2104 + $0x10] sm:$0xf]
    %v2110 = vld [vmem:[%s2104 + $0x14] sm:$0xf]
    %v2111 = vld [vmem:[%s2104 + $0x18] sm:$0xf]
    %v2112 = vld [vmem:[%s2104 + $0x1c] sm:$0xf]
    %v2113 = vld [vmem:[%s2104 + $0x20] sm:$0xf]
    %v2114 = vld [vmem:[%s2104 + $0x24] sm:$0xf]
    %v2115 = vld [vmem:[%s2104 + $0x28] sm:$0xf]
    %v2116 = vld [vmem:[%s2104 + $0x2c] sm:$0xf]
    %v2117 = vld [vmem:[%s2104 + $0x30] sm:$0xf]
    %v2118 = vld [vmem:[%s2104 + $0x34] sm:$0xf]
    %v2119 = vld [vmem:[%s2104 + $0x38] sm:$0xf]
    %v2120 = vld [vmem:[%s2104 + $0x3c] sm:$0xf]
    %v2122 = vrot.slane %v1555, 4
    %v2140 = vunpack.c.l.b16 %v2105
    %v2141 = vunpack.c.l.b16 %v2106
    %v2142 = vunpack.c.l.b16 %v2107
    %v2143 = vunpack.c.l.b16 %v2108
    %v2144 = vunpack.c.l.b16 %v2109
    %v2145 = vunpack.c.l.b16 %v2110
    %v2146 = vunpack.c.l.b16 %v2111
    %v2147 = vunpack.c.l.b16 %v2112
    %v2148 = vunpack.c.l.b16 %v2113
    %v2149 = vunpack.c.l.b16 %v2114
    %v2150 = vunpack.c.l.b16 %v2115
    %v2151 = vunpack.c.l.b16 %v2116
    %v2152 = vunpack.c.l.b16 %v2117
    %v2153 = vunpack.c.l.b16 %v2118
    %v2154 = vunpack.c.l.b16 %v2119
    %v2155 = vunpack.c.l.b16 %v2120
    %v2156 = vpack.c.b16 %v2141, %v2140
    %v2157 = vpack.c.b16 %v2143, %v2142
    %v2158 = vpack.c.b16 %v2145, %v2144
    %v2159 = vpack.c.b16 %v2147, %v2146
    %v2160 = vpack.c.b16 %v2149, %v2148
    %v2161 = vpack.c.b16 %v2151, %v2150
    %v2162 = vpack.c.b16 %v2153, %v2152
    %v2163 = vpack.c.b16 %v2155, %v2154
    %2172 = vmatprep.subr.bf16.mxu0 0
    %2173 = vmatpush1.bf16.msra.mxu0 %v2156
    %2174 = vmatprep.subr.bf16.mxu0 0
    %2175 = vmatpush1.bf16.msra.mxu0 %v2157
    %2176 = vmatprep.subr.bf16.mxu0 0
    %2177 = vmatpush1.bf16.msra.mxu0 %v2158
    %2178 = vmatprep.subr.bf16.mxu0 0
    %2179 = vmatpush1.bf16.msra.mxu0 %v2159
    %2180 = vmatprep.subr.bf16.mxu0 0
    %2181 = vmatpush1.bf16.msra.mxu0 %v2160
    %2182 = vmatprep.subr.bf16.mxu0 0
    %2183 = vmatpush1.bf16.msra.mxu0 %v2161
    %2184 = vmatprep.subr.bf16.mxu0 0
    %2185 = vmatpush1.bf16.msra.mxu0 %v2162
    %2186 = vmatprep.subr.bf16.mxu0 0
    %2187 = vmatpush1.bf16.msra.mxu0 %v2163
    %2188 = vmatprep.subr.bf16.mxu0 0
    %2189 = vmatpush1.bf16.msra.mxu0 0
    %2190 = vmatprep.subr.bf16.mxu0 0
    %2191 = vmatpush1.bf16.msra.mxu0 0
    %2192 = vmatprep.subr.bf16.mxu0 0
    %2193 = vmatpush1.bf16.msra.mxu0 0
    %2194 = vmatprep.subr.bf16.mxu0 0
    %2195 = vmatpush1.bf16.msra.mxu0 0
    %2196 = vmatprep.subr.bf16.mxu0 0
    %2197 = vmatpush1.bf16.msra.mxu0 0
    %2198 = vmatprep.subr.bf16.mxu0 0
    %2199 = vmatpush1.bf16.msra.mxu0 0
    %2200 = vmatprep.subr.bf16.mxu0 0
    %2201 = vmatpush1.bf16.msra.mxu0 0
    %2202 = vmatprep.subr.bf16.mxu0 0
    %2203 = vmatpush1.bf16.msra.mxu0 0
    %2204 = vmatprep.mubr.bf16.mxu0 0
    %2205 = vmatmul.mubr.bf16.gmra.mrb[0].mxu0 %v2122
    %v2206 = vpop.f32.mrb[0].mxu0
    %v2207 = vadd.f32 0.0, %v2206
    %v2208 = vpop.f32.mrb[0].mxu0
    %v2209 = vpop.f32.mrb[0].mxu0
    %v2210 = vpop.f32.mrb[0].mxu0
    %2211 = vdwg.mxu0
    %v2212 = vadd.f32 %v2103, %v2207
    %s2213 = scalar_lea.vmem [#allocation8], 384
    %v2214 = vld [vmem:[%s2213] sm:$0xf]
    %v2215 = vld [vmem:[%s2213 + $0x4] sm:$0xf]
    %v2216 = vld [vmem:[%s2213 + $0x8] sm:$0xf]
    %v2217 = vld [vmem:[%s2213 + $0xc] sm:$0xf]
    %v2218 = vld [vmem:[%s2213 + $0x10] sm:$0xf]
    %v2219 = vld [vmem:[%s2213 + $0x14] sm:$0xf]
    %v2220 = vld [vmem:[%s2213 + $0x18] sm:$0xf]
    %v2221 = vld [vmem:[%s2213 + $0x1c] sm:$0xf]
    %v2222 = vld [vmem:[%s2213 + $0x20] sm:$0xf]
    %v2223 = vld [vmem:[%s2213 + $0x24] sm:$0xf]
    %v2224 = vld [vmem:[%s2213 + $0x28] sm:$0xf]
    %v2225 = vld [vmem:[%s2213 + $0x2c] sm:$0xf]
    %v2226 = vld [vmem:[%s2213 + $0x30] sm:$0xf]
    %v2227 = vld [vmem:[%s2213 + $0x34] sm:$0xf]
    %v2228 = vld [vmem:[%s2213 + $0x38] sm:$0xf]
    %v2229 = vld [vmem:[%s2213 + $0x3c] sm:$0xf]
    %v2246 = vunpack.c.l.b16 %v2214
    %v2247 = vunpack.c.l.b16 %v2215
    %v2248 = vunpack.c.l.b16 %v2216
    %v2249 = vunpack.c.l.b16 %v2217
    %v2250 = vunpack.c.l.b16 %v2218
    %v2251 = vunpack.c.l.b16 %v2219
    %v2252 = vunpack.c.l.b16 %v2220
    %v2253 = vunpack.c.l.b16 %v2221
    %v2254 = vunpack.c.l.b16 %v2222
    %v2255 = vunpack.c.l.b16 %v2223
    %v2256 = vunpack.c.l.b16 %v2224
    %v2257 = vunpack.c.l.b16 %v2225
    %v2258 = vunpack.c.l.b16 %v2226
    %v2259 = vunpack.c.l.b16 %v2227
    %v2260 = vunpack.c.l.b16 %v2228
    %v2261 = vunpack.c.l.b16 %v2229
    %v2262 = vpack.c.b16 %v2247, %v2246
    %v2263 = vpack.c.b16 %v2249, %v2248
    %v2264 = vpack.c.b16 %v2251, %v2250
    %v2265 = vpack.c.b16 %v2253, %v2252
    %v2266 = vpack.c.b16 %v2255, %v2254
    %v2267 = vpack.c.b16 %v2257, %v2256
    %v2268 = vpack.c.b16 %v2259, %v2258
    %v2269 = vpack.c.b16 %v2261, %v2260
    %2278 = vmatprep.subr.bf16.mxu0 0
    %2279 = vmatpush1.bf16.msra.mxu0 %v2262
    %2280 = vmatprep.subr.bf16.mxu0 0
    %2281 = vmatpush1.bf16.msra.mxu0 %v2263
    %2282 = vmatprep.subr.bf16.mxu0 0
    %2283 = vmatpush1.bf16.msra.mxu0 %v2264
    %2284 = vmatprep.subr.bf16.mxu0 0
    %2285 = vmatpush1.bf16.msra.mxu0 %v2265
    %2286 = vmatprep.subr.bf16.mxu0 0
    %2287 = vmatpush1.bf16.msra.mxu0 %v2266
    %2288 = vmatprep.subr.bf16.mxu0 0
    %2289 = vmatpush1.bf16.msra.mxu0 %v2267
    %2290 = vmatprep.subr.bf16.mxu0 0
    %2291 = vmatpush1.bf16.msra.mxu0 %v2268
    %2292 = vmatprep.subr.bf16.mxu0 0
    %2293 = vmatpush1.bf16.msra.mxu0 %v2269
    %2294 = vmatprep.subr.bf16.mxu0 0
    %2295 = vmatpush1.bf16.msra.mxu0 0
    %2296 = vmatprep.subr.bf16.mxu0 0
    %2297 = vmatpush1.bf16.msra.mxu0 0
    %2298 = vmatprep.subr.bf16.mxu0 0
    %2299 = vmatpush1.bf16.msra.mxu0 0
    %2300 = vmatprep.subr.bf16.mxu0 0
    %2301 = vmatpush1.bf16.msra.mxu0 0
    %2302 = vmatprep.subr.bf16.mxu0 0
    %2303 = vmatpush1.bf16.msra.mxu0 0
    %2304 = vmatprep.subr.bf16.mxu0 0
    %2305 = vmatpush1.bf16.msra.mxu0 0
    %2306 = vmatprep.subr.bf16.mxu0 0
    %2307 = vmatpush1.bf16.msra.mxu0 0
    %2308 = vmatprep.subr.bf16.mxu0 0
    %2309 = vmatpush1.bf16.msra.mxu0 0
    %2310 = vmatprep.mubr.bf16.mxu0 0
    %2311 = vmatmul.mubr.bf16.gmra.mrb[0].mxu0 %v1556
    %v2312 = vpop.f32.mrb[0].mxu0
    %v2313 = vadd.f32 0.0, %v2312
    %v2314 = vpop.f32.mrb[0].mxu0
    %v2315 = vpop.f32.mrb[0].mxu0
    %v2316 = vpop.f32.mrb[0].mxu0
    %2317 = vdwg.mxu0
    %v2318 = vadd.f32 %v2212, %v2313
    %s2319 = scalar_lea.vmem [#allocation8], 448
    %v2320 = vld [vmem:[%s2319] sm:$0xf]
    %v2321 = vld [vmem:[%s2319 + $0x4] sm:$0xf]
    %v2322 = vld [vmem:[%s2319 + $0x8] sm:$0xf]
    %v2323 = vld [vmem:[%s2319 + $0xc] sm:$0xf]
    %v2324 = vld [vmem:[%s2319 + $0x10] sm:$0xf]
    %v2325 = vld [vmem:[%s2319 + $0x14] sm:$0xf]
    %v2326 = vld [vmem:[%s2319 + $0x18] sm:$0xf]
    %v2327 = vld [vmem:[%s2319 + $0x1c] sm:$0xf]
    %v2328 = vld [vmem:[%s2319 + $0x20] sm:$0xf]
    %v2329 = vld [vmem:[%s2319 + $0x24] sm:$0xf]
    %v2330 = vld [vmem:[%s2319 + $0x28] sm:$0xf]
    %v2331 = vld [vmem:[%s2319 + $0x2c] sm:$0xf]
    %v2332 = vld [vmem:[%s2319 + $0x30] sm:$0xf]
    %v2333 = vld [vmem:[%s2319 + $0x34] sm:$0xf]
    %v2334 = vld [vmem:[%s2319 + $0x38] sm:$0xf]
    %v2335 = vld [vmem:[%s2319 + $0x3c] sm:$0xf]
    %v2337 = vrot.slane %v1556, 4
    %v2355 = vunpack.c.l.b16 %v2320
    %v2356 = vunpack.c.l.b16 %v2321
    %v2357 = vunpack.c.l.b16 %v2322
    %v2358 = vunpack.c.l.b16 %v2323
    %v2359 = vunpack.c.l.b16 %v2324
    %v2360 = vunpack.c.l.b16 %v2325
    %v2361 = vunpack.c.l.b16 %v2326
    %v2362 = vunpack.c.l.b16 %v2327
    %v2363 = vunpack.c.l.b16 %v2328
    %v2364 = vunpack.c.l.b16 %v2329
    %v2365 = vunpack.c.l.b16 %v2330
    %v2366 = vunpack.c.l.b16 %v2331
    %v2367 = vunpack.c.l.b16 %v2332
    %v2368 = vunpack.c.l.b16 %v2333
    %v2369 = vunpack.c.l.b16 %v2334
    %v2370 = vunpack.c.l.b16 %v2335
    %v2371 = vpack.c.b16 %v2356, %v2355
    %v2372 = vpack.c.b16 %v2358, %v2357
    %v2373 = vpack.c.b16 %v2360, %v2359
    %v2374 = vpack.c.b16 %v2362, %v2361
    %v2375 = vpack.c.b16 %v2364, %v2363
    %v2376 = vpack.c.b16 %v2366, %v2365
    %v2377 = vpack.c.b16 %v2368, %v2367
    %v2378 = vpack.c.b16 %v2370, %v2369
    %2387 = vmatprep.subr.bf16.mxu0 0
    %2388 = vmatpush1.bf16.msra.mxu0 %v2371
    %2389 = vmatprep.subr.bf16.mxu0 0
    %2390 = vmatpush1.bf16.msra.mxu0 %v2372
    %2391 = vmatprep.subr.bf16.mxu0 0
    %2392 = vmatpush1.bf16.msra.mxu0 %v2373
    %2393 = vmatprep.subr.bf16.mxu0 0
    %2394 = vmatpush1.bf16.msra.mxu0 %v2374
    %2395 = vmatprep.subr.bf16.mxu0 0
    %2396 = vmatpush1.bf16.msra.mxu0 %v2375
    %2397 = vmatprep.subr.bf16.mxu0 0
    %2398 = vmatpush1.bf16.msra.mxu0 %v2376
    %2399 = vmatprep.subr.bf16.mxu0 0
    %2400 = vmatpush1.bf16.msra.mxu0 %v2377
    %2401 = vmatprep.subr.bf16.mxu0 0
    %2402 = vmatpush1.bf16.msra.mxu0 %v2378
    %2403 = vmatprep.subr.bf16.mxu0 0
    %2404 = vmatpush1.bf16.msra.mxu0 0
    %2405 = vmatprep.subr.bf16.mxu0 0
    %2406 = vmatpush1.bf16.msra.mxu0 0
    %2407 = vmatprep.subr.bf16.mxu0 0
    %2408 = vmatpush1.bf16.msra.mxu0 0
    %2409 = vmatprep.subr.bf16.mxu0 0
    %2410 = vmatpush1.bf16.msra.mxu0 0
    %2411 = vmatprep.subr.bf16.mxu0 0
    %2412 = vmatpush1.bf16.msra.mxu0 0
    %2413 = vmatprep.subr.bf16.mxu0 0
    %2414 = vmatpush1.bf16.msra.mxu0 0
    %2415 = vmatprep.subr.bf16.mxu0 0
    %2416 = vmatpush1.bf16.msra.mxu0 0
    %2417 = vmatprep.subr.bf16.mxu0 0
    %2418 = vmatpush1.bf16.msra.mxu0 0
    %2419 = vmatprep.mubr.bf16.mxu0 0
    %2420 = vmatmul.mubr.bf16.gmra.mrb[0].mxu0 %v2337
    %v2421 = vpop.f32.mrb[0].mxu0
    %v2422 = vadd.f32 0.0, %v2421
    %v2423 = vpop.f32.mrb[0].mxu0
    %v2424 = vpop.f32.mrb[0].mxu0
    %v2425 = vpop.f32.mrb[0].mxu0
    %2426 = vdwg.mxu0
    %v2427 = vadd.f32 %v2318, %v2422
    %s2428 = scalar_lea.vmem [#allocation8], 512
    %v2429 = vld [vmem:[%s2428] sm:$0xf]
    %v2430 = vld [vmem:[%s2428 + $0x4] sm:$0xf]
    %v2431 = vld [vmem:[%s2428 + $0x8] sm:$0xf]
    %v2432 = vld [vmem:[%s2428 + $0xc] sm:$0xf]
    %v2433 = vld [vmem:[%s2428 + $0x10] sm:$0xf]
    %v2434 = vld [vmem:[%s2428 + $0x14] sm:$0xf]
    %v2435 = vld [vmem:[%s2428 + $0x18] sm:$0xf]
    %v2436 = vld [vmem:[%s2428 + $0x1c] sm:$0xf]
    %v2437 = vld [vmem:[%s2428 + $0x20] sm:$0xf]
    %v2438 = vld [vmem:[%s2428 + $0x24] sm:$0xf]
    %v2439 = vld [vmem:[%s2428 + $0x28] sm:$0xf]
    %v2440 = vld [vmem:[%s2428 + $0x2c] sm:$0xf]
    %v2441 = vld [vmem:[%s2428 + $0x30] sm:$0xf]
    %v2442 = vld [vmem:[%s2428 + $0x34] sm:$0xf]
    %v2443 = vld [vmem:[%s2428 + $0x38] sm:$0xf]
    %v2444 = vld [vmem:[%s2428 + $0x3c] sm:$0xf]
    %v2461 = vunpack.c.l.b16 %v2429
    %v2462 = vunpack.c.l.b16 %v2430
    %v2463 = vunpack.c.l.b16 %v2431
    %v2464 = vunpack.c.l.b16 %v2432
    %v2465 = vunpack.c.l.b16 %v2433
    %v2466 = vunpack.c.l.b16 %v2434
    %v2467 = vunpack.c.l.b16 %v2435
    %v2468 = vunpack.c.l.b16 %v2436
    %v2469 = vunpack.c.l.b16 %v2437
    %v2470 = vunpack.c.l.b16 %v2438
    %v2471 = vunpack.c.l.b16 %v2439
    %v2472 = vunpack.c.l.b16 %v2440
    %v2473 = vunpack.c.l.b16 %v2441
    %v2474 = vunpack.c.l.b16 %v2442
    %v2475 = vunpack.c.l.b16 %v2443
    %v2476 = vunpack.c.l.b16 %v2444
    %v2477 = vpack.c.b16 %v2462, %v2461
    %v2478 = vpack.c.b16 %v2464, %v2463
    %v2479 = vpack.c.b16 %v2466, %v2465
    %v2480 = vpack.c.b16 %v2468, %v2467
    %v2481 = vpack.c.b16 %v2470, %v2469
    %v2482 = vpack.c.b16 %v2472, %v2471
    %v2483 = vpack.c.b16 %v2474, %v2473
    %v2484 = vpack.c.b16 %v2476, %v2475
    %2493 = vmatprep.subr.bf16.mxu0 0
    %2494 = vmatpush1.bf16.msra.mxu0 %v2477
    %2495 = vmatprep.subr.bf16.mxu0 0
    %2496 = vmatpush1.bf16.msra.mxu0 %v2478
    %2497 = vmatprep.subr.bf16.mxu0 0
    %2498 = vmatpush1.bf16.msra.mxu0 %v2479
    %2499 = vmatprep.subr.bf16.mxu0 0
    %2500 = vmatpush1.bf16.msra.mxu0 %v2480
    %2501 = vmatprep.subr.bf16.mxu0 0
    %2502 = vmatpush1.bf16.msra.mxu0 %v2481
    %2503 = vmatprep.subr.bf16.mxu0 0
    %2504 = vmatpush1.bf16.msra.mxu0 %v2482
    %2505 = vmatprep.subr.bf16.mxu0 0
    %2506 = vmatpush1.bf16.msra.mxu0 %v2483
    %2507 = vmatprep.subr.bf16.mxu0 0
    %2508 = vmatpush1.bf16.msra.mxu0 %v2484
    %2509 = vmatprep.subr.bf16.mxu0 0
    %2510 = vmatpush1.bf16.msra.mxu0 0
    %2511 = vmatprep.subr.bf16.mxu0 0
    %2512 = vmatpush1.bf16.msra.mxu0 0
    %2513 = vmatprep.subr.bf16.mxu0 0
    %2514 = vmatpush1.bf16.msra.mxu0 0
    %2515 = vmatprep.subr.bf16.mxu0 0
    %2516 = vmatpush1.bf16.msra.mxu0 0
    %2517 = vmatprep.subr.bf16.mxu0 0
    %2518 = vmatpush1.bf16.msra.mxu0 0
    %2519 = vmatprep.subr.bf16.mxu0 0
    %2520 = vmatpush1.bf16.msra.mxu0 0
    %2521 = vmatprep.subr.bf16.mxu0 0
    %2522 = vmatpush1.bf16.msra.mxu0 0
    %2523 = vmatprep.subr.bf16.mxu0 0
    %2524 = vmatpush1.bf16.msra.mxu0 0
    %2525 = vmatprep.mubr.bf16.mxu0 0
    %2526 = vmatmul.mubr.bf16.gmra.mrb[0].mxu0 %v1557
    %v2527 = vpop.f32.mrb[0].mxu0
    %v2528 = vadd.f32 0.0, %v2527
    %v2529 = vpop.f32.mrb[0].mxu0
    %v2530 = vpop.f32.mrb[0].mxu0
    %v2531 = vpop.f32.mrb[0].mxu0
    %2532 = vdwg.mxu0
    %v2533 = vadd.f32 %v2427, %v2528
    %s2534 = scalar_lea.vmem [#allocation8], 576
    %v2535 = vld [vmem:[%s2534] sm:$0xf]
    %v2536 = vld [vmem:[%s2534 + $0x4] sm:$0xf]
    %v2537 = vld [vmem:[%s2534 + $0x8] sm:$0xf]
    %v2538 = vld [vmem:[%s2534 + $0xc] sm:$0xf]
    %v2539 = vld [vmem:[%s2534 + $0x10] sm:$0xf]
    %v2540 = vld [vmem:[%s2534 + $0x14] sm:$0xf]
    %v2541 = vld [vmem:[%s2534 + $0x18] sm:$0xf]
    %v2542 = vld [vmem:[%s2534 + $0x1c] sm:$0xf]
    %v2543 = vld [vmem:[%s2534 + $0x20] sm:$0xf]
    %v2544 = vld [vmem:[%s2534 + $0x24] sm:$0xf]
    %v2545 = vld [vmem:[%s2534 + $0x28] sm:$0xf]
    %v2546 = vld [vmem:[%s2534 + $0x2c] sm:$0xf]
    %v2547 = vld [vmem:[%s2534 + $0x30] sm:$0xf]
    %v2548 = vld [vmem:[%s2534 + $0x34] sm:$0xf]
    %v2549 = vld [vmem:[%s2534 + $0x38] sm:$0xf]
    %v2550 = vld [vmem:[%s2534 + $0x3c] sm:$0xf]
    %v2552 = vrot.slane %v1557, 4
    %v2570 = vunpack.c.l.b16 %v2535
    %v2571 = vunpack.c.l.b16 %v2536
    %v2572 = vunpack.c.l.b16 %v2537
    %v2573 = vunpack.c.l.b16 %v2538
    %v2574 = vunpack.c.l.b16 %v2539
    %v2575 = vunpack.c.l.b16 %v2540
    %v2576 = vunpack.c.l.b16 %v2541
    %v2577 = vunpack.c.l.b16 %v2542
    %v2578 = vunpack.c.l.b16 %v2543
    %v2579 = vunpack.c.l.b16 %v2544
    %v2580 = vunpack.c.l.b16 %v2545
    %v2581 = vunpack.c.l.b16 %v2546
    %v2582 = vunpack.c.l.b16 %v2547
    %v2583 = vunpack.c.l.b16 %v2548
    %v2584 = vunpack.c.l.b16 %v2549
    %v2585 = vunpack.c.l.b16 %v2550
    %v2586 = vpack.c.b16 %v2571, %v2570
    %v2587 = vpack.c.b16 %v2573, %v2572
    %v2588 = vpack.c.b16 %v2575, %v2574
    %v2589 = vpack.c.b16 %v2577, %v2576
    %v2590 = vpack.c.b16 %v2579, %v2578
    %v2591 = vpack.c.b16 %v2581, %v2580
    %v2592 = vpack.c.b16 %v2583, %v2582
    %v2593 = vpack.c.b16 %v2585, %v2584
    %2602 = vmatprep.subr.bf16.mxu0 0
    %2603 = vmatpush1.bf16.msra.mxu0 %v2586
    %2604 = vmatprep.subr.bf16.mxu0 0
    %2605 = vmatpush1.bf16.msra.mxu0 %v2587
    %2606 = vmatprep.subr.bf16.mxu0 0
    %2607 = vmatpush1.bf16.msra.mxu0 %v2588
    %2608 = vmatprep.subr.bf16.mxu0 0
    %2609 = vmatpush1.bf16.msra.mxu0 %v2589
    %2610 = vmatprep.subr.bf16.mxu0 0
    %2611 = vmatpush1.bf16.msra.mxu0 %v2590
    %2612 = vmatprep.subr.bf16.mxu0 0
    %2613 = vmatpush1.bf16.msra.mxu0 %v2591
    %2614 = vmatprep.subr.bf16.mxu0 0
    %2615 = vmatpush1.bf16.msra.mxu0 %v2592
    %2616 = vmatprep.subr.bf16.mxu0 0
    %2617 = vmatpush1.bf16.msra.mxu0 %v2593
    %2618 = vmatprep.subr.bf16.mxu0 0
    %2619 = vmatpush1.bf16.msra.mxu0 0
    %2620 = vmatprep.subr.bf16.mxu0 0
    %2621 = vmatpush1.bf16.msra.mxu0 0
    %2622 = vmatprep.subr.bf16.mxu0 0
    %2623 = vmatpush1.bf16.msra.mxu0 0
    %2624 = vmatprep.subr.bf16.mxu0 0
    %2625 = vmatpush1.bf16.msra.mxu0 0
    %2626 = vmatprep.subr.bf16.mxu0 0
    %2627 = vmatpush1.bf16.msra.mxu0 0
    %2628 = vmatprep.subr.bf16.mxu0 0
    %2629 = vmatpush1.bf16.msra.mxu0 0
    %2630 = vmatprep.subr.bf16.mxu0 0
    %2631 = vmatpush1.bf16.msra.mxu0 0
    %2632 = vmatprep.subr.bf16.mxu0 0
    %2633 = vmatpush1.bf16.msra.mxu0 0
    %2634 = vmatprep.mubr.bf16.mxu0 0
    %2635 = vmatmul.mubr.bf16.gmra.mrb[0].mxu0 %v2552
    %v2636 = vpop.f32.mrb[0].mxu0
    %v2637 = vadd.f32 0.0, %v2636
    %v2638 = vpop.f32.mrb[0].mxu0
    %v2639 = vpop.f32.mrb[0].mxu0
    %v2640 = vpop.f32.mrb[0].mxu0
    %2641 = vdwg.mxu0
    %v2642 = vadd.f32 %v2533, %v2637
    %s2643 = scalar_lea.vmem [#allocation8], 640
    %v2644 = vld [vmem:[%s2643] sm:$0xf]
    %v2645 = vld [vmem:[%s2643 + $0x4] sm:$0xf]
    %v2646 = vld [vmem:[%s2643 + $0x8] sm:$0xf]
    %v2647 = vld [vmem:[%s2643 + $0xc] sm:$0xf]
    %v2648 = vld [vmem:[%s2643 + $0x10] sm:$0xf]
    %v2649 = vld [vmem:[%s2643 + $0x14] sm:$0xf]
    %v2650 = vld [vmem:[%s2643 + $0x18] sm:$0xf]
    %v2651 = vld [vmem:[%s2643 + $0x1c] sm:$0xf]
    %v2652 = vld [vmem:[%s2643 + $0x20] sm:$0xf]
    %v2653 = vld [vmem:[%s2643 + $0x24] sm:$0xf]
    %v2654 = vld [vmem:[%s2643 + $0x28] sm:$0xf]
    %v2655 = vld [vmem:[%s2643 + $0x2c] sm:$0xf]
    %v2656 = vld [vmem:[%s2643 + $0x30] sm:$0xf]
    %v2657 = vld [vmem:[%s2643 + $0x34] sm:$0xf]
    %v2658 = vld [vmem:[%s2643 + $0x38] sm:$0xf]
    %v2659 = vld [vmem:[%s2643 + $0x3c] sm:$0xf]
    %v2676 = vunpack.c.l.b16 %v2644
    %v2677 = vunpack.c.l.b16 %v2645
    %v2678 = vunpack.c.l.b16 %v2646
    %v2679 = vunpack.c.l.b16 %v2647
    %v2680 = vunpack.c.l.b16 %v2648
    %v2681 = vunpack.c.l.b16 %v2649
    %v2682 = vunpack.c.l.b16 %v2650
    %v2683 = vunpack.c.l.b16 %v2651
    %v2684 = vunpack.c.l.b16 %v2652
    %v2685 = vunpack.c.l.b16 %v2653
    %v2686 = vunpack.c.l.b16 %v2654
    %v2687 = vunpack.c.l.b16 %v2655
    %v2688 = vunpack.c.l.b16 %v2656
    %v2689 = vunpack.c.l.b16 %v2657
    %v2690 = vunpack.c.l.b16 %v2658
    %v2691 = vunpack.c.l.b16 %v2659
    %v2692 = vpack.c.b16 %v2677, %v2676
    %v2693 = vpack.c.b16 %v2679, %v2678
    %v2694 = vpack.c.b16 %v2681, %v2680
    %v2695 = vpack.c.b16 %v2683, %v2682
    %v2696 = vpack.c.b16 %v2685, %v2684
    %v2697 = vpack.c.b16 %v2687, %v2686
    %v2698 = vpack.c.b16 %v2689, %v2688
    %v2699 = vpack.c.b16 %v2691, %v2690
    %2708 = vmatprep.subr.bf16.mxu0 0
    %2709 = vmatpush1.bf16.msra.mxu0 %v2692
    %2710 = vmatprep.subr.bf16.mxu0 0
    %2711 = vmatpush1.bf16.msra.mxu0 %v2693
    %2712 = vmatprep.subr.bf16.mxu0 0
    %2713 = vmatpush1.bf16.msra.mxu0 %v2694
    %2714 = vmatprep.subr.bf16.mxu0 0
    %2715 = vmatpush1.bf16.msra.mxu0 %v2695
    %2716 = vmatprep.subr.bf16.mxu0 0
    %2717 = vmatpush1.bf16.msra.mxu0 %v2696
    %2718 = vmatprep.subr.bf16.mxu0 0
    %2719 = vmatpush1.bf16.msra.mxu0 %v2697
    %2720 = vmatprep.subr.bf16.mxu0 0
    %2721 = vmatpush1.bf16.msra.mxu0 %v2698
    %2722 = vmatprep.subr.bf16.mxu0 0
    %2723 = vmatpush1.bf16.msra.mxu0 %v2699
    %2724 = vmatprep.subr.bf16.mxu0 0
    %2725 = vmatpush1.bf16.msra.mxu0 0
    %2726 = vmatprep.subr.bf16.mxu0 0
    %2727 = vmatpush1.bf16.msra.mxu0 0
    %2728 = vmatprep.subr.bf16.mxu0 0
    %2729 = vmatpush1.bf16.msra.mxu0 0
    %2730 = vmatprep.subr.bf16.mxu0 0
    %2731 = vmatpush1.bf16.msra.mxu0 0
    %2732 = vmatprep.subr.bf16.mxu0 0
    %2733 = vmatpush1.bf16.msra.mxu0 0
    %2734 = vmatprep.subr.bf16.mxu0 0
    %2735 = vmatpush1.bf16.msra.mxu0 0
    %2736 = vmatprep.subr.bf16.mxu0 0
    %2737 = vmatpush1.bf16.msra.mxu0 0
    %2738 = vmatprep.subr.bf16.mxu0 0
    %2739 = vmatpush1.bf16.msra.mxu0 0
    %2740 = vmatprep.mubr.bf16.mxu0 0
    %2741 = vmatmul.mubr.bf16.gmra.mrb[0].mxu0 %v1558
    %v2742 = vpop.f32.mrb[0].mxu0
    %v2743 = vadd.f32 0.0, %v2742
    %v2744 = vpop.f32.mrb[0].mxu0
    %v2745 = vpop.f32.mrb[0].mxu0
    %v2746 = vpop.f32.mrb[0].mxu0
    %2747 = vdwg.mxu0
    %v2748 = vadd.f32 %v2642, %v2743
    %s2749 = scalar_lea.vmem [#allocation8], 704
    %v2750 = vld [vmem:[%s2749] sm:$0xf]
    %v2751 = vld [vmem:[%s2749 + $0x4] sm:$0xf]
    %v2752 = vld [vmem:[%s2749 + $0x8] sm:$0xf]
    %v2753 = vld [vmem:[%s2749 + $0xc] sm:$0xf]
    %v2754 = vld [vmem:[%s2749 + $0x10] sm:$0xf]
    %v2755 = vld [vmem:[%s2749 + $0x14] sm:$0xf]
    %v2756 = vld [vmem:[%s2749 + $0x18] sm:$0xf]
    %v2757 = vld [vmem:[%s2749 + $0x1c] sm:$0xf]
    %v2758 = vld [vmem:[%s2749 + $0x20] sm:$0xf]
    %v2759 = vld [vmem:[%s2749 + $0x24] sm:$0xf]
    %v2760 = vld [vmem:[%s2749 + $0x28] sm:$0xf]
    %v2761 = vld [vmem:[%s2749 + $0x2c] sm:$0xf]
    %v2762 = vld [vmem:[%s2749 + $0x30] sm:$0xf]
    %v2763 = vld [vmem:[%s2749 + $0x34] sm:$0xf]
    %v2764 = vld [vmem:[%s2749 + $0x38] sm:$0xf]
    %v2765 = vld [vmem:[%s2749 + $0x3c] sm:$0xf]
    %v2767 = vrot.slane %v1558, 4
    %v2785 = vunpack.c.l.b16 %v2750
    %v2786 = vunpack.c.l.b16 %v2751
    %v2787 = vunpack.c.l.b16 %v2752
    %v2788 = vunpack.c.l.b16 %v2753
    %v2789 = vunpack.c.l.b16 %v2754
    %v2790 = vunpack.c.l.b16 %v2755
    %v2791 = vunpack.c.l.b16 %v2756
    %v2792 = vunpack.c.l.b16 %v2757
    %v2793 = vunpack.c.l.b16 %v2758
    %v2794 = vunpack.c.l.b16 %v2759
    %v2795 = vunpack.c.l.b16 %v2760
    %v2796 = vunpack.c.l.b16 %v2761
    %v2797 = vunpack.c.l.b16 %v2762
    %v2798 = vunpack.c.l.b16 %v2763
    %v2799 = vunpack.c.l.b16 %v2764
    %v2800 = vunpack.c.l.b16 %v2765
    %v2801 = vpack.c.b16 %v2786, %v2785
    %v2802 = vpack.c.b16 %v2788, %v2787
    %v2803 = vpack.c.b16 %v2790, %v2789
    %v2804 = vpack.c.b16 %v2792, %v2791
    %v2805 = vpack.c.b16 %v2794, %v2793
    %v2806 = vpack.c.b16 %v2796, %v2795
    %v2807 = vpack.c.b16 %v2798, %v2797
    %v2808 = vpack.c.b16 %v2800, %v2799
    %2817 = vmatprep.subr.bf16.mxu0 0
    %2818 = vmatpush1.bf16.msra.mxu0 %v2801
    %2819 = vmatprep.subr.bf16.mxu0 0
    %2820 = vmatpush1.bf16.msra.mxu0 %v2802
    %2821 = vmatprep.subr.bf16.mxu0 0
    %2822 = vmatpush1.bf16.msra.mxu0 %v2803
    %2823 = vmatprep.subr.bf16.mxu0 0
    %2824 = vmatpush1.bf16.msra.mxu0 %v2804
    %2825 = vmatprep.subr.bf16.mxu0 0
    %2826 = vmatpush1.bf16.msra.mxu0 %v2805
    %2827 = vmatprep.subr.bf16.mxu0 0
    %2828 = vmatpush1.bf16.msra.mxu0 %v2806
    %2829 = vmatprep.subr.bf16.mxu0 0
    %2830 = vmatpush1.bf16.msra.mxu0 %v2807
    %2831 = vmatprep.subr.bf16.mxu0 0
    %2832 = vmatpush1.bf16.msra.mxu0 %v2808
    %2833 = vmatprep.subr.bf16.mxu0 0
    %2834 = vmatpush1.bf16.msra.mxu0 0
    %2835 = vmatprep.subr.bf16.mxu0 0
    %2836 = vmatpush1.bf16.msra.mxu0 0
    %2837 = vmatprep.subr.bf16.mxu0 0
    %2838 = vmatpush1.bf16.msra.mxu0 0
    %2839 = vmatprep.subr.bf16.mxu0 0
    %2840 = vmatpush1.bf16.msra.mxu0 0
    %2841 = vmatprep.subr.bf16.mxu0 0
    %2842 = vmatpush1.bf16.msra.mxu0 0
    %2843 = vmatprep.subr.bf16.mxu0 0
    %2844 = vmatpush1.bf16.msra.mxu0 0
    %2845 = vmatprep.subr.bf16.mxu0 0
    %2846 = vmatpush1.bf16.msra.mxu0 0
    %2847 = vmatprep.subr.bf16.mxu0 0
    %2848 = vmatpush1.bf16.msra.mxu0 0
    %2849 = vmatprep.mubr.bf16.mxu0 0
    %2850 = vmatmul.mubr.bf16.gmra.mrb[0].mxu0 %v2767
    %v2851 = vpop.f32.mrb[0].mxu0
    %v2852 = vadd.f32 0.0, %v2851
    %v2853 = vpop.f32.mrb[0].mxu0
    %v2854 = vpop.f32.mrb[0].mxu0
    %v2855 = vpop.f32.mrb[0].mxu0
    %2856 = vdwg.mxu0
    %v2857 = vadd.f32 %v2748, %v2852
    %s2858 = scalar_lea.vmem [#allocation8], 768
    %v2859 = vld [vmem:[%s2858] sm:$0xf]
    %v2860 = vld [vmem:[%s2858 + $0x4] sm:$0xf]
    %v2861 = vld [vmem:[%s2858 + $0x8] sm:$0xf]
    %v2862 = vld [vmem:[%s2858 + $0xc] sm:$0xf]
    %v2863 = vld [vmem:[%s2858 + $0x10] sm:$0xf]
    %v2864 = vld [vmem:[%s2858 + $0x14] sm:$0xf]
    %v2865 = vld [vmem:[%s2858 + $0x18] sm:$0xf]
    %v2866 = vld [vmem:[%s2858 + $0x1c] sm:$0xf]
    %v2867 = vld [vmem:[%s2858 + $0x20] sm:$0xf]
    %v2868 = vld [vmem:[%s2858 + $0x24] sm:$0xf]
    %v2869 = vld [vmem:[%s2858 + $0x28] sm:$0xf]
    %v2870 = vld [vmem:[%s2858 + $0x2c] sm:$0xf]
    %v2871 = vld [vmem:[%s2858 + $0x30] sm:$0xf]
    %v2872 = vld [vmem:[%s2858 + $0x34] sm:$0xf]
    %v2873 = vld [vmem:[%s2858 + $0x38] sm:$0xf]
    %v2874 = vld [vmem:[%s2858 + $0x3c] sm:$0xf]
    %v2891 = vunpack.c.l.b16 %v2859
    %v2892 = vunpack.c.l.b16 %v2860
    %v2893 = vunpack.c.l.b16 %v2861
    %v2894 = vunpack.c.l.b16 %v2862
    %v2895 = vunpack.c.l.b16 %v2863
    %v2896 = vunpack.c.l.b16 %v2864
    %v2897 = vunpack.c.l.b16 %v2865
    %v2898 = vunpack.c.l.b16 %v2866
    %v2899 = vunpack.c.l.b16 %v2867
    %v2900 = vunpack.c.l.b16 %v2868
    %v2901 = vunpack.c.l.b16 %v2869
    %v2902 = vunpack.c.l.b16 %v2870
    %v2903 = vunpack.c.l.b16 %v2871
    %v2904 = vunpack.c.l.b16 %v2872
    %v2905 = vunpack.c.l.b16 %v2873
    %v2906 = vunpack.c.l.b16 %v2874
    %v2907 = vpack.c.b16 %v2892, %v2891
    %v2908 = vpack.c.b16 %v2894, %v2893
    %v2909 = vpack.c.b16 %v2896, %v2895
    %v2910 = vpack.c.b16 %v2898, %v2897
    %v2911 = vpack.c.b16 %v2900, %v2899
    %v2912 = vpack.c.b16 %v2902, %v2901
    %v2913 = vpack.c.b16 %v2904, %v2903
    %v2914 = vpack.c.b16 %v2906, %v2905
    %2923 = vmatprep.subr.bf16.mxu0 0
    %2924 = vmatpush1.bf16.msra.mxu0 %v2907
    %2925 = vmatprep.subr.bf16.mxu0 0
    %2926 = vmatpush1.bf16.msra.mxu0 %v2908
    %2927 = vmatprep.subr.bf16.mxu0 0
    %2928 = vmatpush1.bf16.msra.mxu0 %v2909
    %2929 = vmatprep.subr.bf16.mxu0 0
    %2930 = vmatpush1.bf16.msra.mxu0 %v2910
    %2931 = vmatprep.subr.bf16.mxu0 0
    %2932 = vmatpush1.bf16.msra.mxu0 %v2911
    %2933 = vmatprep.subr.bf16.mxu0 0
    %2934 = vmatpush1.bf16.msra.mxu0 %v2912
    %2935 = vmatprep.subr.bf16.mxu0 0
    %2936 = vmatpush1.bf16.msra.mxu0 %v2913
    %2937 = vmatprep.subr.bf16.mxu0 0
    %2938 = vmatpush1.bf16.msra.mxu0 %v2914
    %2939 = vmatprep.subr.bf16.mxu0 0
    %2940 = vmatpush1.bf16.msra.mxu0 0
    %2941 = vmatprep.subr.bf16.mxu0 0
    %2942 = vmatpush1.bf16.msra.mxu0 0
    %2943 = vmatprep.subr.bf16.mxu0 0
    %2944 = vmatpush1.bf16.msra.mxu0 0
    %2945 = vmatprep.subr.bf16.mxu0 0
    %2946 = vmatpush1.bf16.msra.mxu0 0
    %2947 = vmatprep.subr.bf16.mxu0 0
    %2948 = vmatpush1.bf16.msra.mxu0 0
    %2949 = vmatprep.subr.bf16.mxu0 0
    %2950 = vmatpush1.bf16.msra.mxu0 0
    %2951 = vmatprep.subr.bf16.mxu0 0
    %2952 = vmatpush1.bf16.msra.mxu0 0
    %2953 = vmatprep.subr.bf16.mxu0 0
    %2954 = vmatpush1.bf16.msra.mxu0 0
    %2955 = vmatprep.mubr.bf16.mxu0 0
    %2956 = vmatmul.mubr.bf16.gmra.mrb[0].mxu0 %v1559
    %v2957 = vpop.f32.mrb[0].mxu0
    %v2958 = vadd.f32 0.0, %v2957
    %v2959 = vpop.f32.mrb[0].mxu0
    %v2960 = vpop.f32.mrb[0].mxu0
    %v2961 = vpop.f32.mrb[0].mxu0
    %2962 = vdwg.mxu0
    %v2963 = vadd.f32 %v2857, %v2958
    %s2964 = scalar_lea.vmem [#allocation8], 832
    %v2965 = vld [vmem:[%s2964] sm:$0xf]
    %v2966 = vld [vmem:[%s2964 + $0x4] sm:$0xf]
    %v2967 = vld [vmem:[%s2964 + $0x8] sm:$0xf]
    %v2968 = vld [vmem:[%s2964 + $0xc] sm:$0xf]
    %v2969 = vld [vmem:[%s2964 + $0x10] sm:$0xf]
    %v2970 = vld [vmem:[%s2964 + $0x14] sm:$0xf]
    %v2971 = vld [vmem:[%s2964 + $0x18] sm:$0xf]
    %v2972 = vld [vmem:[%s2964 + $0x1c] sm:$0xf]
    %v2973 = vld [vmem:[%s2964 + $0x20] sm:$0xf]
    %v2974 = vld [vmem:[%s2964 + $0x24] sm:$0xf]
    %v2975 = vld [vmem:[%s2964 + $0x28] sm:$0xf]
    %v2976 = vld [vmem:[%s2964 + $0x2c] sm:$0xf]
    %v2977 = vld [vmem:[%s2964 + $0x30] sm:$0xf]
    %v2978 = vld [vmem:[%s2964 + $0x34] sm:$0xf]
    %v2979 = vld [vmem:[%s2964 + $0x38] sm:$0xf]
    %v2980 = vld [vmem:[%s2964 + $0x3c] sm:$0xf]
    %v2982 = vrot.slane %v1559, 4
    %v3000 = vunpack.c.l.b16 %v2965
    %v3001 = vunpack.c.l.b16 %v2966
    %v3002 = vunpack.c.l.b16 %v2967
    %v3003 = vunpack.c.l.b16 %v2968
    %v3004 = vunpack.c.l.b16 %v2969
    %v3005 = vunpack.c.l.b16 %v2970
    %v3006 = vunpack.c.l.b16 %v2971
    %v3007 = vunpack.c.l.b16 %v2972
    %v3008 = vunpack.c.l.b16 %v2973
    %v3009 = vunpack.c.l.b16 %v2974
    %v3010 = vunpack.c.l.b16 %v2975
    %v3011 = vunpack.c.l.b16 %v2976
    %v3012 = vunpack.c.l.b16 %v2977
    %v3013 = vunpack.c.l.b16 %v2978
    %v3014 = vunpack.c.l.b16 %v2979
    %v3015 = vunpack.c.l.b16 %v2980
    %v3016 = vpack.c.b16 %v3001, %v3000
    %v3017 = vpack.c.b16 %v3003, %v3002
    %v3018 = vpack.c.b16 %v3005, %v3004
    %v3019 = vpack.c.b16 %v3007, %v3006
    %v3020 = vpack.c.b16 %v3009, %v3008
    %v3021 = vpack.c.b16 %v3011, %v3010
    %v3022 = vpack.c.b16 %v3013, %v3012
    %v3023 = vpack.c.b16 %v3015, %v3014
    %3032 = vmatprep.subr.bf16.mxu0 0
    %3033 = vmatpush1.bf16.msra.mxu0 %v3016
    %3034 = vmatprep.subr.bf16.mxu0 0
    %3035 = vmatpush1.bf16.msra.mxu0 %v3017
    %3036 = vmatprep.subr.bf16.mxu0 0
    %3037 = vmatpush1.bf16.msra.mxu0 %v3018
    %3038 = vmatprep.subr.bf16.mxu0 0
    %3039 = vmatpush1.bf16.msra.mxu0 %v3019
    %3040 = vmatprep.subr.bf16.mxu0 0
    %3041 = vmatpush1.bf16.msra.mxu0 %v3020
    %3042 = vmatprep.subr.bf16.mxu0 0
    %3043 = vmatpush1.bf16.msra.mxu0 %v3021
    %3044 = vmatprep.subr.bf16.mxu0 0
    %3045 = vmatpush1.bf16.msra.mxu0 %v3022
    %3046 = vmatprep.subr.bf16.mxu0 0
    %3047 = vmatpush1.bf16.msra.mxu0 %v3023
    %3048 = vmatprep.subr.bf16.mxu0 0
    %3049 = vmatpush1.bf16.msra.mxu0 0
    %3050 = vmatprep.subr.bf16.mxu0 0
    %3051 = vmatpush1.bf16.msra.mxu0 0
    %3052 = vmatprep.subr.bf16.mxu0 0
    %3053 = vmatpush1.bf16.msra.mxu0 0
    %3054 = vmatprep.subr.bf16.mxu0 0
    %3055 = vmatpush1.bf16.msra.mxu0 0
    %3056 = vmatprep.subr.bf16.mxu0 0
    %3057 = vmatpush1.bf16.msra.mxu0 0
    %3058 = vmatprep.subr.bf16.mxu0 0
    %3059 = vmatpush1.bf16.msra.mxu0 0
    %3060 = vmatprep.subr.bf16.mxu0 0
    %3061 = vmatpush1.bf16.msra.mxu0 0
    %3062 = vmatprep.subr.bf16.mxu0 0
    %3063 = vmatpush1.bf16.msra.mxu0 0
    %3064 = vmatprep.mubr.bf16.mxu0 0
    %3065 = vmatmul.mubr.bf16.gmra.mrb[0].mxu0 %v2982
    %v3066 = vpop.f32.mrb[0].mxu0
    %v3067 = vadd.f32 0.0, %v3066
    %v3068 = vpop.f32.mrb[0].mxu0
    %v3069 = vpop.f32.mrb[0].mxu0
    %v3070 = vpop.f32.mrb[0].mxu0
    %3071 = vdwg.mxu0
    %v3072 = vadd.f32 %v2963, %v3067
    %s3073 = scalar_lea.vmem [#allocation8], 896
    %v3074 = vld [vmem:[%s3073] sm:$0xf]
    %v3075 = vld [vmem:[%s3073 + $0x4] sm:$0xf]
    %v3076 = vld [vmem:[%s3073 + $0x8] sm:$0xf]
    %v3077 = vld [vmem:[%s3073 + $0xc] sm:$0xf]
    %v3078 = vld [vmem:[%s3073 + $0x10] sm:$0xf]
    %v3079 = vld [vmem:[%s3073 + $0x14] sm:$0xf]
    %v3080 = vld [vmem:[%s3073 + $0x18] sm:$0xf]
    %v3081 = vld [vmem:[%s3073 + $0x1c] sm:$0xf]
    %v3082 = vld [vmem:[%s3073 + $0x20] sm:$0xf]
    %v3083 = vld [vmem:[%s3073 + $0x24] sm:$0xf]
    %v3084 = vld [vmem:[%s3073 + $0x28] sm:$0xf]
    %v3085 = vld [vmem:[%s3073 + $0x2c] sm:$0xf]
    %v3086 = vld [vmem:[%s3073 + $0x30] sm:$0xf]
    %v3087 = vld [vmem:[%s3073 + $0x34] sm:$0xf]
    %v3088 = vld [vmem:[%s3073 + $0x38] sm:$0xf]
    %v3089 = vld [vmem:[%s3073 + $0x3c] sm:$0xf]
    %v3106 = vunpack.c.l.b16 %v3074
    %v3107 = vunpack.c.l.b16 %v3075
    %v3108 = vunpack.c.l.b16 %v3076
    %v3109 = vunpack.c.l.b16 %v3077
    %v3110 = vunpack.c.l.b16 %v3078
    %v3111 = vunpack.c.l.b16 %v3079
    %v3112 = vunpack.c.l.b16 %v3080
    %v3113 = vunpack.c.l.b16 %v3081
    %v3114 = vunpack.c.l.b16 %v3082
    %v3115 = vunpack.c.l.b16 %v3083
    %v3116 = vunpack.c.l.b16 %v3084
    %v3117 = vunpack.c.l.b16 %v3085
    %v3118 = vunpack.c.l.b16 %v3086
    %v3119 = vunpack.c.l.b16 %v3087
    %v3120 = vunpack.c.l.b16 %v3088
    %v3121 = vunpack.c.l.b16 %v3089
    %v3122 = vpack.c.b16 %v3107, %v3106
    %v3123 = vpack.c.b16 %v3109, %v3108
    %v3124 = vpack.c.b16 %v3111, %v3110
    %v3125 = vpack.c.b16 %v3113, %v3112
    %v3126 = vpack.c.b16 %v3115, %v3114
    %v3127 = vpack.c.b16 %v3117, %v3116
    %v3128 = vpack.c.b16 %v3119, %v3118
    %v3129 = vpack.c.b16 %v3121, %v3120
    %3138 = vmatprep.subr.bf16.mxu0 0
    %3139 = vmatpush1.bf16.msra.mxu0 %v3122
    %3140 = vmatprep.subr.bf16.mxu0 0
    %3141 = vmatpush1.bf16.msra.mxu0 %v3123
    %3142 = vmatprep.subr.bf16.mxu0 0
    %3143 = vmatpush1.bf16.msra.mxu0 %v3124
    %3144 = vmatprep.subr.bf16.mxu0 0
    %3145 = vmatpush1.bf16.msra.mxu0 %v3125
    %3146 = vmatprep.subr.bf16.mxu0 0
    %3147 = vmatpush1.bf16.msra.mxu0 %v3126
    %3148 = vmatprep.subr.bf16.mxu0 0
    %3149 = vmatpush1.bf16.msra.mxu0 %v3127
    %3150 = vmatprep.subr.bf16.mxu0 0
    %3151 = vmatpush1.bf16.msra.mxu0 %v3128
    %3152 = vmatprep.subr.bf16.mxu0 0
    %3153 = vmatpush1.bf16.msra.mxu0 %v3129
    %3154 = vmatprep.subr.bf16.mxu0 0
    %3155 = vmatpush1.bf16.msra.mxu0 0
    %3156 = vmatprep.subr.bf16.mxu0 0
    %3157 = vmatpush1.bf16.msra.mxu0 0
    %3158 = vmatprep.subr.bf16.mxu0 0
    %3159 = vmatpush1.bf16.msra.mxu0 0
    %3160 = vmatprep.subr.bf16.mxu0 0
    %3161 = vmatpush1.bf16.msra.mxu0 0
    %3162 = vmatprep.subr.bf16.mxu0 0
    %3163 = vmatpush1.bf16.msra.mxu0 0
    %3164 = vmatprep.subr.bf16.mxu0 0
    %3165 = vmatpush1.bf16.msra.mxu0 0
    %3166 = vmatprep.subr.bf16.mxu0 0
    %3167 = vmatpush1.bf16.msra.mxu0 0
    %3168 = vmatprep.subr.bf16.mxu0 0
    %3169 = vmatpush1.bf16.msra.mxu0 0
    %3170 = vmatprep.mubr.bf16.mxu0 0
    %3171 = vmatmul.mubr.bf16.gmra.mrb[0].mxu0 %v1560
    %v3172 = vpop.f32.mrb[0].mxu0
    %v3173 = vadd.f32 0.0, %v3172
    %v3174 = vpop.f32.mrb[0].mxu0
    %v3175 = vpop.f32.mrb[0].mxu0
    %v3176 = vpop.f32.mrb[0].mxu0
    %3177 = vdwg.mxu0
    %v3178 = vadd.f32 %v3072, %v3173
    %s3179 = scalar_lea.vmem [#allocation8], 960
    %v3180 = vld [vmem:[%s3179] sm:$0xf]
    %v3181 = vld [vmem:[%s3179 + $0x4] sm:$0xf]
    %v3182 = vld [vmem:[%s3179 + $0x8] sm:$0xf]
    %v3183 = vld [vmem:[%s3179 + $0xc] sm:$0xf]
    %v3184 = vld [vmem:[%s3179 + $0x10] sm:$0xf]
    %v3185 = vld [vmem:[%s3179 + $0x14] sm:$0xf]
    %v3186 = vld [vmem:[%s3179 + $0x18] sm:$0xf]
    %v3187 = vld [vmem:[%s3179 + $0x1c] sm:$0xf]
    %v3188 = vld [vmem:[%s3179 + $0x20] sm:$0xf]
    %v3189 = vld [vmem:[%s3179 + $0x24] sm:$0xf]
    %v3190 = vld [vmem:[%s3179 + $0x28] sm:$0xf]
    %v3191 = vld [vmem:[%s3179 + $0x2c] sm:$0xf]
    %v3192 = vld [vmem:[%s3179 + $0x30] sm:$0xf]
    %v3193 = vld [vmem:[%s3179 + $0x34] sm:$0xf]
    %v3194 = vld [vmem:[%s3179 + $0x38] sm:$0xf]
    %v3195 = vld [vmem:[%s3179 + $0x3c] sm:$0xf]
    %v3197 = vrot.slane %v1560, 4
    %v3215 = vunpack.c.l.b16 %v3180
    %v3216 = vunpack.c.l.b16 %v3181
    %v3217 = vunpack.c.l.b16 %v3182
    %v3218 = vunpack.c.l.b16 %v3183
    %v3219 = vunpack.c.l.b16 %v3184
    %v3220 = vunpack.c.l.b16 %v3185
    %v3221 = vunpack.c.l.b16 %v3186
    %v3222 = vunpack.c.l.b16 %v3187
    %v3223 = vunpack.c.l.b16 %v3188
    %v3224 = vunpack.c.l.b16 %v3189
    %v3225 = vunpack.c.l.b16 %v3190
    %v3226 = vunpack.c.l.b16 %v3191
    %v3227 = vunpack.c.l.b16 %v3192
    %v3228 = vunpack.c.l.b16 %v3193
    %v3229 = vunpack.c.l.b16 %v3194
    %v3230 = vunpack.c.l.b16 %v3195
    %v3231 = vpack.c.b16 %v3216, %v3215
    %v3232 = vpack.c.b16 %v3218, %v3217
    %v3233 = vpack.c.b16 %v3220, %v3219
    %v3234 = vpack.c.b16 %v3222, %v3221
    %v3235 = vpack.c.b16 %v3224, %v3223
    %v3236 = vpack.c.b16 %v3226, %v3225
    %v3237 = vpack.c.b16 %v3228, %v3227
    %v3238 = vpack.c.b16 %v3230, %v3229
    %3247 = vmatprep.subr.bf16.mxu0 0
    %3248 = vmatpush1.bf16.msra.mxu0 %v3231
    %3249 = vmatprep.subr.bf16.mxu0 0
    %3250 = vmatpush1.bf16.msra.mxu0 %v3232
    %3251 = vmatprep.subr.bf16.mxu0 0
    %3252 = vmatpush1.bf16.msra.mxu0 %v3233
    %3253 = vmatprep.subr.bf16.mxu0 0
    %3254 = vmatpush1.bf16.msra.mxu0 %v3234
    %3255 = vmatprep.subr.bf16.mxu0 0
    %3256 = vmatpush1.bf16.msra.mxu0 %v3235
    %3257 = vmatprep.subr.bf16.mxu0 0
    %3258 = vmatpush1.bf16.msra.mxu0 %v3236
    %3259 = vmatprep.subr.bf16.mxu0 0
    %3260 = vmatpush1.bf16.msra.mxu0 %v3237
    %3261 = vmatprep.subr.bf16.mxu0 0
    %3262 = vmatpush1.bf16.msra.mxu0 %v3238
    %3263 = vmatprep.subr.bf16.mxu0 0
    %3264 = vmatpush1.bf16.msra.mxu0 0
    %3265 = vmatprep.subr.bf16.mxu0 0
    %3266 = vmatpush1.bf16.msra.mxu0 0
    %3267 = vmatprep.subr.bf16.mxu0 0
    %3268 = vmatpush1.bf16.msra.mxu0 0
    %3269 = vmatprep.subr.bf16.mxu0 0
    %3270 = vmatpush1.bf16.msra.mxu0 0
    %3271 = vmatprep.subr.bf16.mxu0 0
    %3272 = vmatpush1.bf16.msra.mxu0 0
    %3273 = vmatprep.subr.bf16.mxu0 0
    %3274 = vmatpush1.bf16.msra.mxu0 0
    %3275 = vmatprep.subr.bf16.mxu0 0
    %3276 = vmatpush1.bf16.msra.mxu0 0
    %3277 = vmatprep.subr.bf16.mxu0 0
    %3278 = vmatpush1.bf16.msra.mxu0 0
    %3279 = vmatprep.mubr.bf16.mxu0 0
    %3280 = vmatmul.mubr.bf16.gmra.mrb[0].mxu0 %v3197
    %v3281 = vpop.f32.mrb[0].mxu0
    %v3282 = vadd.f32 0.0, %v3281
    %v3283 = vpop.f32.mrb[0].mxu0
    %v3284 = vpop.f32.mrb[0].mxu0
    %v3285 = vpop.f32.mrb[0].mxu0
    %3286 = vdwg.mxu0
    %v3287 = vadd.f32 %v3178, %v3282
    %s3288 = scalar_lea.vmem [#allocation8], 1024
    %v3289 = vld [vmem:[%s3288] sm:$0xf]
    %v3290 = vld [vmem:[%s3288 + $0x4] sm:$0xf]
    %v3291 = vld [vmem:[%s3288 + $0x8] sm:$0xf]
    %v3292 = vld [vmem:[%s3288 + $0xc] sm:$0xf]
    %v3293 = vld [vmem:[%s3288 + $0x10] sm:$0xf]
    %v3294 = vld [vmem:[%s3288 + $0x14] sm:$0xf]
    %v3295 = vld [vmem:[%s3288 + $0x18] sm:$0xf]
    %v3296 = vld [vmem:[%s3288 + $0x1c] sm:$0xf]
    %v3297 = vld [vmem:[%s3288 + $0x20] sm:$0xf]
    %v3298 = vld [vmem:[%s3288 + $0x24] sm:$0xf]
    %v3299 = vld [vmem:[%s3288 + $0x28] sm:$0xf]
    %v3300 = vld [vmem:[%s3288 + $0x2c] sm:$0xf]
    %v3301 = vld [vmem:[%s3288 + $0x30] sm:$0xf]
    %v3302 = vld [vmem:[%s3288 + $0x34] sm:$0xf]
    %v3303 = vld [vmem:[%s3288 + $0x38] sm:$0xf]
    %v3304 = vld [vmem:[%s3288 + $0x3c] sm:$0xf]
    %v3321 = vunpack.c.l.b16 %v3289
    %v3322 = vunpack.c.l.b16 %v3290
    %v3323 = vunpack.c.l.b16 %v3291
    %v3324 = vunpack.c.l.b16 %v3292
    %v3325 = vunpack.c.l.b16 %v3293
    %v3326 = vunpack.c.l.b16 %v3294
    %v3327 = vunpack.c.l.b16 %v3295
    %v3328 = vunpack.c.l.b16 %v3296
    %v3329 = vunpack.c.l.b16 %v3297
    %v3330 = vunpack.c.l.b16 %v3298
    %v3331 = vunpack.c.l.b16 %v3299
    %v3332 = vunpack.c.l.b16 %v3300
    %v3333 = vunpack.c.l.b16 %v3301
    %v3334 = vunpack.c.l.b16 %v3302
    %v3335 = vunpack.c.l.b16 %v3303
    %v3336 = vunpack.c.l.b16 %v3304
    %v3337 = vpack.c.b16 %v3322, %v3321
    %v3338 = vpack.c.b16 %v3324, %v3323
    %v3339 = vpack.c.b16 %v3326, %v3325
    %v3340 = vpack.c.b16 %v3328, %v3327
    %v3341 = vpack.c.b16 %v3330, %v3329
    %v3342 = vpack.c.b16 %v3332, %v3331
    %v3343 = vpack.c.b16 %v3334, %v3333
    %v3344 = vpack.c.b16 %v3336, %v3335
    %3353 = vmatprep.subr.bf16.mxu0 0
    %3354 = vmatpush1.bf16.msra.mxu0 %v3337
    %3355 = vmatprep.subr.bf16.mxu0 0
    %3356 = vmatpush1.bf16.msra.mxu0 %v3338
    %3357 = vmatprep.subr.bf16.mxu0 0
    %3358 = vmatpush1.bf16.msra.mxu0 %v3339
    %3359 = vmatprep.subr.bf16.mxu0 0
    %3360 = vmatpush1.bf16.msra.mxu0 %v3340
    %3361 = vmatprep.subr.bf16.mxu0 0
    %3362 = vmatpush1.bf16.msra.mxu0 %v3341
    %3363 = vmatprep.subr.bf16.mxu0 0
    %3364 = vmatpush1.bf16.msra.mxu0 %v3342
    %3365 = vmatprep.subr.bf16.mxu0 0
    %3366 = vmatpush1.bf16.msra.mxu0 %v3343
    %3367 = vmatprep.subr.bf16.mxu0 0
    %3368 = vmatpush1.bf16.msra.mxu0 %v3344
    %3369 = vmatprep.subr.bf16.mxu0 0
    %3370 = vmatpush1.bf16.msra.mxu0 0
    %3371 = vmatprep.subr.bf16.mxu0 0
    %3372 = vmatpush1.bf16.msra.mxu0 0
    %3373 = vmatprep.subr.bf16.mxu0 0
    %3374 = vmatpush1.bf16.msra.mxu0 0
    %3375 = vmatprep.subr.bf16.mxu0 0
    %3376 = vmatpush1.bf16.msra.mxu0 0
    %3377 = vmatprep.subr.bf16.mxu0 0
    %3378 = vmatpush1.bf16.msra.mxu0 0
    %3379 = vmatprep.subr.bf16.mxu0 0
    %3380 = vmatpush1.bf16.msra.mxu0 0
    %3381 = vmatprep.subr.bf16.mxu0 0
    %3382 = vmatpush1.bf16.msra.mxu0 0
    %3383 = vmatprep.subr.bf16.mxu0 0
    %3384 = vmatpush1.bf16.msra.mxu0 0
    %3385 = vmatprep.mubr.bf16.mxu0 0
    %3386 = vmatmul.mubr.bf16.gmra.mrb[0].mxu0 %v1561
    %v3387 = vpop.f32.mrb[0].mxu0
    %v3388 = vadd.f32 0.0, %v3387
    %v3389 = vpop.f32.mrb[0].mxu0
    %v3390 = vpop.f32.mrb[0].mxu0
    %v3391 = vpop.f32.mrb[0].mxu0
    %3392 = vdwg.mxu0
    %v3393 = vadd.f32 %v3287, %v3388
    %s3394 = scalar_lea.vmem [#allocation8], 1088
    %v3395 = vld [vmem:[%s3394] sm:$0xf]
    %v3396 = vld [vmem:[%s3394 + $0x4] sm:$0xf]
    %v3397 = vld [vmem:[%s3394 + $0x8] sm:$0xf]
    %v3398 = vld [vmem:[%s3394 + $0xc] sm:$0xf]
    %v3399 = vld [vmem:[%s3394 + $0x10] sm:$0xf]
    %v3400 = vld [vmem:[%s3394 + $0x14] sm:$0xf]
    %v3401 = vld [vmem:[%s3394 + $0x18] sm:$0xf]
    %v3402 = vld [vmem:[%s3394 + $0x1c] sm:$0xf]
    %v3403 = vld [vmem:[%s3394 + $0x20] sm:$0xf]
    %v3404 = vld [vmem:[%s3394 + $0x24] sm:$0xf]
    %v3405 = vld [vmem:[%s3394 + $0x28] sm:$0xf]
    %v3406 = vld [vmem:[%s3394 + $0x2c] sm:$0xf]
    %v3407 = vld [vmem:[%s3394 + $0x30] sm:$0xf]
    %v3408 = vld [vmem:[%s3394 + $0x34] sm:$0xf]
    %v3409 = vld [vmem:[%s3394 + $0x38] sm:$0xf]
    %v3410 = vld [vmem:[%s3394 + $0x3c] sm:$0xf]
    %v3412 = vrot.slane %v1561, 4
    %v3430 = vunpack.c.l.b16 %v3395
    %v3431 = vunpack.c.l.b16 %v3396
    %v3432 = vunpack.c.l.b16 %v3397
    %v3433 = vunpack.c.l.b16 %v3398
    %v3434 = vunpack.c.l.b16 %v3399
    %v3435 = vunpack.c.l.b16 %v3400
    %v3436 = vunpack.c.l.b16 %v3401
    %v3437 = vunpack.c.l.b16 %v3402
    %v3438 = vunpack.c.l.b16 %v3403
    %v3439 = vunpack.c.l.b16 %v3404
    %v3440 = vunpack.c.l.b16 %v3405
    %v3441 = vunpack.c.l.b16 %v3406
    %v3442 = vunpack.c.l.b16 %v3407
    %v3443 = vunpack.c.l.b16 %v3408
    %v3444 = vunpack.c.l.b16 %v3409
    %v3445 = vunpack.c.l.b16 %v3410
    %v3446 = vpack.c.b16 %v3431, %v3430
    %v3447 = vpack.c.b16 %v3433, %v3432
    %v3448 = vpack.c.b16 %v3435, %v3434
    %v3449 = vpack.c.b16 %v3437, %v3436
    %v3450 = vpack.c.b16 %v3439, %v3438
    %v3451 = vpack.c.b16 %v3441, %v3440
    %v3452 = vpack.c.b16 %v3443, %v3442
    %v3453 = vpack.c.b16 %v3445, %v3444
    %3462 = vmatprep.subr.bf16.mxu0 0
    %3463 = vmatpush1.bf16.msra.mxu0 %v3446
    %3464 = vmatprep.subr.bf16.mxu0 0
    %3465 = vmatpush1.bf16.msra.mxu0 %v3447
    %3466 = vmatprep.subr.bf16.mxu0 0
    %3467 = vmatpush1.bf16.msra.mxu0 %v3448
    %3468 = vmatprep.subr.bf16.mxu0 0
    %3469 = vmatpush1.bf16.msra.mxu0 %v3449
    %3470 = vmatprep.subr.bf16.mxu0 0
    %3471 = vmatpush1.bf16.msra.mxu0 %v3450
    %3472 = vmatprep.subr.bf16.mxu0 0
    %3473 = vmatpush1.bf16.msra.mxu0 %v3451
    %3474 = vmatprep.subr.bf16.mxu0 0
    %3475 = vmatpush1.bf16.msra.mxu0 %v3452
    %3476 = vmatprep.subr.bf16.mxu0 0
    %3477 = vmatpush1.bf16.msra.mxu0 %v3453
    %3478 = vmatprep.subr.bf16.mxu0 0
    %3479 = vmatpush1.bf16.msra.mxu0 0
    %3480 = vmatprep.subr.bf16.mxu0 0
    %3481 = vmatpush1.bf16.msra.mxu0 0
    %3482 = vmatprep.subr.bf16.mxu0 0
    %3483 = vmatpush1.bf16.msra.mxu0 0
    %3484 = vmatprep.subr.bf16.mxu0 0
    %3485 = vmatpush1.bf16.msra.mxu0 0
    %3486 = vmatprep.subr.bf16.mxu0 0
    %3487 = vmatpush1.bf16.msra.mxu0 0
    %3488 = vmatprep.subr.bf16.mxu0 0
    %3489 = vmatpush1.bf16.msra.mxu0 0
    %3490 = vmatprep.subr.bf16.mxu0 0
    %3491 = vmatpush1.bf16.msra.mxu0 0
    %3492 = vmatprep.subr.bf16.mxu0 0
    %3493 = vmatpush1.bf16.msra.mxu0 0
    %3494 = vmatprep.mubr.bf16.mxu0 0
    %3495 = vmatmul.mubr.bf16.gmra.mrb[0].mxu0 %v3412
    %v3496 = vpop.f32.mrb[0].mxu0
    %v3497 = vadd.f32 0.0, %v3496
    %v3498 = vpop.f32.mrb[0].mxu0
    %v3499 = vpop.f32.mrb[0].mxu0
    %v3500 = vpop.f32.mrb[0].mxu0
    %3501 = vdwg.mxu0
    %v3502 = vadd.f32 %v3393, %v3497
    %s3503 = scalar_lea.vmem [#allocation8], 1152
    %v3504 = vld [vmem:[%s3503] sm:$0xf]
    %v3505 = vld [vmem:[%s3503 + $0x4] sm:$0xf]
    %v3506 = vld [vmem:[%s3503 + $0x8] sm:$0xf]
    %v3507 = vld [vmem:[%s3503 + $0xc] sm:$0xf]
    %v3508 = vld [vmem:[%s3503 + $0x10] sm:$0xf]
    %v3509 = vld [vmem:[%s3503 + $0x14] sm:$0xf]
    %v3510 = vld [vmem:[%s3503 + $0x18] sm:$0xf]
    %v3511 = vld [vmem:[%s3503 + $0x1c] sm:$0xf]
    %v3512 = vld [vmem:[%s3503 + $0x20] sm:$0xf]
    %v3513 = vld [vmem:[%s3503 + $0x24] sm:$0xf]
    %v3514 = vld [vmem:[%s3503 + $0x28] sm:$0xf]
    %v3515 = vld [vmem:[%s3503 + $0x2c] sm:$0xf]
    %v3516 = vld [vmem:[%s3503 + $0x30] sm:$0xf]
    %v3517 = vld [vmem:[%s3503 + $0x34] sm:$0xf]
    %v3518 = vld [vmem:[%s3503 + $0x38] sm:$0xf]
    %v3519 = vld [vmem:[%s3503 + $0x3c] sm:$0xf]
    %v3536 = vunpack.c.l.b16 %v3504
    %v3537 = vunpack.c.l.b16 %v3505
    %v3538 = vunpack.c.l.b16 %v3506
    %v3539 = vunpack.c.l.b16 %v3507
    %v3540 = vunpack.c.l.b16 %v3508
    %v3541 = vunpack.c.l.b16 %v3509
    %v3542 = vunpack.c.l.b16 %v3510
    %v3543 = vunpack.c.l.b16 %v3511
    %v3544 = vunpack.c.l.b16 %v3512
    %v3545 = vunpack.c.l.b16 %v3513
    %v3546 = vunpack.c.l.b16 %v3514
    %v3547 = vunpack.c.l.b16 %v3515
    %v3548 = vunpack.c.l.b16 %v3516
    %v3549 = vunpack.c.l.b16 %v3517
    %v3550 = vunpack.c.l.b16 %v3518
    %v3551 = vunpack.c.l.b16 %v3519
    %v3552 = vpack.c.b16 %v3537, %v3536
    %v3553 = vpack.c.b16 %v3539, %v3538
    %v3554 = vpack.c.b16 %v3541, %v3540
    %v3555 = vpack.c.b16 %v3543, %v3542
    %v3556 = vpack.c.b16 %v3545, %v3544
    %v3557 = vpack.c.b16 %v3547, %v3546
    %v3558 = vpack.c.b16 %v3549, %v3548
    %v3559 = vpack.c.b16 %v3551, %v3550
    %3568 = vmatprep.subr.bf16.mxu0 0
    %3569 = vmatpush1.bf16.msra.mxu0 %v3552
    %3570 = vmatprep.subr.bf16.mxu0 0
    %3571 = vmatpush1.bf16.msra.mxu0 %v3553
    %3572 = vmatprep.subr.bf16.mxu0 0
    %3573 = vmatpush1.bf16.msra.mxu0 %v3554
    %3574 = vmatprep.subr.bf16.mxu0 0
    %3575 = vmatpush1.bf16.msra.mxu0 %v3555
    %3576 = vmatprep.subr.bf16.mxu0 0
    %3577 = vmatpush1.bf16.msra.mxu0 %v3556
    %3578 = vmatprep.subr.bf16.mxu0 0
    %3579 = vmatpush1.bf16.msra.mxu0 %v3557
    %3580 = vmatprep.subr.bf16.mxu0 0
    %3581 = vmatpush1.bf16.msra.mxu0 %v3558
    %3582 = vmatprep.subr.bf16.mxu0 0
    %3583 = vmatpush1.bf16.msra.mxu0 %v3559
    %3584 = vmatprep.subr.bf16.mxu0 0
    %3585 = vmatpush1.bf16.msra.mxu0 0
    %3586 = vmatprep.subr.bf16.mxu0 0
    %3587 = vmatpush1.bf16.msra.mxu0 0
    %3588 = vmatprep.subr.bf16.mxu0 0
    %3589 = vmatpush1.bf16.msra.mxu0 0
    %3590 = vmatprep.subr.bf16.mxu0 0
    %3591 = vmatpush1.bf16.msra.mxu0 0
    %3592 = vmatprep.subr.bf16.mxu0 0
    %3593 = vmatpush1.bf16.msra.mxu0 0
    %3594 = vmatprep.subr.bf16.mxu0 0
    %3595 = vmatpush1.bf16.msra.mxu0 0
    %3596 = vmatprep.subr.bf16.mxu0 0
    %3597 = vmatpush1.bf16.msra.mxu0 0
    %3598 = vmatprep.subr.bf16.mxu0 0
    %3599 = vmatpush1.bf16.msra.mxu0 0
    %3600 = vmatprep.mubr.bf16.mxu0 0
    %3601 = vmatmul.mubr.bf16.gmra.mrb[0].mxu0 %v1562
    %v3602 = vpop.f32.mrb[0].mxu0
    %v3603 = vadd.f32 0.0, %v3602
    %v3604 = vpop.f32.mrb[0].mxu0
    %v3605 = vpop.f32.mrb[0].mxu0
    %v3606 = vpop.f32.mrb[0].mxu0
    %3607 = vdwg.mxu0
    %v3608 = vadd.f32 %v3502, %v3603
    %s3609 = scalar_lea.vmem [#allocation8], 1216
    %v3610 = vld [vmem:[%s3609] sm:$0xf]
    %v3611 = vld [vmem:[%s3609 + $0x4] sm:$0xf]
    %v3612 = vld [vmem:[%s3609 + $0x8] sm:$0xf]
    %v3613 = vld [vmem:[%s3609 + $0xc] sm:$0xf]
    %v3614 = vld [vmem:[%s3609 + $0x10] sm:$0xf]
    %v3615 = vld [vmem:[%s3609 + $0x14] sm:$0xf]
    %v3616 = vld [vmem:[%s3609 + $0x18] sm:$0xf]
    %v3617 = vld [vmem:[%s3609 + $0x1c] sm:$0xf]
    %v3618 = vld [vmem:[%s3609 + $0x20] sm:$0xf]
    %v3619 = vld [vmem:[%s3609 + $0x24] sm:$0xf]
    %v3620 = vld [vmem:[%s3609 + $0x28] sm:$0xf]
    %v3621 = vld [vmem:[%s3609 + $0x2c] sm:$0xf]
    %v3622 = vld [vmem:[%s3609 + $0x30] sm:$0xf]
    %v3623 = vld [vmem:[%s3609 + $0x34] sm:$0xf]
    %v3624 = vld [vmem:[%s3609 + $0x38] sm:$0xf]
    %v3625 = vld [vmem:[%s3609 + $0x3c] sm:$0xf]
    %v3627 = vrot.slane %v1562, 4
    %v3645 = vunpack.c.l.b16 %v3610
    %v3646 = vunpack.c.l.b16 %v3611
    %v3647 = vunpack.c.l.b16 %v3612
    %v3648 = vunpack.c.l.b16 %v3613
    %v3649 = vunpack.c.l.b16 %v3614
    %v3650 = vunpack.c.l.b16 %v3615
    %v3651 = vunpack.c.l.b16 %v3616
    %v3652 = vunpack.c.l.b16 %v3617
    %v3653 = vunpack.c.l.b16 %v3618
    %v3654 = vunpack.c.l.b16 %v3619
    %v3655 = vunpack.c.l.b16 %v3620
    %v3656 = vunpack.c.l.b16 %v3621
    %v3657 = vunpack.c.l.b16 %v3622
    %v3658 = vunpack.c.l.b16 %v3623
    %v3659 = vunpack.c.l.b16 %v3624
    %v3660 = vunpack.c.l.b16 %v3625
    %v3661 = vpack.c.b16 %v3646, %v3645
    %v3662 = vpack.c.b16 %v3648, %v3647
    %v3663 = vpack.c.b16 %v3650, %v3649
    %v3664 = vpack.c.b16 %v3652, %v3651
    %v3665 = vpack.c.b16 %v3654, %v3653
    %v3666 = vpack.c.b16 %v3656, %v3655
    %v3667 = vpack.c.b16 %v3658, %v3657
    %v3668 = vpack.c.b16 %v3660, %v3659
    %3677 = vmatprep.subr.bf16.mxu0 0
    %3678 = vmatpush1.bf16.msra.mxu0 %v3661
    %3679 = vmatprep.subr.bf16.mxu0 0
    %3680 = vmatpush1.bf16.msra.mxu0 %v3662
    %3681 = vmatprep.subr.bf16.mxu0 0
    %3682 = vmatpush1.bf16.msra.mxu0 %v3663
    %3683 = vmatprep.subr.bf16.mxu0 0
    %3684 = vmatpush1.bf16.msra.mxu0 %v3664
    %3685 = vmatprep.subr.bf16.mxu0 0
    %3686 = vmatpush1.bf16.msra.mxu0 %v3665
    %3687 = vmatprep.subr.bf16.mxu0 0
    %3688 = vmatpush1.bf16.msra.mxu0 %v3666
    %3689 = vmatprep.subr.bf16.mxu0 0
    %3690 = vmatpush1.bf16.msra.mxu0 %v3667
    %3691 = vmatprep.subr.bf16.mxu0 0
    %3692 = vmatpush1.bf16.msra.mxu0 %v3668
    %3693 = vmatprep.subr.bf16.mxu0 0
    %3694 = vmatpush1.bf16.msra.mxu0 0
    %3695 = vmatprep.subr.bf16.mxu0 0
    %3696 = vmatpush1.bf16.msra.mxu0 0
    %3697 = vmatprep.subr.bf16.mxu0 0
    %3698 = vmatpush1.bf16.msra.mxu0 0
    %3699 = vmatprep.subr.bf16.mxu0 0
    %3700 = vmatpush1.bf16.msra.mxu0 0
    %3701 = vmatprep.subr.bf16.mxu0 0
    %3702 = vmatpush1.bf16.msra.mxu0 0
    %3703 = vmatprep.subr.bf16.mxu0 0
    %3704 = vmatpush1.bf16.msra.mxu0 0
    %3705 = vmatprep.subr.bf16.mxu0 0
    %3706 = vmatpush1.bf16.msra.mxu0 0
    %3707 = vmatprep.subr.bf16.mxu0 0
    %3708 = vmatpush1.bf16.msra.mxu0 0
    %3709 = vmatprep.mubr.bf16.mxu0 0
    %3710 = vmatmul.mubr.bf16.gmra.mrb[0].mxu0 %v3627
    %v3711 = vpop.f32.mrb[0].mxu0
    %v3712 = vadd.f32 0.0, %v3711
    %v3713 = vpop.f32.mrb[0].mxu0
    %v3714 = vpop.f32.mrb[0].mxu0
    %v3715 = vpop.f32.mrb[0].mxu0
    %3716 = vdwg.mxu0
    %v3717 = vadd.f32 %v3608, %v3712
    %s3718 = scalar_lea.vmem [#allocation8], 1280
    %v3719 = vld [vmem:[%s3718] sm:$0xf]
    %v3720 = vld [vmem:[%s3718 + $0x4] sm:$0xf]
    %v3721 = vld [vmem:[%s3718 + $0x8] sm:$0xf]
    %v3722 = vld [vmem:[%s3718 + $0xc] sm:$0xf]
    %v3723 = vld [vmem:[%s3718 + $0x10] sm:$0xf]
    %v3724 = vld [vmem:[%s3718 + $0x14] sm:$0xf]
    %v3725 = vld [vmem:[%s3718 + $0x18] sm:$0xf]
    %v3726 = vld [vmem:[%s3718 + $0x1c] sm:$0xf]
    %v3727 = vld [vmem:[%s3718 + $0x20] sm:$0xf]
    %v3728 = vld [vmem:[%s3718 + $0x24] sm:$0xf]
    %v3729 = vld [vmem:[%s3718 + $0x28] sm:$0xf]
    %v3730 = vld [vmem:[%s3718 + $0x2c] sm:$0xf]
    %v3731 = vld [vmem:[%s3718 + $0x30] sm:$0xf]
    %v3732 = vld [vmem:[%s3718 + $0x34] sm:$0xf]
    %v3733 = vld [vmem:[%s3718 + $0x38] sm:$0xf]
    %v3734 = vld [vmem:[%s3718 + $0x3c] sm:$0xf]
    %v3751 = vunpack.c.l.b16 %v3719
    %v3752 = vunpack.c.l.b16 %v3720
    %v3753 = vunpack.c.l.b16 %v3721
    %v3754 = vunpack.c.l.b16 %v3722
    %v3755 = vunpack.c.l.b16 %v3723
    %v3756 = vunpack.c.l.b16 %v3724
    %v3757 = vunpack.c.l.b16 %v3725
    %v3758 = vunpack.c.l.b16 %v3726
    %v3759 = vunpack.c.l.b16 %v3727
    %v3760 = vunpack.c.l.b16 %v3728
    %v3761 = vunpack.c.l.b16 %v3729
    %v3762 = vunpack.c.l.b16 %v3730
    %v3763 = vunpack.c.l.b16 %v3731
    %v3764 = vunpack.c.l.b16 %v3732
    %v3765 = vunpack.c.l.b16 %v3733
    %v3766 = vunpack.c.l.b16 %v3734
    %v3767 = vpack.c.b16 %v3752, %v3751
    %v3768 = vpack.c.b16 %v3754, %v3753
    %v3769 = vpack.c.b16 %v3756, %v3755
    %v3770 = vpack.c.b16 %v3758, %v3757
    %v3771 = vpack.c.b16 %v3760, %v3759
    %v3772 = vpack.c.b16 %v3762, %v3761
    %v3773 = vpack.c.b16 %v3764, %v3763
    %v3774 = vpack.c.b16 %v3766, %v3765
    %3783 = vmatprep.subr.bf16.mxu0 0
    %3784 = vmatpush1.bf16.msra.mxu0 %v3767
    %3785 = vmatprep.subr.bf16.mxu0 0
    %3786 = vmatpush1.bf16.msra.mxu0 %v3768
    %3787 = vmatprep.subr.bf16.mxu0 0
    %3788 = vmatpush1.bf16.msra.mxu0 %v3769
    %3789 = vmatprep.subr.bf16.mxu0 0
    %3790 = vmatpush1.bf16.msra.mxu0 %v3770
    %3791 = vmatprep.subr.bf16.mxu0 0
    %3792 = vmatpush1.bf16.msra.mxu0 %v3771
    %3793 = vmatprep.subr.bf16.mxu0 0
    %3794 = vmatpush1.bf16.msra.mxu0 %v3772
    %3795 = vmatprep.subr.bf16.mxu0 0
    %3796 = vmatpush1.bf16.msra.mxu0 %v3773
    %3797 = vmatprep.subr.bf16.mxu0 0
    %3798 = vmatpush1.bf16.msra.mxu0 %v3774
    %3799 = vmatprep.subr.bf16.mxu0 0
    %3800 = vmatpush1.bf16.msra.mxu0 0
    %3801 = vmatprep.subr.bf16.mxu0 0
    %3802 = vmatpush1.bf16.msra.mxu0 0
    %3803 = vmatprep.subr.bf16.mxu0 0
    %3804 = vmatpush1.bf16.msra.mxu0 0
    %3805 = vmatprep.subr.bf16.mxu0 0
    %3806 = vmatpush1.bf16.msra.mxu0 0
    %3807 = vmatprep.subr.bf16.mxu0 0
    %3808 = vmatpush1.bf16.msra.mxu0 0
    %3809 = vmatprep.subr.bf16.mxu0 0
    %3810 = vmatpush1.bf16.msra.mxu0 0
    %3811 = vmatprep.subr.bf16.mxu0 0
    %3812 = vmatpush1.bf16.msra.mxu0 0
    %3813 = vmatprep.subr.bf16.mxu0 0
    %3814 = vmatpush1.bf16.msra.mxu0 0
    %3815 = vmatprep.mubr.bf16.mxu0 0
    %3816 = vmatmul.mubr.bf16.gmra.mrb[0].mxu0 %v1563
    %v3817 = vpop.f32.mrb[0].mxu0
    %v3818 = vadd.f32 0.0, %v3817
    %v3819 = vpop.f32.mrb[0].mxu0
    %v3820 = vpop.f32.mrb[0].mxu0
    %v3821 = vpop.f32.mrb[0].mxu0
    %3822 = vdwg.mxu0
    %v3823 = vadd.f32 %v3717, %v3818
    %s3824 = scalar_lea.vmem [#allocation8], 1344
    %v3825 = vld [vmem:[%s3824] sm:$0xf]
    %v3826 = vld [vmem:[%s3824 + $0x4] sm:$0xf]
    %v3827 = vld [vmem:[%s3824 + $0x8] sm:$0xf]
    %v3828 = vld [vmem:[%s3824 + $0xc] sm:$0xf]
    %v3829 = vld [vmem:[%s3824 + $0x10] sm:$0xf]
    %v3830 = vld [vmem:[%s3824 + $0x14] sm:$0xf]
    %v3831 = vld [vmem:[%s3824 + $0x18] sm:$0xf]
    %v3832 = vld [vmem:[%s3824 + $0x1c] sm:$0xf]
    %v3833 = vld [vmem:[%s3824 + $0x20] sm:$0xf]
    %v3834 = vld [vmem:[%s3824 + $0x24] sm:$0xf]
    %v3835 = vld [vmem:[%s3824 + $0x28] sm:$0xf]
    %v3836 = vld [vmem:[%s3824 + $0x2c] sm:$0xf]
    %v3837 = vld [vmem:[%s3824 + $0x30] sm:$0xf]
    %v3838 = vld [vmem:[%s3824 + $0x34] sm:$0xf]
    %v3839 = vld [vmem:[%s3824 + $0x38] sm:$0xf]
    %v3840 = vld [vmem:[%s3824 + $0x3c] sm:$0xf]
    %v3842 = vrot.slane %v1563, 4
    %v3860 = vunpack.c.l.b16 %v3825
    %v3861 = vunpack.c.l.b16 %v3826
    %v3862 = vunpack.c.l.b16 %v3827
    %v3863 = vunpack.c.l.b16 %v3828
    %v3864 = vunpack.c.l.b16 %v3829
    %v3865 = vunpack.c.l.b16 %v3830
    %v3866 = vunpack.c.l.b16 %v3831
    %v3867 = vunpack.c.l.b16 %v3832
    %v3868 = vunpack.c.l.b16 %v3833
    %v3869 = vunpack.c.l.b16 %v3834
    %v3870 = vunpack.c.l.b16 %v3835
    %v3871 = vunpack.c.l.b16 %v3836
    %v3872 = vunpack.c.l.b16 %v3837
    %v3873 = vunpack.c.l.b16 %v3838
    %v3874 = vunpack.c.l.b16 %v3839
    %v3875 = vunpack.c.l.b16 %v3840
    %v3876 = vpack.c.b16 %v3861, %v3860
    %v3877 = vpack.c.b16 %v3863, %v3862
    %v3878 = vpack.c.b16 %v3865, %v3864
    %v3879 = vpack.c.b16 %v3867, %v3866
    %v3880 = vpack.c.b16 %v3869, %v3868
    %v3881 = vpack.c.b16 %v3871, %v3870
    %v3882 = vpack.c.b16 %v3873, %v3872
    %v3883 = vpack.c.b16 %v3875, %v3874
    %3892 = vmatprep.subr.bf16.mxu0 0
    %3893 = vmatpush1.bf16.msra.mxu0 %v3876
    %3894 = vmatprep.subr.bf16.mxu0 0
    %3895 = vmatpush1.bf16.msra.mxu0 %v3877
    %3896 = vmatprep.subr.bf16.mxu0 0
    %3897 = vmatpush1.bf16.msra.mxu0 %v3878
    %3898 = vmatprep.subr.bf16.mxu0 0
    %3899 = vmatpush1.bf16.msra.mxu0 %v3879
    %3900 = vmatprep.subr.bf16.mxu0 0
    %3901 = vmatpush1.bf16.msra.mxu0 %v3880
    %3902 = vmatprep.subr.bf16.mxu0 0
    %3903 = vmatpush1.bf16.msra.mxu0 %v3881
    %3904 = vmatprep.subr.bf16.mxu0 0
    %3905 = vmatpush1.bf16.msra.mxu0 %v3882
    %3906 = vmatprep.subr.bf16.mxu0 0
    %3907 = vmatpush1.bf16.msra.mxu0 %v3883
    %3908 = vmatprep.subr.bf16.mxu0 0
    %3909 = vmatpush1.bf16.msra.mxu0 0
    %3910 = vmatprep.subr.bf16.mxu0 0
    %3911 = vmatpush1.bf16.msra.mxu0 0
    %3912 = vmatprep.subr.bf16.mxu0 0
    %3913 = vmatpush1.bf16.msra.mxu0 0
    %3914 = vmatprep.subr.bf16.mxu0 0
    %3915 = vmatpush1.bf16.msra.mxu0 0
    %3916 = vmatprep.subr.bf16.mxu0 0
    %3917 = vmatpush1.bf16.msra.mxu0 0
    %3918 = vmatprep.subr.bf16.mxu0 0
    %3919 = vmatpush1.bf16.msra.mxu0 0
    %3920 = vmatprep.subr.bf16.mxu0 0
    %3921 = vmatpush1.bf16.msra.mxu0 0
    %3922 = vmatprep.subr.bf16.mxu0 0
    %3923 = vmatpush1.bf16.msra.mxu0 0
    %3924 = vmatprep.mubr.bf16.mxu0 0
    %3925 = vmatmul.mubr.bf16.gmra.mrb[0].mxu0 %v3842
    %v3926 = vpop.f32.mrb[0].mxu0
    %v3927 = vadd.f32 0.0, %v3926
    %v3928 = vpop.f32.mrb[0].mxu0
    %v3929 = vpop.f32.mrb[0].mxu0
    %v3930 = vpop.f32.mrb[0].mxu0
    %3931 = vdwg.mxu0
    %v3932 = vadd.f32 %v3823, %v3927
    %s3933 = scalar_lea.vmem [#allocation8], 1408
    %v3934 = vld [vmem:[%s3933] sm:$0xf]
    %v3935 = vld [vmem:[%s3933 + $0x4] sm:$0xf]
    %v3936 = vld [vmem:[%s3933 + $0x8] sm:$0xf]
    %v3937 = vld [vmem:[%s3933 + $0xc] sm:$0xf]
    %v3938 = vld [vmem:[%s3933 + $0x10] sm:$0xf]
    %v3939 = vld [vmem:[%s3933 + $0x14] sm:$0xf]
    %v3940 = vld [vmem:[%s3933 + $0x18] sm:$0xf]
    %v3941 = vld [vmem:[%s3933 + $0x1c] sm:$0xf]
    %v3942 = vld [vmem:[%s3933 + $0x20] sm:$0xf]
    %v3943 = vld [vmem:[%s3933 + $0x24] sm:$0xf]
    %v3944 = vld [vmem:[%s3933 + $0x28] sm:$0xf]
    %v3945 = vld [vmem:[%s3933 + $0x2c] sm:$0xf]
    %v3946 = vld [vmem:[%s3933 + $0x30] sm:$0xf]
    %v3947 = vld [vmem:[%s3933 + $0x34] sm:$0xf]
    %v3948 = vld [vmem:[%s3933 + $0x38] sm:$0xf]
    %v3949 = vld [vmem:[%s3933 + $0x3c] sm:$0xf]
    %v3966 = vunpack.c.l.b16 %v3934
    %v3967 = vunpack.c.l.b16 %v3935
    %v3968 = vunpack.c.l.b16 %v3936
    %v3969 = vunpack.c.l.b16 %v3937
    %v3970 = vunpack.c.l.b16 %v3938
    %v3971 = vunpack.c.l.b16 %v3939
    %v3972 = vunpack.c.l.b16 %v3940
    %v3973 = vunpack.c.l.b16 %v3941
    %v3974 = vunpack.c.l.b16 %v3942
    %v3975 = vunpack.c.l.b16 %v3943
    %v3976 = vunpack.c.l.b16 %v3944
    %v3977 = vunpack.c.l.b16 %v3945
    %v3978 = vunpack.c.l.b16 %v3946
    %v3979 = vunpack.c.l.b16 %v3947
    %v3980 = vunpack.c.l.b16 %v3948
    %v3981 = vunpack.c.l.b16 %v3949
    %v3982 = vpack.c.b16 %v3967, %v3966
    %v3983 = vpack.c.b16 %v3969, %v3968
    %v3984 = vpack.c.b16 %v3971, %v3970
    %v3985 = vpack.c.b16 %v3973, %v3972
    %v3986 = vpack.c.b16 %v3975, %v3974
    %v3987 = vpack.c.b16 %v3977, %v3976
    %v3988 = vpack.c.b16 %v3979, %v3978
    %v3989 = vpack.c.b16 %v3981, %v3980
    %3998 = vmatprep.subr.bf16.mxu0 0
    %3999 = vmatpush1.bf16.msra.mxu0 %v3982
    %4000 = vmatprep.subr.bf16.mxu0 0
    %4001 = vmatpush1.bf16.msra.mxu0 %v3983
    %4002 = vmatprep.subr.bf16.mxu0 0
    %4003 = vmatpush1.bf16.msra.mxu0 %v3984
    %4004 = vmatprep.subr.bf16.mxu0 0
    %4005 = vmatpush1.bf16.msra.mxu0 %v3985
    %4006 = vmatprep.subr.bf16.mxu0 0
    %4007 = vmatpush1.bf16.msra.mxu0 %v3986
    %4008 = vmatprep.subr.bf16.mxu0 0
    %4009 = vmatpush1.bf16.msra.mxu0 %v3987
    %4010 = vmatprep.subr.bf16.mxu0 0
    %4011 = vmatpush1.bf16.msra.mxu0 %v3988
    %4012 = vmatprep.subr.bf16.mxu0 0
    %4013 = vmatpush1.bf16.msra.mxu0 %v3989
    %4014 = vmatprep.subr.bf16.mxu0 0
    %4015 = vmatpush1.bf16.msra.mxu0 0
    %4016 = vmatprep.subr.bf16.mxu0 0
    %4017 = vmatpush1.bf16.msra.mxu0 0
    %4018 = vmatprep.subr.bf16.mxu0 0
    %4019 = vmatpush1.bf16.msra.mxu0 0
    %4020 = vmatprep.subr.bf16.mxu0 0
    %4021 = vmatpush1.bf16.msra.mxu0 0
    %4022 = vmatprep.subr.bf16.mxu0 0
    %4023 = vmatpush1.bf16.msra.mxu0 0
    %4024 = vmatprep.subr.bf16.mxu0 0
    %4025 = vmatpush1.bf16.msra.mxu0 0
    %4026 = vmatprep.subr.bf16.mxu0 0
    %4027 = vmatpush1.bf16.msra.mxu0 0
    %4028 = vmatprep.subr.bf16.mxu0 0
    %4029 = vmatpush1.bf16.msra.mxu0 0
    %4030 = vmatprep.mubr.bf16.mxu0 0
    %4031 = vmatmul.mubr.bf16.gmra.mrb[0].mxu0 %v1564
    %v4032 = vpop.f32.mrb[0].mxu0
    %v4033 = vadd.f32 0.0, %v4032
    %v4034 = vpop.f32.mrb[0].mxu0
    %v4035 = vpop.f32.mrb[0].mxu0
    %v4036 = vpop.f32.mrb[0].mxu0
    %4037 = vdwg.mxu0
    %v4038 = vadd.f32 %v3932, %v4033
    %s4039 = scalar_lea.vmem [#allocation8], 1472
    %v4040 = vld [vmem:[%s4039] sm:$0xf]
    %v4041 = vld [vmem:[%s4039 + $0x4] sm:$0xf]
    %v4042 = vld [vmem:[%s4039 + $0x8] sm:$0xf]
    %v4043 = vld [vmem:[%s4039 + $0xc] sm:$0xf]
    %v4044 = vld [vmem:[%s4039 + $0x10] sm:$0xf]
    %v4045 = vld [vmem:[%s4039 + $0x14] sm:$0xf]
    %v4046 = vld [vmem:[%s4039 + $0x18] sm:$0xf]
    %v4047 = vld [vmem:[%s4039 + $0x1c] sm:$0xf]
    %v4048 = vld [vmem:[%s4039 + $0x20] sm:$0xf]
    %v4049 = vld [vmem:[%s4039 + $0x24] sm:$0xf]
    %v4050 = vld [vmem:[%s4039 + $0x28] sm:$0xf]
    %v4051 = vld [vmem:[%s4039 + $0x2c] sm:$0xf]
    %v4052 = vld [vmem:[%s4039 + $0x30] sm:$0xf]
    %v4053 = vld [vmem:[%s4039 + $0x34] sm:$0xf]
    %v4054 = vld [vmem:[%s4039 + $0x38] sm:$0xf]
    %v4055 = vld [vmem:[%s4039 + $0x3c] sm:$0xf]
    %v4057 = vrot.slane %v1564, 4
    %v4075 = vunpack.c.l.b16 %v4040
    %v4076 = vunpack.c.l.b16 %v4041
    %v4077 = vunpack.c.l.b16 %v4042
    %v4078 = vunpack.c.l.b16 %v4043
    %v4079 = vunpack.c.l.b16 %v4044
    %v4080 = vunpack.c.l.b16 %v4045
    %v4081 = vunpack.c.l.b16 %v4046
    %v4082 = vunpack.c.l.b16 %v4047
    %v4083 = vunpack.c.l.b16 %v4048
    %v4084 = vunpack.c.l.b16 %v4049
    %v4085 = vunpack.c.l.b16 %v4050
    %v4086 = vunpack.c.l.b16 %v4051
    %v4087 = vunpack.c.l.b16 %v4052
    %v4088 = vunpack.c.l.b16 %v4053
    %v4089 = vunpack.c.l.b16 %v4054
    %v4090 = vunpack.c.l.b16 %v4055
    %v4091 = vpack.c.b16 %v4076, %v4075
    %v4092 = vpack.c.b16 %v4078, %v4077
    %v4093 = vpack.c.b16 %v4080, %v4079
    %v4094 = vpack.c.b16 %v4082, %v4081
    %v4095 = vpack.c.b16 %v4084, %v4083
    %v4096 = vpack.c.b16 %v4086, %v4085
    %v4097 = vpack.c.b16 %v4088, %v4087
    %v4098 = vpack.c.b16 %v4090, %v4089
    %4107 = vmatprep.subr.bf16.mxu0 0
    %4108 = vmatpush1.bf16.msra.mxu0 %v4091
    %4109 = vmatprep.subr.bf16.mxu0 0
    %4110 = vmatpush1.bf16.msra.mxu0 %v4092
    %4111 = vmatprep.subr.bf16.mxu0 0
    %4112 = vmatpush1.bf16.msra.mxu0 %v4093
    %4113 = vmatprep.subr.bf16.mxu0 0
    %4114 = vmatpush1.bf16.msra.mxu0 %v4094
    %4115 = vmatprep.subr.bf16.mxu0 0
    %4116 = vmatpush1.bf16.msra.mxu0 %v4095
    %4117 = vmatprep.subr.bf16.mxu0 0
    %4118 = vmatpush1.bf16.msra.mxu0 %v4096
    %4119 = vmatprep.subr.bf16.mxu0 0
    %4120 = vmatpush1.bf16.msra.mxu0 %v4097
    %4121 = vmatprep.subr.bf16.mxu0 0
    %4122 = vmatpush1.bf16.msra.mxu0 %v4098
    %4123 = vmatprep.subr.bf16.mxu0 0
    %4124 = vmatpush1.bf16.msra.mxu0 0
    %4125 = vmatprep.subr.bf16.mxu0 0
    %4126 = vmatpush1.bf16.msra.mxu0 0
    %4127 = vmatprep.subr.bf16.mxu0 0
    %4128 = vmatpush1.bf16.msra.mxu0 0
    %4129 = vmatprep.subr.bf16.mxu0 0
    %4130 = vmatpush1.bf16.msra.mxu0 0
    %4131 = vmatprep.subr.bf16.mxu0 0
    %4132 = vmatpush1.bf16.msra.mxu0 0
    %4133 = vmatprep.subr.bf16.mxu0 0
    %4134 = vmatpush1.bf16.msra.mxu0 0
    %4135 = vmatprep.subr.bf16.mxu0 0
    %4136 = vmatpush1.bf16.msra.mxu0 0
    %4137 = vmatprep.subr.bf16.mxu0 0
    %4138 = vmatpush1.bf16.msra.mxu0 0
    %4139 = vmatprep.mubr.bf16.mxu0 0
    %4140 = vmatmul.mubr.bf16.gmra.mrb[0].mxu0 %v4057
    %v4141 = vpop.f32.mrb[0].mxu0
    %v4142 = vadd.f32 0.0, %v4141
    %v4143 = vpop.f32.mrb[0].mxu0
    %v4144 = vpop.f32.mrb[0].mxu0
    %v4145 = vpop.f32.mrb[0].mxu0
    %4146 = vdwg.mxu0
    %v4147 = vadd.f32 %v4038, %v4142
    %s4148 = scalar_lea.vmem [#allocation8], 1536
    %v4149 = vld [vmem:[%s4148] sm:$0xf]
    %v4150 = vld [vmem:[%s4148 + $0x4] sm:$0xf]
    %v4151 = vld [vmem:[%s4148 + $0x8] sm:$0xf]
    %v4152 = vld [vmem:[%s4148 + $0xc] sm:$0xf]
    %v4153 = vld [vmem:[%s4148 + $0x10] sm:$0xf]
    %v4154 = vld [vmem:[%s4148 + $0x14] sm:$0xf]
    %v4155 = vld [vmem:[%s4148 + $0x18] sm:$0xf]
    %v4156 = vld [vmem:[%s4148 + $0x1c] sm:$0xf]
    %v4157 = vld [vmem:[%s4148 + $0x20] sm:$0xf]
    %v4158 = vld [vmem:[%s4148 + $0x24] sm:$0xf]
    %v4159 = vld [vmem:[%s4148 + $0x28] sm:$0xf]
    %v4160 = vld [vmem:[%s4148 + $0x2c] sm:$0xf]
    %v4161 = vld [vmem:[%s4148 + $0x30] sm:$0xf]
    %v4162 = vld [vmem:[%s4148 + $0x34] sm:$0xf]
    %v4163 = vld [vmem:[%s4148 + $0x38] sm:$0xf]
    %v4164 = vld [vmem:[%s4148 + $0x3c] sm:$0xf]
    %v4181 = vunpack.c.l.b16 %v4149
    %v4182 = vunpack.c.l.b16 %v4150
    %v4183 = vunpack.c.l.b16 %v4151
    %v4184 = vunpack.c.l.b16 %v4152
    %v4185 = vunpack.c.l.b16 %v4153
    %v4186 = vunpack.c.l.b16 %v4154
    %v4187 = vunpack.c.l.b16 %v4155
    %v4188 = vunpack.c.l.b16 %v4156
    %v4189 = vunpack.c.l.b16 %v4157
    %v4190 = vunpack.c.l.b16 %v4158
    %v4191 = vunpack.c.l.b16 %v4159
    %v4192 = vunpack.c.l.b16 %v4160
    %v4193 = vunpack.c.l.b16 %v4161
    %v4194 = vunpack.c.l.b16 %v4162
    %v4195 = vunpack.c.l.b16 %v4163
    %v4196 = vunpack.c.l.b16 %v4164
    %v4197 = vpack.c.b16 %v4182, %v4181
    %v4198 = vpack.c.b16 %v4184, %v4183
    %v4199 = vpack.c.b16 %v4186, %v4185
    %v4200 = vpack.c.b16 %v4188, %v4187
    %v4201 = vpack.c.b16 %v4190, %v4189
    %v4202 = vpack.c.b16 %v4192, %v4191
    %v4203 = vpack.c.b16 %v4194, %v4193
    %v4204 = vpack.c.b16 %v4196, %v4195
    %4213 = vmatprep.subr.bf16.mxu0 0
    %4214 = vmatpush1.bf16.msra.mxu0 %v4197
    %4215 = vmatprep.subr.bf16.mxu0 0
    %4216 = vmatpush1.bf16.msra.mxu0 %v4198
    %4217 = vmatprep.subr.bf16.mxu0 0
    %4218 = vmatpush1.bf16.msra.mxu0 %v4199
    %4219 = vmatprep.subr.bf16.mxu0 0
    %4220 = vmatpush1.bf16.msra.mxu0 %v4200
    %4221 = vmatprep.subr.bf16.mxu0 0
    %4222 = vmatpush1.bf16.msra.mxu0 %v4201
    %4223 = vmatprep.subr.bf16.mxu0 0
    %4224 = vmatpush1.bf16.msra.mxu0 %v4202
    %4225 = vmatprep.subr.bf16.mxu0 0
    %4226 = vmatpush1.bf16.msra.mxu0 %v4203
    %4227 = vmatprep.subr.bf16.mxu0 0
    %4228 = vmatpush1.bf16.msra.mxu0 %v4204
    %4229 = vmatprep.subr.bf16.mxu0 0
    %4230 = vmatpush1.bf16.msra.mxu0 0
    %4231 = vmatprep.subr.bf16.mxu0 0
    %4232 = vmatpush1.bf16.msra.mxu0 0
    %4233 = vmatprep.subr.bf16.mxu0 0
    %4234 = vmatpush1.bf16.msra.mxu0 0
    %4235 = vmatprep.subr.bf16.mxu0 0
    %4236 = vmatpush1.bf16.msra.mxu0 0
    %4237 = vmatprep.subr.bf16.mxu0 0
    %4238 = vmatpush1.bf16.msra.mxu0 0
    %4239 = vmatprep.subr.bf16.mxu0 0
    %4240 = vmatpush1.bf16.msra.mxu0 0
    %4241 = vmatprep.subr.bf16.mxu0 0
    %4242 = vmatpush1.bf16.msra.mxu0 0
    %4243 = vmatprep.subr.bf16.mxu0 0
    %4244 = vmatpush1.bf16.msra.mxu0 0
    %4245 = vmatprep.mubr.bf16.mxu0 0
    %4246 = vmatmul.mubr.bf16.gmra.mrb[0].mxu0 %v1565
    %v4247 = vpop.f32.mrb[0].mxu0
    %v4248 = vadd.f32 0.0, %v4247
    %v4249 = vpop.f32.mrb[0].mxu0
    %v4250 = vpop.f32.mrb[0].mxu0
    %v4251 = vpop.f32.mrb[0].mxu0
    %4252 = vdwg.mxu0
    %v4253 = vadd.f32 %v4147, %v4248
    %s4254 = scalar_lea.vmem [#allocation8], 1600
    %v4255 = vld [vmem:[%s4254] sm:$0xf]
    %v4256 = vld [vmem:[%s4254 + $0x4] sm:$0xf]
    %v4257 = vld [vmem:[%s4254 + $0x8] sm:$0xf]
    %v4258 = vld [vmem:[%s4254 + $0xc] sm:$0xf]
    %v4259 = vld [vmem:[%s4254 + $0x10] sm:$0xf]
    %v4260 = vld [vmem:[%s4254 + $0x14] sm:$0xf]
    %v4261 = vld [vmem:[%s4254 + $0x18] sm:$0xf]
    %v4262 = vld [vmem:[%s4254 + $0x1c] sm:$0xf]
    %v4263 = vld [vmem:[%s4254 + $0x20] sm:$0xf]
    %v4264 = vld [vmem:[%s4254 + $0x24] sm:$0xf]
    %v4265 = vld [vmem:[%s4254 + $0x28] sm:$0xf]
    %v4266 = vld [vmem:[%s4254 + $0x2c] sm:$0xf]
    %v4267 = vld [vmem:[%s4254 + $0x30] sm:$0xf]
    %v4268 = vld [vmem:[%s4254 + $0x34] sm:$0xf]
    %v4269 = vld [vmem:[%s4254 + $0x38] sm:$0xf]
    %v4270 = vld [vmem:[%s4254 + $0x3c] sm:$0xf]
    %v4272 = vrot.slane %v1565, 4
    %v4290 = vunpack.c.l.b16 %v4255
    %v4291 = vunpack.c.l.b16 %v4256
    %v4292 = vunpack.c.l.b16 %v4257
    %v4293 = vunpack.c.l.b16 %v4258
    %v4294 = vunpack.c.l.b16 %v4259
    %v4295 = vunpack.c.l.b16 %v4260
    %v4296 = vunpack.c.l.b16 %v4261
    %v4297 = vunpack.c.l.b16 %v4262
    %v4298 = vunpack.c.l.b16 %v4263
    %v4299 = vunpack.c.l.b16 %v4264
    %v4300 = vunpack.c.l.b16 %v4265
    %v4301 = vunpack.c.l.b16 %v4266
    %v4302 = vunpack.c.l.b16 %v4267
    %v4303 = vunpack.c.l.b16 %v4268
    %v4304 = vunpack.c.l.b16 %v4269
    %v4305 = vunpack.c.l.b16 %v4270
    %v4306 = vpack.c.b16 %v4291, %v4290
    %v4307 = vpack.c.b16 %v4293, %v4292
    %v4308 = vpack.c.b16 %v4295, %v4294
    %v4309 = vpack.c.b16 %v4297, %v4296
    %v4310 = vpack.c.b16 %v4299, %v4298
    %v4311 = vpack.c.b16 %v4301, %v4300
    %v4312 = vpack.c.b16 %v4303, %v4302
    %v4313 = vpack.c.b16 %v4305, %v4304
    %4322 = vmatprep.subr.bf16.mxu0 0
    %4323 = vmatpush1.bf16.msra.mxu0 %v4306
    %4324 = vmatprep.subr.bf16.mxu0 0
    %4325 = vmatpush1.bf16.msra.mxu0 %v4307
    %4326 = vmatprep.subr.bf16.mxu0 0
    %4327 = vmatpush1.bf16.msra.mxu0 %v4308
    %4328 = vmatprep.subr.bf16.mxu0 0
    %4329 = vmatpush1.bf16.msra.mxu0 %v4309
    %4330 = vmatprep.subr.bf16.mxu0 0
    %4331 = vmatpush1.bf16.msra.mxu0 %v4310
    %4332 = vmatprep.subr.bf16.mxu0 0
    %4333 = vmatpush1.bf16.msra.mxu0 %v4311
    %4334 = vmatprep.subr.bf16.mxu0 0
    %4335 = vmatpush1.bf16.msra.mxu0 %v4312
    %4336 = vmatprep.subr.bf16.mxu0 0
    %4337 = vmatpush1.bf16.msra.mxu0 %v4313
    %4338 = vmatprep.subr.bf16.mxu0 0
    %4339 = vmatpush1.bf16.msra.mxu0 0
    %4340 = vmatprep.subr.bf16.mxu0 0
    %4341 = vmatpush1.bf16.msra.mxu0 0
    %4342 = vmatprep.subr.bf16.mxu0 0
    %4343 = vmatpush1.bf16.msra.mxu0 0
    %4344 = vmatprep.subr.bf16.mxu0 0
    %4345 = vmatpush1.bf16.msra.mxu0 0
    %4346 = vmatprep.subr.bf16.mxu0 0
    %4347 = vmatpush1.bf16.msra.mxu0 0
    %4348 = vmatprep.subr.bf16.mxu0 0
    %4349 = vmatpush1.bf16.msra.mxu0 0
    %4350 = vmatprep.subr.bf16.mxu0 0
    %4351 = vmatpush1.bf16.msra.mxu0 0
    %4352 = vmatprep.subr.bf16.mxu0 0
    %4353 = vmatpush1.bf16.msra.mxu0 0
    %4354 = vmatprep.mubr.bf16.mxu0 0
    %4355 = vmatmul.mubr.bf16.gmra.mrb[0].mxu0 %v4272
    %v4356 = vpop.f32.mrb[0].mxu0
    %v4357 = vadd.f32 0.0, %v4356
    %v4358 = vpop.f32.mrb[0].mxu0
    %v4359 = vpop.f32.mrb[0].mxu0
    %v4360 = vpop.f32.mrb[0].mxu0
    %4361 = vdwg.mxu0
    %v4362 = vadd.f32 %v4253, %v4357
    %s4363 = scalar_lea.vmem [#allocation8], 1664
    %v4364 = vld [vmem:[%s4363] sm:$0xf]
    %v4365 = vld [vmem:[%s4363 + $0x4] sm:$0xf]
    %v4366 = vld [vmem:[%s4363 + $0x8] sm:$0xf]
    %v4367 = vld [vmem:[%s4363 + $0xc] sm:$0xf]
    %v4368 = vld [vmem:[%s4363 + $0x10] sm:$0xf]
    %v4369 = vld [vmem:[%s4363 + $0x14] sm:$0xf]
    %v4370 = vld [vmem:[%s4363 + $0x18] sm:$0xf]
    %v4371 = vld [vmem:[%s4363 + $0x1c] sm:$0xf]
    %v4372 = vld [vmem:[%s4363 + $0x20] sm:$0xf]
    %v4373 = vld [vmem:[%s4363 + $0x24] sm:$0xf]
    %v4374 = vld [vmem:[%s4363 + $0x28] sm:$0xf]
    %v4375 = vld [vmem:[%s4363 + $0x2c] sm:$0xf]
    %v4376 = vld [vmem:[%s4363 + $0x30] sm:$0xf]
    %v4377 = vld [vmem:[%s4363 + $0x34] sm:$0xf]
    %v4378 = vld [vmem:[%s4363 + $0x38] sm:$0xf]
    %v4379 = vld [vmem:[%s4363 + $0x3c] sm:$0xf]
    %v4396 = vunpack.c.l.b16 %v4364
    %v4397 = vunpack.c.l.b16 %v4365
    %v4398 = vunpack.c.l.b16 %v4366
    %v4399 = vunpack.c.l.b16 %v4367
    %v4400 = vunpack.c.l.b16 %v4368
    %v4401 = vunpack.c.l.b16 %v4369
    %v4402 = vunpack.c.l.b16 %v4370
    %v4403 = vunpack.c.l.b16 %v4371
    %v4404 = vunpack.c.l.b16 %v4372
    %v4405 = vunpack.c.l.b16 %v4373
    %v4406 = vunpack.c.l.b16 %v4374
    %v4407 = vunpack.c.l.b16 %v4375
    %v4408 = vunpack.c.l.b16 %v4376
    %v4409 = vunpack.c.l.b16 %v4377
    %v4410 = vunpack.c.l.b16 %v4378
    %v4411 = vunpack.c.l.b16 %v4379
    %v4412 = vpack.c.b16 %v4397, %v4396
    %v4413 = vpack.c.b16 %v4399, %v4398
    %v4414 = vpack.c.b16 %v4401, %v4400
    %v4415 = vpack.c.b16 %v4403, %v4402
    %v4416 = vpack.c.b16 %v4405, %v4404
    %v4417 = vpack.c.b16 %v4407, %v4406
    %v4418 = vpack.c.b16 %v4409, %v4408
    %v4419 = vpack.c.b16 %v4411, %v4410
    %4428 = vmatprep.subr.bf16.mxu0 0
    %4429 = vmatpush1.bf16.msra.mxu0 %v4412
    %4430 = vmatprep.subr.bf16.mxu0 0
    %4431 = vmatpush1.bf16.msra.mxu0 %v4413
    %4432 = vmatprep.subr.bf16.mxu0 0
    %4433 = vmatpush1.bf16.msra.mxu0 %v4414
    %4434 = vmatprep.subr.bf16.mxu0 0
    %4435 = vmatpush1.bf16.msra.mxu0 %v4415
    %4436 = vmatprep.subr.bf16.mxu0 0
    %4437 = vmatpush1.bf16.msra.mxu0 %v4416
    %4438 = vmatprep.subr.bf16.mxu0 0
    %4439 = vmatpush1.bf16.msra.mxu0 %v4417
    %4440 = vmatprep.subr.bf16.mxu0 0
    %4441 = vmatpush1.bf16.msra.mxu0 %v4418
    %4442 = vmatprep.subr.bf16.mxu0 0
    %4443 = vmatpush1.bf16.msra.mxu0 %v4419
    %4444 = vmatprep.subr.bf16.mxu0 0
    %4445 = vmatpush1.bf16.msra.mxu0 0
    %4446 = vmatprep.subr.bf16.mxu0 0
    %4447 = vmatpush1.bf16.msra.mxu0 0
    %4448 = vmatprep.subr.bf16.mxu0 0
    %4449 = vmatpush1.bf16.msra.mxu0 0
    %4450 = vmatprep.subr.bf16.mxu0 0
    %4451 = vmatpush1.bf16.msra.mxu0 0
    %4452 = vmatprep.subr.bf16.mxu0 0
    %4453 = vmatpush1.bf16.msra.mxu0 0
    %4454 = vmatprep.subr.bf16.mxu0 0
    %4455 = vmatpush1.bf16.msra.mxu0 0
    %4456 = vmatprep.subr.bf16.mxu0 0
    %4457 = vmatpush1.bf16.msra.mxu0 0
    %4458 = vmatprep.subr.bf16.mxu0 0
    %4459 = vmatpush1.bf16.msra.mxu0 0
    %4460 = vmatprep.mubr.bf16.mxu0 0
    %4461 = vmatmul.mubr.bf16.gmra.mrb[0].mxu0 %v1566
    %v4462 = vpop.f32.mrb[0].mxu0
    %v4463 = vadd.f32 0.0, %v4462
    %v4464 = vpop.f32.mrb[0].mxu0
    %v4465 = vpop.f32.mrb[0].mxu0
    %v4466 = vpop.f32.mrb[0].mxu0
    %4467 = vdwg.mxu0
    %v4468 = vadd.f32 %v4362, %v4463
    %s4469 = scalar_lea.vmem [#allocation8], 1728
    %v4470 = vld [vmem:[%s4469] sm:$0xf]
    %v4471 = vld [vmem:[%s4469 + $0x4] sm:$0xf]
    %v4472 = vld [vmem:[%s4469 + $0x8] sm:$0xf]
    %v4473 = vld [vmem:[%s4469 + $0xc] sm:$0xf]
    %v4474 = vld [vmem:[%s4469 + $0x10] sm:$0xf]
    %v4475 = vld [vmem:[%s4469 + $0x14] sm:$0xf]
    %v4476 = vld [vmem:[%s4469 + $0x18] sm:$0xf]
    %v4477 = vld [vmem:[%s4469 + $0x1c] sm:$0xf]
    %v4478 = vld [vmem:[%s4469 + $0x20] sm:$0xf]
    %v4479 = vld [vmem:[%s4469 + $0x24] sm:$0xf]
    %v4480 = vld [vmem:[%s4469 + $0x28] sm:$0xf]
    %v4481 = vld [vmem:[%s4469 + $0x2c] sm:$0xf]
    %v4482 = vld [vmem:[%s4469 + $0x30] sm:$0xf]
    %v4483 = vld [vmem:[%s4469 + $0x34] sm:$0xf]
    %v4484 = vld [vmem:[%s4469 + $0x38] sm:$0xf]
    %v4485 = vld [vmem:[%s4469 + $0x3c] sm:$0xf]
    %v4487 = vrot.slane %v1566, 4
    %v4505 = vunpack.c.l.b16 %v4470
    %v4506 = vunpack.c.l.b16 %v4471
    %v4507 = vunpack.c.l.b16 %v4472
    %v4508 = vunpack.c.l.b16 %v4473
    %v4509 = vunpack.c.l.b16 %v4474
    %v4510 = vunpack.c.l.b16 %v4475
    %v4511 = vunpack.c.l.b16 %v4476
    %v4512 = vunpack.c.l.b16 %v4477
    %v4513 = vunpack.c.l.b16 %v4478
    %v4514 = vunpack.c.l.b16 %v4479
    %v4515 = vunpack.c.l.b16 %v4480
    %v4516 = vunpack.c.l.b16 %v4481
    %v4517 = vunpack.c.l.b16 %v4482
    %v4518 = vunpack.c.l.b16 %v4483
    %v4519 = vunpack.c.l.b16 %v4484
    %v4520 = vunpack.c.l.b16 %v4485
    %v4521 = vpack.c.b16 %v4506, %v4505
    %v4522 = vpack.c.b16 %v4508, %v4507
    %v4523 = vpack.c.b16 %v4510, %v4509
    %v4524 = vpack.c.b16 %v4512, %v4511
    %v4525 = vpack.c.b16 %v4514, %v4513
    %v4526 = vpack.c.b16 %v4516, %v4515
    %v4527 = vpack.c.b16 %v4518, %v4517
    %v4528 = vpack.c.b16 %v4520, %v4519
    %4537 = vmatprep.subr.bf16.mxu0 0
    %4538 = vmatpush1.bf16.msra.mxu0 %v4521
    %4539 = vmatprep.subr.bf16.mxu0 0
    %4540 = vmatpush1.bf16.msra.mxu0 %v4522
    %4541 = vmatprep.subr.bf16.mxu0 0
    %4542 = vmatpush1.bf16.msra.mxu0 %v4523
    %4543 = vmatprep.subr.bf16.mxu0 0
    %4544 = vmatpush1.bf16.msra.mxu0 %v4524
    %4545 = vmatprep.subr.bf16.mxu0 0
    %4546 = vmatpush1.bf16.msra.mxu0 %v4525
    %4547 = vmatprep.subr.bf16.mxu0 0
    %4548 = vmatpush1.bf16.msra.mxu0 %v4526
    %4549 = vmatprep.subr.bf16.mxu0 0
    %4550 = vmatpush1.bf16.msra.mxu0 %v4527
    %4551 = vmatprep.subr.bf16.mxu0 0
    %4552 = vmatpush1.bf16.msra.mxu0 %v4528
    %4553 = vmatprep.subr.bf16.mxu0 0
    %4554 = vmatpush1.bf16.msra.mxu0 0
    %4555 = vmatprep.subr.bf16.mxu0 0
    %4556 = vmatpush1.bf16.msra.mxu0 0
    %4557 = vmatprep.subr.bf16.mxu0 0
    %4558 = vmatpush1.bf16.msra.mxu0 0
    %4559 = vmatprep.subr.bf16.mxu0 0
    %4560 = vmatpush1.bf16.msra.mxu0 0
    %4561 = vmatprep.subr.bf16.mxu0 0
    %4562 = vmatpush1.bf16.msra.mxu0 0
    %4563 = vmatprep.subr.bf16.mxu0 0
    %4564 = vmatpush1.bf16.msra.mxu0 0
    %4565 = vmatprep.subr.bf16.mxu0 0
    %4566 = vmatpush1.bf16.msra.mxu0 0
    %4567 = vmatprep.subr.bf16.mxu0 0
    %4568 = vmatpush1.bf16.msra.mxu0 0
    %4569 = vmatprep.mubr.bf16.mxu0 0
    %4570 = vmatmul.mubr.bf16.gmra.mrb[0].mxu0 %v4487
    %v4571 = vpop.f32.mrb[0].mxu0
    %v4572 = vadd.f32 0.0, %v4571
    %v4573 = vpop.f32.mrb[0].mxu0
    %v4574 = vpop.f32.mrb[0].mxu0
    %v4575 = vpop.f32.mrb[0].mxu0
    %4576 = vdwg.mxu0
    %v4577 = vadd.f32 %v4468, %v4572
    %s4578 = scalar_lea.vmem [#allocation8], 1792
    %v4579 = vld [vmem:[%s4578] sm:$0xf]
    %v4580 = vld [vmem:[%s4578 + $0x4] sm:$0xf]
    %v4581 = vld [vmem:[%s4578 + $0x8] sm:$0xf]
    %v4582 = vld [vmem:[%s4578 + $0xc] sm:$0xf]
    %v4583 = vld [vmem:[%s4578 + $0x10] sm:$0xf]
    %v4584 = vld [vmem:[%s4578 + $0x14] sm:$0xf]
    %v4585 = vld [vmem:[%s4578 + $0x18] sm:$0xf]
    %v4586 = vld [vmem:[%s4578 + $0x1c] sm:$0xf]
    %v4587 = vld [vmem:[%s4578 + $0x20] sm:$0xf]
    %v4588 = vld [vmem:[%s4578 + $0x24] sm:$0xf]
    %v4589 = vld [vmem:[%s4578 + $0x28] sm:$0xf]
    %v4590 = vld [vmem:[%s4578 + $0x2c] sm:$0xf]
    %v4591 = vld [vmem:[%s4578 + $0x30] sm:$0xf]
    %v4592 = vld [vmem:[%s4578 + $0x34] sm:$0xf]
    %v4593 = vld [vmem:[%s4578 + $0x38] sm:$0xf]
    %v4594 = vld [vmem:[%s4578 + $0x3c] sm:$0xf]
    %v4611 = vunpack.c.l.b16 %v4579
    %v4612 = vunpack.c.l.b16 %v4580
    %v4613 = vunpack.c.l.b16 %v4581
    %v4614 = vunpack.c.l.b16 %v4582
    %v4615 = vunpack.c.l.b16 %v4583
    %v4616 = vunpack.c.l.b16 %v4584
    %v4617 = vunpack.c.l.b16 %v4585
    %v4618 = vunpack.c.l.b16 %v4586
    %v4619 = vunpack.c.l.b16 %v4587
    %v4620 = vunpack.c.l.b16 %v4588
    %v4621 = vunpack.c.l.b16 %v4589
    %v4622 = vunpack.c.l.b16 %v4590
    %v4623 = vunpack.c.l.b16 %v4591
    %v4624 = vunpack.c.l.b16 %v4592
    %v4625 = vunpack.c.l.b16 %v4593
    %v4626 = vunpack.c.l.b16 %v4594
    %v4627 = vpack.c.b16 %v4612, %v4611
    %v4628 = vpack.c.b16 %v4614, %v4613
    %v4629 = vpack.c.b16 %v4616, %v4615
    %v4630 = vpack.c.b16 %v4618, %v4617
    %v4631 = vpack.c.b16 %v4620, %v4619
    %v4632 = vpack.c.b16 %v4622, %v4621
    %v4633 = vpack.c.b16 %v4624, %v4623
    %v4634 = vpack.c.b16 %v4626, %v4625
    %4643 = vmatprep.subr.bf16.mxu0 0
    %4644 = vmatpush1.bf16.msra.mxu0 %v4627
    %4645 = vmatprep.subr.bf16.mxu0 0
    %4646 = vmatpush1.bf16.msra.mxu0 %v4628
    %4647 = vmatprep.subr.bf16.mxu0 0
    %4648 = vmatpush1.bf16.msra.mxu0 %v4629
    %4649 = vmatprep.subr.bf16.mxu0 0
    %4650 = vmatpush1.bf16.msra.mxu0 %v4630
    %4651 = vmatprep.subr.bf16.mxu0 0
    %4652 = vmatpush1.bf16.msra.mxu0 %v4631
    %4653 = vmatprep.subr.bf16.mxu0 0
    %4654 = vmatpush1.bf16.msra.mxu0 %v4632
    %4655 = vmatprep.subr.bf16.mxu0 0
    %4656 = vmatpush1.bf16.msra.mxu0 %v4633
    %4657 = vmatprep.subr.bf16.mxu0 0
    %4658 = vmatpush1.bf16.msra.mxu0 %v4634
    %4659 = vmatprep.subr.bf16.mxu0 0
    %4660 = vmatpush1.bf16.msra.mxu0 0
    %4661 = vmatprep.subr.bf16.mxu0 0
    %4662 = vmatpush1.bf16.msra.mxu0 0
    %4663 = vmatprep.subr.bf16.mxu0 0
    %4664 = vmatpush1.bf16.msra.mxu0 0
    %4665 = vmatprep.subr.bf16.mxu0 0
    %4666 = vmatpush1.bf16.msra.mxu0 0
    %4667 = vmatprep.subr.bf16.mxu0 0
    %4668 = vmatpush1.bf16.msra.mxu0 0
    %4669 = vmatprep.subr.bf16.mxu0 0
    %4670 = vmatpush1.bf16.msra.mxu0 0
    %4671 = vmatprep.subr.bf16.mxu0 0
    %4672 = vmatpush1.bf16.msra.mxu0 0
    %4673 = vmatprep.subr.bf16.mxu0 0
    %4674 = vmatpush1.bf16.msra.mxu0 0
    %4675 = vmatprep.mubr.bf16.mxu0 0
    %4676 = vmatmul.mubr.bf16.gmra.mrb[0].mxu0 %v1567
    %v4677 = vpop.f32.mrb[0].mxu0
    %v4678 = vadd.f32 0.0, %v4677
    %v4679 = vpop.f32.mrb[0].mxu0
    %v4680 = vpop.f32.mrb[0].mxu0
    %v4681 = vpop.f32.mrb[0].mxu0
    %4682 = vdwg.mxu0
    %v4683 = vadd.f32 %v4577, %v4678
    %s4684 = scalar_lea.vmem [#allocation8], 1856
    %v4685 = vld [vmem:[%s4684] sm:$0xf]
    %v4686 = vld [vmem:[%s4684 + $0x4] sm:$0xf]
    %v4687 = vld [vmem:[%s4684 + $0x8] sm:$0xf]
    %v4688 = vld [vmem:[%s4684 + $0xc] sm:$0xf]
    %v4689 = vld [vmem:[%s4684 + $0x10] sm:$0xf]
    %v4690 = vld [vmem:[%s4684 + $0x14] sm:$0xf]
    %v4691 = vld [vmem:[%s4684 + $0x18] sm:$0xf]
    %v4692 = vld [vmem:[%s4684 + $0x1c] sm:$0xf]
    %v4693 = vld [vmem:[%s4684 + $0x20] sm:$0xf]
    %v4694 = vld [vmem:[%s4684 + $0x24] sm:$0xf]
    %v4695 = vld [vmem:[%s4684 + $0x28] sm:$0xf]
    %v4696 = vld [vmem:[%s4684 + $0x2c] sm:$0xf]
    %v4697 = vld [vmem:[%s4684 + $0x30] sm:$0xf]
    %v4698 = vld [vmem:[%s4684 + $0x34] sm:$0xf]
    %v4699 = vld [vmem:[%s4684 + $0x38] sm:$0xf]
    %v4700 = vld [vmem:[%s4684 + $0x3c] sm:$0xf]
    %v4702 = vrot.slane %v1567, 4
    %v4720 = vunpack.c.l.b16 %v4685
    %v4721 = vunpack.c.l.b16 %v4686
    %v4722 = vunpack.c.l.b16 %v4687
    %v4723 = vunpack.c.l.b16 %v4688
    %v4724 = vunpack.c.l.b16 %v4689
    %v4725 = vunpack.c.l.b16 %v4690
    %v4726 = vunpack.c.l.b16 %v4691
    %v4727 = vunpack.c.l.b16 %v4692
    %v4728 = vunpack.c.l.b16 %v4693
    %v4729 = vunpack.c.l.b16 %v4694
    %v4730 = vunpack.c.l.b16 %v4695
    %v4731 = vunpack.c.l.b16 %v4696
    %v4732 = vunpack.c.l.b16 %v4697
    %v4733 = vunpack.c.l.b16 %v4698
    %v4734 = vunpack.c.l.b16 %v4699
    %v4735 = vunpack.c.l.b16 %v4700
    %v4736 = vpack.c.b16 %v4721, %v4720
    %v4737 = vpack.c.b16 %v4723, %v4722
    %v4738 = vpack.c.b16 %v4725, %v4724
    %v4739 = vpack.c.b16 %v4727, %v4726
    %v4740 = vpack.c.b16 %v4729, %v4728
    %v4741 = vpack.c.b16 %v4731, %v4730
    %v4742 = vpack.c.b16 %v4733, %v4732
    %v4743 = vpack.c.b16 %v4735, %v4734
    %4752 = vmatprep.subr.bf16.mxu0 0
    %4753 = vmatpush1.bf16.msra.mxu0 %v4736
    %4754 = vmatprep.subr.bf16.mxu0 0
    %4755 = vmatpush1.bf16.msra.mxu0 %v4737
    %4756 = vmatprep.subr.bf16.mxu0 0
    %4757 = vmatpush1.bf16.msra.mxu0 %v4738
    %4758 = vmatprep.subr.bf16.mxu0 0
    %4759 = vmatpush1.bf16.msra.mxu0 %v4739
    %4760 = vmatprep.subr.bf16.mxu0 0
    %4761 = vmatpush1.bf16.msra.mxu0 %v4740
    %4762 = vmatprep.subr.bf16.mxu0 0
    %4763 = vmatpush1.bf16.msra.mxu0 %v4741
    %4764 = vmatprep.subr.bf16.mxu0 0
    %4765 = vmatpush1.bf16.msra.mxu0 %v4742
    %4766 = vmatprep.subr.bf16.mxu0 0
    %4767 = vmatpush1.bf16.msra.mxu0 %v4743
    %4768 = vmatprep.subr.bf16.mxu0 0
    %4769 = vmatpush1.bf16.msra.mxu0 0
    %4770 = vmatprep.subr.bf16.mxu0 0
    %4771 = vmatpush1.bf16.msra.mxu0 0
    %4772 = vmatprep.subr.bf16.mxu0 0
    %4773 = vmatpush1.bf16.msra.mxu0 0
    %4774 = vmatprep.subr.bf16.mxu0 0
    %4775 = vmatpush1.bf16.msra.mxu0 0
    %4776 = vmatprep.subr.bf16.mxu0 0
    %4777 = vmatpush1.bf16.msra.mxu0 0
    %4778 = vmatprep.subr.bf16.mxu0 0
    %4779 = vmatpush1.bf16.msra.mxu0 0
    %4780 = vmatprep.subr.bf16.mxu0 0
    %4781 = vmatpush1.bf16.msra.mxu0 0
    %4782 = vmatprep.subr.bf16.mxu0 0
    %4783 = vmatpush1.bf16.msra.mxu0 0
    %4784 = vmatprep.mubr.bf16.mxu0 0
    %4785 = vmatmul.mubr.bf16.gmra.mrb[0].mxu0 %v4702
    %v4786 = vpop.f32.mrb[0].mxu0
    %v4787 = vadd.f32 0.0, %v4786
    %v4788 = vpop.f32.mrb[0].mxu0
    %v4789 = vpop.f32.mrb[0].mxu0
    %v4790 = vpop.f32.mrb[0].mxu0
    %4791 = vdwg.mxu0
    %v4792 = vadd.f32 %v4683, %v4787
    %s4793 = scalar_lea.vmem [#allocation8], 1920
    %v4794 = vld [vmem:[%s4793] sm:$0xf]
    %v4795 = vld [vmem:[%s4793 + $0x4] sm:$0xf]
    %v4796 = vld [vmem:[%s4793 + $0x8] sm:$0xf]
    %v4797 = vld [vmem:[%s4793 + $0xc] sm:$0xf]
    %v4798 = vld [vmem:[%s4793 + $0x10] sm:$0xf]
    %v4799 = vld [vmem:[%s4793 + $0x14] sm:$0xf]
    %v4800 = vld [vmem:[%s4793 + $0x18] sm:$0xf]
    %v4801 = vld [vmem:[%s4793 + $0x1c] sm:$0xf]
    %v4802 = vld [vmem:[%s4793 + $0x20] sm:$0xf]
    %v4803 = vld [vmem:[%s4793 + $0x24] sm:$0xf]
    %v4804 = vld [vmem:[%s4793 + $0x28] sm:$0xf]
    %v4805 = vld [vmem:[%s4793 + $0x2c] sm:$0xf]
    %v4806 = vld [vmem:[%s4793 + $0x30] sm:$0xf]
    %v4807 = vld [vmem:[%s4793 + $0x34] sm:$0xf]
    %v4808 = vld [vmem:[%s4793 + $0x38] sm:$0xf]
    %v4809 = vld [vmem:[%s4793 + $0x3c] sm:$0xf]
    %v4826 = vunpack.c.l.b16 %v4794
    %v4827 = vunpack.c.l.b16 %v4795
    %v4828 = vunpack.c.l.b16 %v4796
    %v4829 = vunpack.c.l.b16 %v4797
    %v4830 = vunpack.c.l.b16 %v4798
    %v4831 = vunpack.c.l.b16 %v4799
    %v4832 = vunpack.c.l.b16 %v4800
    %v4833 = vunpack.c.l.b16 %v4801
    %v4834 = vunpack.c.l.b16 %v4802
    %v4835 = vunpack.c.l.b16 %v4803
    %v4836 = vunpack.c.l.b16 %v4804
    %v4837 = vunpack.c.l.b16 %v4805
    %v4838 = vunpack.c.l.b16 %v4806
    %v4839 = vunpack.c.l.b16 %v4807
    %v4840 = vunpack.c.l.b16 %v4808
    %v4841 = vunpack.c.l.b16 %v4809
    %v4842 = vpack.c.b16 %v4827, %v4826
    %v4843 = vpack.c.b16 %v4829, %v4828
    %v4844 = vpack.c.b16 %v4831, %v4830
    %v4845 = vpack.c.b16 %v4833, %v4832
    %v4846 = vpack.c.b16 %v4835, %v4834
    %v4847 = vpack.c.b16 %v4837, %v4836
    %v4848 = vpack.c.b16 %v4839, %v4838
    %v4849 = vpack.c.b16 %v4841, %v4840
    %4858 = vmatprep.subr.bf16.mxu0 0
    %4859 = vmatpush1.bf16.msra.mxu0 %v4842
    %4860 = vmatprep.subr.bf16.mxu0 0
    %4861 = vmatpush1.bf16.msra.mxu0 %v4843
    %4862 = vmatprep.subr.bf16.mxu0 0
    %4863 = vmatpush1.bf16.msra.mxu0 %v4844
    %4864 = vmatprep.subr.bf16.mxu0 0
    %4865 = vmatpush1.bf16.msra.mxu0 %v4845
    %4866 = vmatprep.subr.bf16.mxu0 0
    %4867 = vmatpush1.bf16.msra.mxu0 %v4846
    %4868 = vmatprep.subr.bf16.mxu0 0
    %4869 = vmatpush1.bf16.msra.mxu0 %v4847
    %4870 = vmatprep.subr.bf16.mxu0 0
    %4871 = vmatpush1.bf16.msra.mxu0 %v4848
    %4872 = vmatprep.subr.bf16.mxu0 0
    %4873 = vmatpush1.bf16.msra.mxu0 %v4849
    %4874 = vmatprep.subr.bf16.mxu0 0
    %4875 = vmatpush1.bf16.msra.mxu0 0
    %4876 = vmatprep.subr.bf16.mxu0 0
    %4877 = vmatpush1.bf16.msra.mxu0 0
    %4878 = vmatprep.subr.bf16.mxu0 0
    %4879 = vmatpush1.bf16.msra.mxu0 0
    %4880 = vmatprep.subr.bf16.mxu0 0
    %4881 = vmatpush1.bf16.msra.mxu0 0
    %4882 = vmatprep.subr.bf16.mxu0 0
    %4883 = vmatpush1.bf16.msra.mxu0 0
    %4884 = vmatprep.subr.bf16.mxu0 0
    %4885 = vmatpush1.bf16.msra.mxu0 0
    %4886 = vmatprep.subr.bf16.mxu0 0
    %4887 = vmatpush1.bf16.msra.mxu0 0
    %4888 = vmatprep.subr.bf16.mxu0 0
    %4889 = vmatpush1.bf16.msra.mxu0 0
    %4890 = vmatprep.mubr.bf16.mxu0 0
    %4891 = vmatmul.mubr.bf16.gmra.mrb[0].mxu0 %v1568
    %v4892 = vpop.f32.mrb[0].mxu0
    %v4893 = vadd.f32 0.0, %v4892
    %v4894 = vpop.f32.mrb[0].mxu0
    %v4895 = vpop.f32.mrb[0].mxu0
    %v4896 = vpop.f32.mrb[0].mxu0
    %4897 = vdwg.mxu0
    %v4898 = vadd.f32 %v4792, %v4893
    %s4899 = scalar_lea.vmem [#allocation8], 1984
    %v4900 = vld [vmem:[%s4899] sm:$0xf]
    %v4901 = vld [vmem:[%s4899 + $0x4] sm:$0xf]
    %v4902 = vld [vmem:[%s4899 + $0x8] sm:$0xf]
    %v4903 = vld [vmem:[%s4899 + $0xc] sm:$0xf]
    %v4904 = vld [vmem:[%s4899 + $0x10] sm:$0xf]
    %v4905 = vld [vmem:[%s4899 + $0x14] sm:$0xf]
    %v4906 = vld [vmem:[%s4899 + $0x18] sm:$0xf]
    %v4907 = vld [vmem:[%s4899 + $0x1c] sm:$0xf]
    %v4908 = vld [vmem:[%s4899 + $0x20] sm:$0xf]
    %v4909 = vld [vmem:[%s4899 + $0x24] sm:$0xf]
    %v4910 = vld [vmem:[%s4899 + $0x28] sm:$0xf]
    %v4911 = vld [vmem:[%s4899 + $0x2c] sm:$0xf]
    %v4912 = vld [vmem:[%s4899 + $0x30] sm:$0xf]
    %v4913 = vld [vmem:[%s4899 + $0x34] sm:$0xf]
    %v4914 = vld [vmem:[%s4899 + $0x38] sm:$0xf]
    %v4915 = vld [vmem:[%s4899 + $0x3c] sm:$0xf]
    %v4917 = vrot.slane %v1568, 4
    %v4935 = vunpack.c.l.b16 %v4900
    %v4936 = vunpack.c.l.b16 %v4901
    %v4937 = vunpack.c.l.b16 %v4902
    %v4938 = vunpack.c.l.b16 %v4903
    %v4939 = vunpack.c.l.b16 %v4904
    %v4940 = vunpack.c.l.b16 %v4905
    %v4941 = vunpack.c.l.b16 %v4906
    %v4942 = vunpack.c.l.b16 %v4907
    %v4943 = vunpack.c.l.b16 %v4908
    %v4944 = vunpack.c.l.b16 %v4909
    %v4945 = vunpack.c.l.b16 %v4910
    %v4946 = vunpack.c.l.b16 %v4911
    %v4947 = vunpack.c.l.b16 %v4912
    %v4948 = vunpack.c.l.b16 %v4913
    %v4949 = vunpack.c.l.b16 %v4914
    %v4950 = vunpack.c.l.b16 %v4915
    %v4951 = vpack.c.b16 %v4936, %v4935
    %v4952 = vpack.c.b16 %v4938, %v4937
    %v4953 = vpack.c.b16 %v4940, %v4939
    %v4954 = vpack.c.b16 %v4942, %v4941
    %v4955 = vpack.c.b16 %v4944, %v4943
    %v4956 = vpack.c.b16 %v4946, %v4945
    %v4957 = vpack.c.b16 %v4948, %v4947
    %v4958 = vpack.c.b16 %v4950, %v4949
    %4967 = vmatprep.subr.bf16.mxu0 0
    %4968 = vmatpush1.bf16.msra.mxu0 %v4951
    %4969 = vmatprep.subr.bf16.mxu0 0
    %4970 = vmatpush1.bf16.msra.mxu0 %v4952
    %4971 = vmatprep.subr.bf16.mxu0 0
    %4972 = vmatpush1.bf16.msra.mxu0 %v4953
    %4973 = vmatprep.subr.bf16.mxu0 0
    %4974 = vmatpush1.bf16.msra.mxu0 %v4954
    %4975 = vmatprep.subr.bf16.mxu0 0
    %4976 = vmatpush1.bf16.msra.mxu0 %v4955
    %4977 = vmatprep.subr.bf16.mxu0 0
    %4978 = vmatpush1.bf16.msra.mxu0 %v4956
    %4979 = vmatprep.subr.bf16.mxu0 0
    %4980 = vmatpush1.bf16.msra.mxu0 %v4957
    %4981 = vmatprep.subr.bf16.mxu0 0
    %4982 = vmatpush1.bf16.msra.mxu0 %v4958
    %4983 = vmatprep.subr.bf16.mxu0 0
    %4984 = vmatpush1.bf16.msra.mxu0 0
    %4985 = vmatprep.subr.bf16.mxu0 0
    %4986 = vmatpush1.bf16.msra.mxu0 0
    %4987 = vmatprep.subr.bf16.mxu0 0
    %4988 = vmatpush1.bf16.msra.mxu0 0
    %4989 = vmatprep.subr.bf16.mxu0 0
    %4990 = vmatpush1.bf16.msra.mxu0 0
    %4991 = vmatprep.subr.bf16.mxu0 0
    %4992 = vmatpush1.bf16.msra.mxu0 0
    %4993 = vmatprep.subr.bf16.mxu0 0
    %4994 = vmatpush1.bf16.msra.mxu0 0
    %4995 = vmatprep.subr.bf16.mxu0 0
    %4996 = vmatpush1.bf16.msra.mxu0 0
    %4997 = vmatprep.subr.bf16.mxu0 0
    %4998 = vmatpush1.bf16.msra.mxu0 0
    %4999 = vmatprep.mubr.bf16.mxu0 0
    %5000 = vmatmul.mubr.bf16.gmra.mrb[0].mxu0 %v4917
    %v5001 = vpop.f32.mrb[0].mxu0
    %v5002 = vadd.f32 0.0, %v5001
    %v5003 = vpop.f32.mrb[0].mxu0
    %v5004 = vpop.f32.mrb[0].mxu0
    %v5005 = vpop.f32.mrb[0].mxu0
    %5006 = vdwg.mxu0
    %v5007 = vadd.f32 %v4898, %v5002
    %s5008 = scalar_lea.vmem [#allocation8], 2048
    %v5009 = vld [vmem:[%s5008] sm:$0xf]
    %v5010 = vld [vmem:[%s5008 + $0x4] sm:$0xf]
    %v5011 = vld [vmem:[%s5008 + $0x8] sm:$0xf]
    %v5012 = vld [vmem:[%s5008 + $0xc] sm:$0xf]
    %v5013 = vld [vmem:[%s5008 + $0x10] sm:$0xf]
    %v5014 = vld [vmem:[%s5008 + $0x14] sm:$0xf]
    %v5015 = vld [vmem:[%s5008 + $0x18] sm:$0xf]
    %v5016 = vld [vmem:[%s5008 + $0x1c] sm:$0xf]
    %v5017 = vld [vmem:[%s5008 + $0x20] sm:$0xf]
    %v5018 = vld [vmem:[%s5008 + $0x24] sm:$0xf]
    %v5019 = vld [vmem:[%s5008 + $0x28] sm:$0xf]
    %v5020 = vld [vmem:[%s5008 + $0x2c] sm:$0xf]
    %v5021 = vld [vmem:[%s5008 + $0x30] sm:$0xf]
    %v5022 = vld [vmem:[%s5008 + $0x34] sm:$0xf]
    %v5023 = vld [vmem:[%s5008 + $0x38] sm:$0xf]
    %v5024 = vld [vmem:[%s5008 + $0x3c] sm:$0xf]
    %v5041 = vunpack.c.l.b16 %v5009
    %v5042 = vunpack.c.l.b16 %v5010
    %v5043 = vunpack.c.l.b16 %v5011
    %v5044 = vunpack.c.l.b16 %v5012
    %v5045 = vunpack.c.l.b16 %v5013
    %v5046 = vunpack.c.l.b16 %v5014
    %v5047 = vunpack.c.l.b16 %v5015
    %v5048 = vunpack.c.l.b16 %v5016
    %v5049 = vunpack.c.l.b16 %v5017
    %v5050 = vunpack.c.l.b16 %v5018
    %v5051 = vunpack.c.l.b16 %v5019
    %v5052 = vunpack.c.l.b16 %v5020
    %v5053 = vunpack.c.l.b16 %v5021
    %v5054 = vunpack.c.l.b16 %v5022
    %v5055 = vunpack.c.l.b16 %v5023
    %v5056 = vunpack.c.l.b16 %v5024
    %v5057 = vpack.c.b16 %v5042, %v5041
    %v5058 = vpack.c.b16 %v5044, %v5043
    %v5059 = vpack.c.b16 %v5046, %v5045
    %v5060 = vpack.c.b16 %v5048, %v5047
    %v5061 = vpack.c.b16 %v5050, %v5049
    %v5062 = vpack.c.b16 %v5052, %v5051
    %v5063 = vpack.c.b16 %v5054, %v5053
    %v5064 = vpack.c.b16 %v5056, %v5055
    %5073 = vmatprep.subr.bf16.mxu0 0
    %5074 = vmatpush1.bf16.msra.mxu0 %v5057
    %5075 = vmatprep.subr.bf16.mxu0 0
    %5076 = vmatpush1.bf16.msra.mxu0 %v5058
    %5077 = vmatprep.subr.bf16.mxu0 0
    %5078 = vmatpush1.bf16.msra.mxu0 %v5059
    %5079 = vmatprep.subr.bf16.mxu0 0
    %5080 = vmatpush1.bf16.msra.mxu0 %v5060
    %5081 = vmatprep.subr.bf16.mxu0 0
    %5082 = vmatpush1.bf16.msra.mxu0 %v5061
    %5083 = vmatprep.subr.bf16.mxu0 0
    %5084 = vmatpush1.bf16.msra.mxu0 %v5062
    %5085 = vmatprep.subr.bf16.mxu0 0
    %5086 = vmatpush1.bf16.msra.mxu0 %v5063
    %5087 = vmatprep.subr.bf16.mxu0 0
    %5088 = vmatpush1.bf16.msra.mxu0 %v5064
    %5089 = vmatprep.subr.bf16.mxu0 0
    %5090 = vmatpush1.bf16.msra.mxu0 0
    %5091 = vmatprep.subr.bf16.mxu0 0
    %5092 = vmatpush1.bf16.msra.mxu0 0
    %5093 = vmatprep.subr.bf16.mxu0 0
    %5094 = vmatpush1.bf16.msra.mxu0 0
    %5095 = vmatprep.subr.bf16.mxu0 0
    %5096 = vmatpush1.bf16.msra.mxu0 0
    %5097 = vmatprep.subr.bf16.mxu0 0
    %5098 = vmatpush1.bf16.msra.mxu0 0
    %5099 = vmatprep.subr.bf16.mxu0 0
    %5100 = vmatpush1.bf16.msra.mxu0 0
    %5101 = vmatprep.subr.bf16.mxu0 0
    %5102 = vmatpush1.bf16.msra.mxu0 0
    %5103 = vmatprep.subr.bf16.mxu0 0
    %5104 = vmatpush1.bf16.msra.mxu0 0
    %5105 = vmatprep.mubr.bf16.mxu0 0
    %5106 = vmatmul.mubr.bf16.gmra.mrb[0].mxu0 %v1569
    %v5107 = vpop.f32.mrb[0].mxu0
    %v5108 = vadd.f32 0.0, %v5107
    %v5109 = vpop.f32.mrb[0].mxu0
    %v5110 = vpop.f32.mrb[0].mxu0
    %v5111 = vpop.f32.mrb[0].mxu0
    %5112 = vdwg.mxu0
    %v5113 = vadd.f32 %v5007, %v5108
    %s5114 = scalar_lea.vmem [#allocation8], 2112
    %v5115 = vld [vmem:[%s5114] sm:$0xf]
    %v5116 = vld [vmem:[%s5114 + $0x4] sm:$0xf]
    %v5117 = vld [vmem:[%s5114 + $0x8] sm:$0xf]
    %v5118 = vld [vmem:[%s5114 + $0xc] sm:$0xf]
    %v5119 = vld [vmem:[%s5114 + $0x10] sm:$0xf]
    %v5120 = vld [vmem:[%s5114 + $0x14] sm:$0xf]
    %v5121 = vld [vmem:[%s5114 + $0x18] sm:$0xf]
    %v5122 = vld [vmem:[%s5114 + $0x1c] sm:$0xf]
    %v5123 = vld [vmem:[%s5114 + $0x20] sm:$0xf]
    %v5124 = vld [vmem:[%s5114 + $0x24] sm:$0xf]
    %v5125 = vld [vmem:[%s5114 + $0x28] sm:$0xf]
    %v5126 = vld [vmem:[%s5114 + $0x2c] sm:$0xf]
    %v5127 = vld [vmem:[%s5114 + $0x30] sm:$0xf]
    %v5128 = vld [vmem:[%s5114 + $0x34] sm:$0xf]
    %v5129 = vld [vmem:[%s5114 + $0x38] sm:$0xf]
    %v5130 = vld [vmem:[%s5114 + $0x3c] sm:$0xf]
    %v5132 = vrot.slane %v1569, 4
    %v5150 = vunpack.c.l.b16 %v5115
    %v5151 = vunpack.c.l.b16 %v5116
    %v5152 = vunpack.c.l.b16 %v5117
    %v5153 = vunpack.c.l.b16 %v5118
    %v5154 = vunpack.c.l.b16 %v5119
    %v5155 = vunpack.c.l.b16 %v5120
    %v5156 = vunpack.c.l.b16 %v5121
    %v5157 = vunpack.c.l.b16 %v5122
    %v5158 = vunpack.c.l.b16 %v5123
    %v5159 = vunpack.c.l.b16 %v5124
    %v5160 = vunpack.c.l.b16 %v5125
    %v5161 = vunpack.c.l.b16 %v5126
    %v5162 = vunpack.c.l.b16 %v5127
    %v5163 = vunpack.c.l.b16 %v5128
    %v5164 = vunpack.c.l.b16 %v5129
    %v5165 = vunpack.c.l.b16 %v5130
    %v5166 = vpack.c.b16 %v5151, %v5150
    %v5167 = vpack.c.b16 %v5153, %v5152
    %v5168 = vpack.c.b16 %v5155, %v5154
    %v5169 = vpack.c.b16 %v5157, %v5156
    %v5170 = vpack.c.b16 %v5159, %v5158
    %v5171 = vpack.c.b16 %v5161, %v5160
    %v5172 = vpack.c.b16 %v5163, %v5162
    %v5173 = vpack.c.b16 %v5165, %v5164
    %5182 = vmatprep.subr.bf16.mxu0 0
    %5183 = vmatpush1.bf16.msra.mxu0 %v5166
    %5184 = vmatprep.subr.bf16.mxu0 0
    %5185 = vmatpush1.bf16.msra.mxu0 %v5167
    %5186 = vmatprep.subr.bf16.mxu0 0
    %5187 = vmatpush1.bf16.msra.mxu0 %v5168
    %5188 = vmatprep.subr.bf16.mxu0 0
    %5189 = vmatpush1.bf16.msra.mxu0 %v5169
    %5190 = vmatprep.subr.bf16.mxu0 0
    %5191 = vmatpush1.bf16.msra.mxu0 %v5170
    %5192 = vmatprep.subr.bf16.mxu0 0
    %5193 = vmatpush1.bf16.msra.mxu0 %v5171
    %5194 = vmatprep.subr.bf16.mxu0 0
    %5195 = vmatpush1.bf16.msra.mxu0 %v5172
    %5196 = vmatprep.subr.bf16.mxu0 0
    %5197 = vmatpush1.bf16.msra.mxu0 %v5173
    %5198 = vmatprep.subr.bf16.mxu0 0
    %5199 = vmatpush1.bf16.msra.mxu0 0
    %5200 = vmatprep.subr.bf16.mxu0 0
    %5201 = vmatpush1.bf16.msra.mxu0 0
    %5202 = vmatprep.subr.bf16.mxu0 0
    %5203 = vmatpush1.bf16.msra.mxu0 0
    %5204 = vmatprep.subr.bf16.mxu0 0
    %5205 = vmatpush1.bf16.msra.mxu0 0
    %5206 = vmatprep.subr.bf16.mxu0 0
    %5207 = vmatpush1.bf16.msra.mxu0 0
    %5208 = vmatprep.subr.bf16.mxu0 0
    %5209 = vmatpush1.bf16.msra.mxu0 0
    %5210 = vmatprep.subr.bf16.mxu0 0
    %5211 = vmatpush1.bf16.msra.mxu0 0
    %5212 = vmatprep.subr.bf16.mxu0 0
    %5213 = vmatpush1.bf16.msra.mxu0 0
    %5214 = vmatprep.mubr.bf16.mxu0 0
    %5215 = vmatmul.mubr.bf16.gmra.mrb[0].mxu0 %v5132
    %v5216 = vpop.f32.mrb[0].mxu0
    %v5217 = vadd.f32 0.0, %v5216
    %v5218 = vpop.f32.mrb[0].mxu0
    %v5219 = vpop.f32.mrb[0].mxu0
    %v5220 = vpop.f32.mrb[0].mxu0
    %5221 = vdwg.mxu0
    %v5222 = vadd.f32 %v5113, %v5217
    %s5223 = scalar_lea.vmem [#allocation8], 2176
    %v5224 = vld [vmem:[%s5223] sm:$0xf]
    %v5225 = vld [vmem:[%s5223 + $0x4] sm:$0xf]
    %v5226 = vld [vmem:[%s5223 + $0x8] sm:$0xf]
    %v5227 = vld [vmem:[%s5223 + $0xc] sm:$0xf]
    %v5228 = vld [vmem:[%s5223 + $0x10] sm:$0xf]
    %v5229 = vld [vmem:[%s5223 + $0x14] sm:$0xf]
    %v5230 = vld [vmem:[%s5223 + $0x18] sm:$0xf]
    %v5231 = vld [vmem:[%s5223 + $0x1c] sm:$0xf]
    %v5232 = vld [vmem:[%s5223 + $0x20] sm:$0xf]
    %v5233 = vld [vmem:[%s5223 + $0x24] sm:$0xf]
    %v5234 = vld [vmem:[%s5223 + $0x28] sm:$0xf]
    %v5235 = vld [vmem:[%s5223 + $0x2c] sm:$0xf]
    %v5236 = vld [vmem:[%s5223 + $0x30] sm:$0xf]
    %v5237 = vld [vmem:[%s5223 + $0x34] sm:$0xf]
    %v5238 = vld [vmem:[%s5223 + $0x38] sm:$0xf]
    %v5239 = vld [vmem:[%s5223 + $0x3c] sm:$0xf]
    %v5256 = vunpack.c.l.b16 %v5224
    %v5257 = vunpack.c.l.b16 %v5225
    %v5258 = vunpack.c.l.b16 %v5226
    %v5259 = vunpack.c.l.b16 %v5227
    %v5260 = vunpack.c.l.b16 %v5228
    %v5261 = vunpack.c.l.b16 %v5229
    %v5262 = vunpack.c.l.b16 %v5230
    %v5263 = vunpack.c.l.b16 %v5231
    %v5264 = vunpack.c.l.b16 %v5232
    %v5265 = vunpack.c.l.b16 %v5233
    %v5266 = vunpack.c.l.b16 %v5234
    %v5267 = vunpack.c.l.b16 %v5235
    %v5268 = vunpack.c.l.b16 %v5236
    %v5269 = vunpack.c.l.b16 %v5237
    %v5270 = vunpack.c.l.b16 %v5238
    %v5271 = vunpack.c.l.b16 %v5239
    %v5272 = vpack.c.b16 %v5257, %v5256
    %v5273 = vpack.c.b16 %v5259, %v5258
    %v5274 = vpack.c.b16 %v5261, %v5260
    %v5275 = vpack.c.b16 %v5263, %v5262
    %v5276 = vpack.c.b16 %v5265, %v5264
    %v5277 = vpack.c.b16 %v5267, %v5266
    %v5278 = vpack.c.b16 %v5269, %v5268
    %v5279 = vpack.c.b16 %v5271, %v5270
    %5288 = vmatprep.subr.bf16.mxu0 0
    %5289 = vmatpush1.bf16.msra.mxu0 %v5272
    %5290 = vmatprep.subr.bf16.mxu0 0
    %5291 = vmatpush1.bf16.msra.mxu0 %v5273
    %5292 = vmatprep.subr.bf16.mxu0 0
    %5293 = vmatpush1.bf16.msra.mxu0 %v5274
    %5294 = vmatprep.subr.bf16.mxu0 0
    %5295 = vmatpush1.bf16.msra.mxu0 %v5275
    %5296 = vmatprep.subr.bf16.mxu0 0
    %5297 = vmatpush1.bf16.msra.mxu0 %v5276
    %5298 = vmatprep.subr.bf16.mxu0 0
    %5299 = vmatpush1.bf16.msra.mxu0 %v5277
    %5300 = vmatprep.subr.bf16.mxu0 0
    %5301 = vmatpush1.bf16.msra.mxu0 %v5278
    %5302 = vmatprep.subr.bf16.mxu0 0
    %5303 = vmatpush1.bf16.msra.mxu0 %v5279
    %5304 = vmatprep.subr.bf16.mxu0 0
    %5305 = vmatpush1.bf16.msra.mxu0 0
    %5306 = vmatprep.subr.bf16.mxu0 0
    %5307 = vmatpush1.bf16.msra.mxu0 0
    %5308 = vmatprep.subr.bf16.mxu0 0
    %5309 = vmatpush1.bf16.msra.mxu0 0
    %5310 = vmatprep.subr.bf16.mxu0 0
    %5311 = vmatpush1.bf16.msra.mxu0 0
    %5312 = vmatprep.subr.bf16.mxu0 0
    %5313 = vmatpush1.bf16.msra.mxu0 0
    %5314 = vmatprep.subr.bf16.mxu0 0
    %5315 = vmatpush1.bf16.msra.mxu0 0
    %5316 = vmatprep.subr.bf16.mxu0 0
    %5317 = vmatpush1.bf16.msra.mxu0 0
    %5318 = vmatprep.subr.bf16.mxu0 0
    %5319 = vmatpush1.bf16.msra.mxu0 0
    %5320 = vmatprep.mubr.bf16.mxu0 0
    %5321 = vmatmul.mubr.bf16.gmra.mrb[0].mxu0 %v1570
    %v5322 = vpop.f32.mrb[0].mxu0
    %v5323 = vadd.f32 0.0, %v5322
    %v5324 = vpop.f32.mrb[0].mxu0
    %v5325 = vpop.f32.mrb[0].mxu0
    %v5326 = vpop.f32.mrb[0].mxu0
    %5327 = vdwg.mxu0
    %v5328 = vadd.f32 %v5222, %v5323
    %s5329 = scalar_lea.vmem [#allocation8], 2240
    %v5330 = vld [vmem:[%s5329] sm:$0xf]
    %v5331 = vld [vmem:[%s5329 + $0x4] sm:$0xf]
    %v5332 = vld [vmem:[%s5329 + $0x8] sm:$0xf]
    %v5333 = vld [vmem:[%s5329 + $0xc] sm:$0xf]
    %v5334 = vld [vmem:[%s5329 + $0x10] sm:$0xf]
    %v5335 = vld [vmem:[%s5329 + $0x14] sm:$0xf]
    %v5336 = vld [vmem:[%s5329 + $0x18] sm:$0xf]
    %v5337 = vld [vmem:[%s5329 + $0x1c] sm:$0xf]
    %v5338 = vld [vmem:[%s5329 + $0x20] sm:$0xf]
    %v5339 = vld [vmem:[%s5329 + $0x24] sm:$0xf]
    %v5340 = vld [vmem:[%s5329 + $0x28] sm:$0xf]
    %v5341 = vld [vmem:[%s5329 + $0x2c] sm:$0xf]
    %v5342 = vld [vmem:[%s5329 + $0x30] sm:$0xf]
    %v5343 = vld [vmem:[%s5329 + $0x34] sm:$0xf]
    %v5344 = vld [vmem:[%s5329 + $0x38] sm:$0xf]
    %v5345 = vld [vmem:[%s5329 + $0x3c] sm:$0xf]
    %v5347 = vrot.slane %v1570, 4
    %v5365 = vunpack.c.l.b16 %v5330
    %v5366 = vunpack.c.l.b16 %v5331
    %v5367 = vunpack.c.l.b16 %v5332
    %v5368 = vunpack.c.l.b16 %v5333
    %v5369 = vunpack.c.l.b16 %v5334
    %v5370 = vunpack.c.l.b16 %v5335
    %v5371 = vunpack.c.l.b16 %v5336
    %v5372 = vunpack.c.l.b16 %v5337
    %v5373 = vunpack.c.l.b16 %v5338
    %v5374 = vunpack.c.l.b16 %v5339
    %v5375 = vunpack.c.l.b16 %v5340
    %v5376 = vunpack.c.l.b16 %v5341
    %v5377 = vunpack.c.l.b16 %v5342
    %v5378 = vunpack.c.l.b16 %v5343
    %v5379 = vunpack.c.l.b16 %v5344
    %v5380 = vunpack.c.l.b16 %v5345
    %v5381 = vpack.c.b16 %v5366, %v5365
    %v5382 = vpack.c.b16 %v5368, %v5367
    %v5383 = vpack.c.b16 %v5370, %v5369
    %v5384 = vpack.c.b16 %v5372, %v5371
    %v5385 = vpack.c.b16 %v5374, %v5373
    %v5386 = vpack.c.b16 %v5376, %v5375
    %v5387 = vpack.c.b16 %v5378, %v5377
    %v5388 = vpack.c.b16 %v5380, %v5379
    %5397 = vmatprep.subr.bf16.mxu0 0
    %5398 = vmatpush1.bf16.msra.mxu0 %v5381
    %5399 = vmatprep.subr.bf16.mxu0 0
    %5400 = vmatpush1.bf16.msra.mxu0 %v5382
    %5401 = vmatprep.subr.bf16.mxu0 0
    %5402 = vmatpush1.bf16.msra.mxu0 %v5383
    %5403 = vmatprep.subr.bf16.mxu0 0
    %5404 = vmatpush1.bf16.msra.mxu0 %v5384
    %5405 = vmatprep.subr.bf16.mxu0 0
    %5406 = vmatpush1.bf16.msra.mxu0 %v5385
    %5407 = vmatprep.subr.bf16.mxu0 0
    %5408 = vmatpush1.bf16.msra.mxu0 %v5386
    %5409 = vmatprep.subr.bf16.mxu0 0
    %5410 = vmatpush1.bf16.msra.mxu0 %v5387
    %5411 = vmatprep.subr.bf16.mxu0 0
    %5412 = vmatpush1.bf16.msra.mxu0 %v5388
    %5413 = vmatprep.subr.bf16.mxu0 0
    %5414 = vmatpush1.bf16.msra.mxu0 0
    %5415 = vmatprep.subr.bf16.mxu0 0
    %5416 = vmatpush1.bf16.msra.mxu0 0
    %5417 = vmatprep.subr.bf16.mxu0 0
    %5418 = vmatpush1.bf16.msra.mxu0 0
    %5419 = vmatprep.subr.bf16.mxu0 0
    %5420 = vmatpush1.bf16.msra.mxu0 0
    %5421 = vmatprep.subr.bf16.mxu0 0
    %5422 = vmatpush1.bf16.msra.mxu0 0
    %5423 = vmatprep.subr.bf16.mxu0 0
    %5424 = vmatpush1.bf16.msra.mxu0 0
    %5425 = vmatprep.subr.bf16.mxu0 0
    %5426 = vmatpush1.bf16.msra.mxu0 0
    %5427 = vmatprep.subr.bf16.mxu0 0
    %5428 = vmatpush1.bf16.msra.mxu0 0
    %5429 = vmatprep.mubr.bf16.mxu0 0
    %5430 = vmatmul.mubr.bf16.gmra.mrb[0].mxu0 %v5347
    %v5431 = vpop.f32.mrb[0].mxu0
    %v5432 = vadd.f32 0.0, %v5431
    %v5433 = vpop.f32.mrb[0].mxu0
    %v5434 = vpop.f32.mrb[0].mxu0
    %v5435 = vpop.f32.mrb[0].mxu0
    %5436 = vdwg.mxu0
    %v5437 = vadd.f32 %v5328, %v5432
    %v5438 = vld [vmem:[#allocation10] sm:$0x1]
    %v5440 = vlaneseq
    %v5441 = vshrl.u32 %v5440, 7
    %v5442 = vsub.s32 0, %v5441
    %v5443 = vrot.slane %v5438, %v5442
    %v5445 = vadd.f32 %v5437, %v5443
    %v5446 = vmax.f32 %v5445, 0.0
    %v5447 = vld [vmem:[#allocation11] sm:$0xff]
    %v5448 = vld [vmem:[#allocation11 + $0x8] sm:$0xff]
    %v5449 = vld [vmem:[#allocation11 + $0x10] sm:$0xff]
    %v5450 = vld [vmem:[#allocation11 + $0x18] sm:$0xff]
    %v5451 = vld [vmem:[#allocation11 + $0x20] sm:$0xff]
    %v5452 = vld [vmem:[#allocation11 + $0x28] sm:$0xff]
    %v5453 = vld [vmem:[#allocation11 + $0x30] sm:$0xff]
    %v5454 = vld [vmem:[#allocation11 + $0x38] sm:$0xff]
    %v5455 = vld [vmem:[#allocation11 + $0x40] sm:$0xff]
    %v5456 = vld [vmem:[#allocation11 + $0x48] sm:$0xff]
    %v5457 = vld [vmem:[#allocation11 + $0x50] sm:$0xff]
    %v5458 = vld [vmem:[#allocation11 + $0x58] sm:$0xff]
    %v5459 = vld [vmem:[#allocation11 + $0x60] sm:$0xff]
    %v5460 = vld [vmem:[#allocation11 + $0x68] sm:$0xff]
    %v5461 = vld [vmem:[#allocation11 + $0x70] sm:$0xff]
    %v5462 = vld [vmem:[#allocation11 + $0x78] sm:$0xff]
    %v5463 = vld [vmem:[#allocation13] sm:$0x1]
    %v5465 = vlaneseq
    %v5466 = vshrl.u32 %v5465, 7
    %v5467 = vsub.s32 0, %v5466
    %v5468 = vrot.slane %v5463, %v5467
    %5470 = vmatprep.subr.mxu0 0.0
    %5471 = vmatpush1.msra.mxu0 %v5447
    %5472 = vmatprep.subr.mxu0 0.0
    %5473 = vmatpush1.msra.mxu0 %v5448
    %5474 = vmatprep.subr.mxu0 0.0
    %5475 = vmatpush1.msra.mxu0 %v5449
    %5476 = vmatprep.subr.mxu0 0.0
    %5477 = vmatpush1.msra.mxu0 %v5450
    %5478 = vmatprep.subr.mxu0 0.0
    %5479 = vmatpush1.msra.mxu0 %v5451
    %5480 = vmatprep.subr.mxu0 0.0
    %5481 = vmatpush1.msra.mxu0 %v5452
    %5482 = vmatprep.subr.mxu0 0.0
    %5483 = vmatpush1.msra.mxu0 %v5453
    %5484 = vmatprep.subr.mxu0 0.0
    %5485 = vmatpush1.msra.mxu0 %v5454
    %5486 = vmatprep.subr.mxu0 0.0
    %5487 = vmatpush1.msra.mxu0 %v5455
    %5488 = vmatprep.subr.mxu0 0.0
    %5489 = vmatpush1.msra.mxu0 %v5456
    %5490 = vmatprep.subr.mxu0 0.0
    %5491 = vmatpush1.msra.mxu0 %v5457
    %5492 = vmatprep.subr.mxu0 0.0
    %5493 = vmatpush1.msra.mxu0 %v5458
    %5494 = vmatprep.subr.mxu0 0.0
    %5495 = vmatpush1.msra.mxu0 %v5459
    %5496 = vmatprep.subr.mxu0 0.0
    %5497 = vmatpush1.msra.mxu0 %v5460
    %5498 = vmatprep.subr.mxu0 0.0
    %5499 = vmatpush1.msra.mxu0 %v5461
    %5500 = vmatprep.subr.mxu0 0.0
    %5501 = vmatpush1.msra.mxu0 %v5462
    %5502 = vmatprep.subr.mxu0 0.0
    %5503 = vmatpush1.msra.mxu0 0.0
    %5504 = vmatprep.subr.mxu0 0.0
    %5505 = vmatpush1.msra.mxu0 0.0
    %5506 = vmatprep.subr.mxu0 0.0
    %5507 = vmatpush1.msra.mxu0 0.0
    %5508 = vmatprep.subr.mxu0 0.0
    %5509 = vmatpush1.msra.mxu0 0.0
    %5510 = vmatprep.subr.mxu0 0.0
    %5511 = vmatpush1.msra.mxu0 0.0
    %5512 = vmatprep.subr.mxu0 0.0
    %5513 = vmatpush1.msra.mxu0 0.0
    %5514 = vmatprep.subr.mxu0 0.0
    %5515 = vmatpush1.msra.mxu0 0.0
    %5516 = vmatprep.subr.mxu0 0.0
    %5517 = vmatpush1.msra.mxu0 0.0
    %5518 = vmatprep.subr.mxu0 0.0
    %5519 = vmatpush1.msra.mxu0 0.0
    %5520 = vmatprep.subr.mxu0 0.0
    %5521 = vmatpush1.msra.mxu0 0.0
    %5522 = vmatprep.subr.mxu0 0.0
    %5523 = vmatpush1.msra.mxu0 0.0
    %5524 = vmatprep.subr.mxu0 0.0
    %5525 = vmatpush1.msra.mxu0 0.0
    %5526 = vmatprep.subr.mxu0 0.0
    %5527 = vmatpush1.msra.mxu0 0.0
    %5528 = vmatprep.subr.mxu0 0.0
    %5529 = vmatpush1.msra.mxu0 0.0
    %5530 = vmatprep.subr.mxu0 0.0
    %5531 = vmatpush1.msra.mxu0 0.0
    %5532 = vmatprep.subr.mxu0 0.0
    %5533 = vmatpush1.msra.mxu0 0.0
    %5534 = vmatprep.mubr.f32.mxu0 0.0
    %5535 = vmatmul.mubr.f32.gmra.mrb[0].mxu0 %v5446
    %v5536 = vpop.f32.mrb[0].mxu0
    %v5537 = vadd.f32 %v5468, %v5536
    %v5538 = vpop.f32.mrb[0].mxu0
    %5539 = vdwg.mxu0
    %5540 = vst [vmem:[#allocation14] sm:$0xff] %v5537
    // Predicated region
    $region58: #{tpu_custom_call.1} parent=1 // pred_check
      _
    $region59: #{tpu_custom_call.1} parent=1 // pred_check_branch
      %5542 = sbr.rel (0) target = $region61
    $region60: #{tpu_custom_call.1} parent=1 // pred_region
      %s5544 = ssub.s32 128, 128
      %5545 = vsyncadd [#allocation4], %s5544
      %s5547 = sshll.u32 [#allocation14], 4
      %s5548 = int_to_ptr.vmem [resolvable:$true] %s5547
      %5550 = dma.vmem_to_hbm [thread:$0]  %s5548, 128, %s7, [#allocation4]
    $region61: #{tpu_custom_call.1} parent=1 // pred_fallthru
      _
    // Predicated region
    $region62: #{tpu_custom_call.1} parent=1 // pred_check
      _
    $region63: #{tpu_custom_call.1} parent=1 // pred_check_branch
      %5552 = sbr.rel (0) target = $region65
    $region64: #{tpu_custom_call.1} parent=1 // pred_region
      %5553 = dma.done [#allocation4], 128
    $region65: #{tpu_custom_call.1} parent=1 // pred_fallthru
      _
    %5554 = vsyncpa [#allocation3], 1
    %5555 = vsyncpa [#allocation6], 1
    %5556 = vsyncpa [#allocation9], 1
    %5557 = vsyncpa [#allocation12], 1
    %5558 = vsyncpa [#allocation4], 1

</llo_original>
